<compile_context>
chip_gen: v5e
topology: v5e:2x2
jax: 0.10.0
libtpu: 0.0.40
codegen_flags: <defaults>
</compile_context>

<pallas_src>
import functools

import jax
import jax.numpy as jnp
from jax.experimental import pallas as pl
from jax.experimental.pallas import tpu as pltpu

EPS = 1e-5  # nn.LayerNorm default


def _patch_merge_kernel(x_ref, w_ref, b_ref, o_ref, *, single_dot):
    """One tile of tw = th*W2 merged tokens.

    x_ref : (th, 2, W2, 2C)  axis 1 = image-row parity.
            parity 0 lanes = [x0 | x2], parity 1 lanes = [x1 | x3]
    w_ref : (4C, Np)  gamma-folded weight, rows ordered [w_x0; w_x2; w_x1; w_x3]
    b_ref : (1, Np)   beta @ W_t   (f32)
    o_ref : (tw, Np)
    """
    k2 = x_ref.shape[-1]               # 2*C
    tw = o_ref.shape[0]
    inv_4c = 1.0 / (2 * k2)            # 1 / (4*C)

    # Row-parity split + collapse (th, W2) -> tokens.  The collapse is a free
    # shape cast when W2 is sublane-aligned (8 for f32, 16 for bf16).
    # TODO(synk): for Swin resolutions where W2 = 28/14/7 this reshape forces a
    # per-tile retile; keep the blocks 3-D end-to-end if that config matters.
    xb = x_ref[...].astype(jnp.float32)
    ev = xb[:, 0, :, :].reshape(tw, k2)
    od = xb[:, 1, :, :].reshape(tw, k2)

    # LayerNorm statistics over the full 4C merged-token vector, computed across
    # the two 2C halves (no lane concat needed).  Two-pass variance == torch LN.
    mean = (jnp.sum(ev, axis=-1, keepdims=True)
            + jnp.sum(od, axis=-1, keepdims=True)) * inv_4c
    de = ev - mean
    do = od - mean
    var = (jnp.sum(de * de, axis=-1, keepdims=True)
           + jnp.sum(do * do, axis=-1, keepdims=True)) * inv_4c
    inv = jax.lax.rsqrt(var + EPS)

    # gamma/beta were folded into w_ref / b_ref in the wrapper.
    xe = (de * inv).astype(w_ref.dtype)
    xo = (do * inv).astype(w_ref.dtype)

    if single_dot:
        # Single K=4C dot: fills the 256-deep v6e/v7x MXU; lane concat is
        # tile-aligned because 2C % 128 == 0 on this path.
        xcat = jnp.concatenate([xe, xo], axis=-1)
        acc = jnp.dot(xcat, w_ref[...], preferred_element_type=jnp.float32)
    else:
        acc = jnp.dot(xe, w_ref[:k2, :], preferred_element_type=jnp.float32)
        acc = acc + jnp.dot(xo, w_ref[k2:2 * k2, :],
                            preferred_element_type=jnp.float32)

    o_ref[...] = (acc + b_ref[...]).astype(o_ref.dtype)


# ----------------------------- host-side helpers -----------------------------

def _tpu_info():
    try:
        return pltpu.get_tpu_info()
    except Exception:
        return None


def _vmem_capacity_bytes():
    info = _tpu_info()
    cap = getattr(info, "vmem_capacity_bytes", None) if info is not None else None
    try:
        cap = int(cap) if cap else 0
    except Exception:
        cap = 0
    return cap if cap > 0 else (64 << 20)   # conservative default: v7x per-TC VMEM


def _num_tensorcores():
    info = _tpu_info()
    candidates = []
    if info is not None:
        candidates += [getattr(info, n, None)
                       for n in ("num_cores", "core_count", "num_tensorcores")]
    try:
        candidates.append(getattr(jax.devices()[0], "num_cores", None))
    except Exception:
        pass
    for v in candidates:
        try:
            v = int(v)
            if v > 0:
                return v
        except Exception:
            continue
    return 1


def _pick_row_tile(num_rows, w2, sublane, max_tokens, num_cores):
    """Largest divisor `th` of num_rows whose (th*w2, Np) output block is
    sublane-aligned and fits the token budget.  Multi-TC chips prefer an even
    share of >= 2*num_cores grid steps (keeps both cores busy and the DMA
    pipelined); 1-TC chips simply take the biggest fitting tile."""
    legal = [t for t in range(1, num_rows + 1)
             if num_rows % t == 0 and ((t * w2) % sublane == 0 or t == num_rows)]
    fitting = [t for t in legal if t * w2 <= max_tokens]
    if not fitting:
        # Forced minimum tile; the caller sizes vmem_limit from the tile it
        # actually got, so this can no longer silently blow past the budget.
        return min(legal)
    if num_cores > 1:
        for t in sorted(fitting, reverse=True):
            g = num_rows // t
            if g % num_cores == 0 and g >= 2 * num_cores:
                return t
        for t in sorted(fitting, reverse=True):
            if (num_rows // t) % num_cores == 0:
                return t
    return max(fitting)


def patch_merging(x, gamma, beta, weight_t, input_resolution, *,
                  max_tokens=4096, mm_dtype=jnp.bfloat16):
    """Swin PatchMerging forward: Linear(LayerNorm(concat 2x2 patches)).

    x:        (B, H*W, C)   f32 or bf16; output keeps x.dtype
    gamma:    (4C,)         LayerNorm weight
    beta:     (4C,)         LayerNorm bias
    weight_t: (4C, 2C)      == torch reduction.weight.T
    returns   (B, H/2*W/2, 2C)

    Pass mm_dtype=jnp.float32 if bit-closeness to torch matters more than speed.
    """
    H, W = input_resolution
    B, L, C = x.shape
    assert L == H * W, "input feature has wrong size"
    assert H % 2 == 0 and W % 2 == 0, f"x size ({H}*{W}) are not even."
    H2, W2 = H // 2, W // 2
    K2, N = 2 * C, 2 * C
    Np = ((N + 127) // 128) * 128          # lane-dense output stores
    single_dot = (K2 % 128 == 0)

    # Free view (no HBM copy): row parity becomes an explicit axis, column
    # parity + channels merge into a 2C lane dim:
    #   xr[b*H2+i, p, j, q*C+c] == x[b, (2i+p)*W + (2j+q), c]
    R = B * H2
    xr = x.reshape(R, 2, W2, K2)

    # Fold the LayerNorm affine into the reduction:
    #   y = x_hat @ (gamma[:,None] * W_t) + beta @ W_t
    gamma_f = gamma.astype(jnp.float32)
    beta_f = beta.astype(jnp.float32)
    w_f = weight_t.astype(jnp.float32)                         # (4C, 2C)
    wp = gamma_f[:, None] * w_f
    # torch concat order is [x0,x1,x2,x3]; even rows carry [x0|x2], odd [x1|x3],
    # and the kernel feeds [even | odd], so stack rows as [w0; w2; w1; w3].
    w_stacked = jnp.concatenate(
        [wp[0:C], wp[2 * C:3 * C], wp[C:2 * C], wp[3 * C:4 * C]], axis=0)
    bias = (beta_f @ w_f).reshape(1, N)                        # stays f32
    if Np != N:
        w_stacked = jnp.pad(w_stacked, ((0, 0), (0, Np - N)))
        bias = jnp.pad(bias, ((0, 0), (0, Np - N)))
    w_stacked = w_stacked.astype(mm_dtype)

    # ---- generation-aware tile / VMEM sizing --------------------------------
    in_bytes = jnp.dtype(x.dtype).itemsize
    w_bytes = jnp.dtype(mm_dtype).itemsize
    sublane = max(8, 32 // in_bytes)
    vmem_cap = _vmem_capacity_bytes()
    num_cores = _num_tensorcores()

    weight_bytes = 2 * K2 * Np * w_bytes + Np * 4
    # Per-merged-token demand: double-buffered I/O blocks + in-kernel temporaries.
    per_token = 2 * (2 * K2 + Np) * in_bytes                   # 2x-buffered blocks
    per_token += 24 * K2 + 4 * K2 * w_bytes + 4 * Np           # f32/mm temps + acc
    budget = int(0.70 * vmem_cap) - 2 * weight_bytes
    token_cap = max(W2, budget // max(per_token, 1))

    th = _pick_row_tile(R, W2, sublane, min(max_tokens, token_cap), num_cores)
    tw = th * W2
    M = R * W2
    grid = (R // th,)

    est = tw * per_token + 2 * weight_bytes + (1 << 20)
    vmem_limit = int(min(max(32 << 20, int(1.5 * est)),
                         max(32 << 20, vmem_cap - (8 << 20))))

    kernel = functools.partial(_patch_merge_kernel, single_dot=single_dot)

    def _call(single_buffer_consts):
        # Constant-index operands never re-DMA; Buffered(1) drops the useless
        # second copy of the weight (VMEM that can go to a larger tile).
        const_kwargs = ({"pipeline_mode": pl.Buffered(1)}
                        if single_buffer_consts else {})
        grid_spec = pltpu.PrefetchScalarGridSpec(
            num_scalar_prefetch=0,
            grid=grid,
            in_specs=[
                # Fused 2x2 gather: one contiguous block per grid step carrying
                # both image-row parities; no (M, 4C) intermediate touches HBM.
                pl.BlockSpec((th, 2, W2, K2), lambda r: (r, 0, 0, 0)),
                pl.BlockSpec((2 * K2, Np), lambda r: (0, 0), **const_kwargs),
                pl.BlockSpec((1, Np), lambda r: (0, 0), **const_kwargs),
            ],
            out_specs=pl.BlockSpec((tw, Np), lambda r: (r, 0)),
        )
        return pl.pallas_call(
            kernel,
            out_shape=jax.ShapeDtypeStruct((M, Np), x.dtype),
            grid_spec=grid_spec,
            compiler_params=pltpu.CompilerParams(
                dimension_semantics=("parallel",),
                vmem_limit_bytes=vmem_limit,
            ),
        )(xr, w_stacked, bias)

    try:
        out = _call(True)
    except Exception:
        # pl.Buffered(1) not accepted by this jax/Mosaic version -> default buffering.
        out = _call(False)

    if Np != N:
        out = out[:, :N]
    return out.reshape(B, H2 * W2, N)


# ----------------------------------- demo ------------------------------------

def _reference(x, gamma, beta, weight_t, H, W):
    """Pure-JAX f32 reference with exact PyTorch PatchMerging semantics."""
    B, L, C = x.shape
    xv = x.astype(jnp.float32).reshape(B, H, W, C)
    xm = jnp.concatenate(
        [xv[:, 0::2, 0::2, :], xv[:, 1::2, 0::2, :],
         xv[:, 0::2, 1::2, :], xv[:, 1::2, 1::2, :]], axis=-1
    ).reshape(B, -1, 4 * C)
    mu = jnp.mean(xm, axis=-1, keepdims=True)
    va = jnp.mean((xm - mu) ** 2, axis=-1, keepdims=True)
    xh = (xm - mu) / jnp.sqrt(va + EPS)
    return (xh * gamma.astype(jnp.float32) + beta.astype(jnp.float32)) @ \
        weight_t.astype(jnp.float32)


if __name__ == "__main__":
    key = jax.random.PRNGKey(0)
    k1, k3 = jax.random.split(key, 2)

    def make_case(k, B, H, W, C):
        kx, kw, kg, kb = jax.random.split(k, 4)
        x = jax.random.normal(kx, (B, H * W, C), dtype=jnp.float32)
        gamma = 1.0 + 0.5 * jax.random.normal(kg, (4 * C,), dtype=jnp.float32)
        beta = 0.5 * jax.random.normal(kb, (4 * C,), dtype=jnp.float32)
        w = jax.random.normal(kw, (2 * C, 4 * C), dtype=jnp.float32) * 0.02
        return x, gamma, beta, w.T

    # Case 1: f32 activations, C=64 -> N=128 (lane-dense, single K=4C dot path).
    B, H, W, C = 2, 32, 32, 64
    x, gamma, beta, wt = make_case(k1, B, H, W, C)
    y = patch_merging(x, gamma, beta, wt, (H, W))
    jax.block_until_ready(y)
    assert y.shape == (B, (H // 2) * (W // 2), 2 * C), y.shape
    ref = _reference(x, gamma, beta, wt, H, W)
    err = float(jnp.max(jnp.abs(y.astype(jnp.float32) - ref)))
    assert jnp.allclose(y.astype(jnp.float32), ref, atol=3e-2, rtol=3e-2), err

    # Case 2: bf16 activations in, bf16 out (halves HBM bytes of the HBM-bound op).
    xb = x.astype(jnp.bfloat16)
    yb = patch_merging(xb, gamma, beta, wt, (H, W))
    jax.block_until_ready(yb)
    assert yb.dtype == jnp.bfloat16
    refb = _reference(xb, gamma, beta, wt, H, W)
    errb = float(jnp.max(jnp.abs(yb.astype(jnp.float32) - refb)))
    assert jnp.allclose(yb.astype(jnp.float32), refb, atol=8e-2, rtol=8e-2), errb

    # Case 3: C=48 -> N=96 (not a multiple of 128): exercises the zero-padded
    # lane-dense output path and the two-dot (K=2C) fallback.
    B3, H3, W3, C3 = 2, 16, 16, 48
    x3, g3, b3, wt3 = make_case(k3, B3, H3, W3, C3)
    y3 = patch_merging(x3, g3, b3, wt3, (H3, W3))
    jax.block_until_ready(y3)
    assert y3.shape == (B3, (H3 // 2) * (W3 // 2), 2 * C3), y3.shape
    ref3 = _reference(x3, g3, b3, wt3, H3, W3)
    err3 = float(jnp.max(jnp.abs(y3.astype(jnp.float32) - ref3)))
    assert jnp.allclose(y3.astype(jnp.float32), ref3, atol=3e-2, rtol=3e-2), err3

    print("KERNEL_OK")
</pallas_src>

<mosaic_0001>
module attributes {stable_mosaic.version = 11 : i64} {
  func.func @_patch_merge_kernel(%arg0: i32, %arg1: memref<32x2x16x128xf32, #tpu.memory_space<vmem>>, %arg2: memref<256x128xbf16, #tpu.memory_space<vmem>>, %arg3: memref<1x128xf32, #tpu.memory_space<vmem>>, %arg4: memref<512x128xf32, #tpu.memory_space<vmem>>) attributes {dimension_semantics = [#tpu.dimension_semantics<parallel>], iteration_bounds = array<i64: 1>, scalar_prefetch = 0 : i64, scratch_operands = 0 : i64, tpu.core_type = #tpu.core_type<tc>, window_params = [{transform_indices = @transform_0, window_bounds = array<i64: 32, 2, 16, 128>}, {pipeline_mode = #tpu.pipeline_mode<synchronous>, transform_indices = @transform_1, window_bounds = array<i64: 256, 128>}, {pipeline_mode = #tpu.pipeline_mode<synchronous>, transform_indices = @transform_2, window_bounds = array<i64: 1, 128>}, {transform_indices = @transform_3, window_bounds = array<i64: 512, 128>}]} {
    %c0 = arith.constant 0 : index
    %c0_0 = arith.constant 0 : index
    %c0_1 = arith.constant 0 : index
    %c0_2 = arith.constant 0 : index
    %0 = vector.load %arg1[%c0, %c0_0, %c0_1, %c0_2] : memref<32x2x16x128xf32, #tpu.memory_space<vmem>>, vector<32x2x16x128xf32>
    %1 = vector.extract_strided_slice %0 {offsets = [0, 0, 0, 0], sizes = [32, 1, 16, 128], strides = [1, 1, 1, 1]} : vector<32x2x16x128xf32> to vector<32x1x16x128xf32>
    %2 = vector.shape_cast %1 : vector<32x1x16x128xf32> to vector<32x16x128xf32>
    %3 = vector.shape_cast %2 : vector<32x16x128xf32> to vector<512x128xf32>
    %4 = vector.extract_strided_slice %0 {offsets = [0, 1, 0, 0], sizes = [32, 1, 16, 128], strides = [1, 1, 1, 1]} : vector<32x2x16x128xf32> to vector<32x1x16x128xf32>
    %5 = vector.shape_cast %4 : vector<32x1x16x128xf32> to vector<32x16x128xf32>
    %6 = vector.shape_cast %5 : vector<32x16x128xf32> to vector<512x128xf32>
    %cst = arith.constant dense<0.000000e+00> : vector<512xf32>
    %7 = vector.multi_reduction <add>, %3, %cst [1] : vector<512x128xf32> to vector<512xf32>
    %8 = vector.shape_cast %7 : vector<512xf32> to vector<512x1xf32>
    %cst_3 = arith.constant dense<0.000000e+00> : vector<512xf32>
    %9 = vector.multi_reduction <add>, %6, %cst_3 [1] : vector<512x128xf32> to vector<512xf32>
    %10 = vector.shape_cast %9 : vector<512xf32> to vector<512x1xf32>
    %11 = arith.addf %8, %10 : vector<512x1xf32>
    %cst_4 = arith.constant 3.906250e-03 : f32
    %12 = vector.broadcast %cst_4 : f32 to vector<512x1xf32>
    %13 = arith.mulf %11, %12 : vector<512x1xf32>
    %14 = vector.broadcast %13 : vector<512x1xf32> to vector<512x128xf32>
    %15 = arith.subf %3, %14 : vector<512x128xf32>
    %16 = vector.broadcast %13 : vector<512x1xf32> to vector<512x128xf32>
    %17 = arith.subf %6, %16 : vector<512x128xf32>
    %18 = arith.mulf %15, %15 : vector<512x128xf32>
    %cst_5 = arith.constant dense<0.000000e+00> : vector<512xf32>
    %19 = vector.multi_reduction <add>, %18, %cst_5 [1] : vector<512x128xf32> to vector<512xf32>
    %20 = vector.shape_cast %19 : vector<512xf32> to vector<512x1xf32>
    %21 = arith.mulf %17, %17 : vector<512x128xf32>
    %cst_6 = arith.constant dense<0.000000e+00> : vector<512xf32>
    %22 = vector.multi_reduction <add>, %21, %cst_6 [1] : vector<512x128xf32> to vector<512xf32>
    %23 = vector.shape_cast %22 : vector<512xf32> to vector<512x1xf32>
    %24 = arith.addf %20, %23 : vector<512x1xf32>
    %cst_7 = arith.constant 3.906250e-03 : f32
    %25 = vector.broadcast %cst_7 : f32 to vector<512x1xf32>
    %26 = arith.mulf %24, %25 : vector<512x1xf32>
    %cst_8 = arith.constant 9.99999974E-6 : f32
    %27 = vector.broadcast %cst_8 : f32 to vector<512x1xf32>
    %28 = arith.addf %26, %27 : vector<512x1xf32>
    %29 = math.rsqrt %28 : vector<512x1xf32>
    %30 = vector.broadcast %29 : vector<512x1xf32> to vector<512x128xf32>
    %31 = arith.mulf %15, %30 : vector<512x128xf32>
    %32 = arith.truncf %31 : vector<512x128xf32> to vector<512x128xbf16>
    %33 = vector.broadcast %29 : vector<512x1xf32> to vector<512x128xf32>
    %34 = arith.mulf %17, %33 : vector<512x128xf32>
    %35 = arith.truncf %34 : vector<512x128xf32> to vector<512x128xbf16>
    %36 = tpu.concatenate %32, %35 in 1 : vector<512x128xbf16>, vector<512x128xbf16> -> vector<512x256xbf16>
    %c0_9 = arith.constant 0 : index
    %c0_10 = arith.constant 0 : index
    %37 = vector.load %arg2[%c0_9, %c0_10] : memref<256x128xbf16, #tpu.memory_space<vmem>>, vector<256x128xbf16>
    %cst_11 = arith.constant dense<0.000000e+00> : vector<512x128xf32>
    %38 = tpu.matmul %36, %37, %cst_11 {dimension_numbers = #tpu.dot_dimension_numbers<[1], [0], [0], [1], [0, 0, 1, 1], [], []>} : vector<512x256xbf16>, vector<256x128xbf16>, vector<512x128xf32> -> vector<512x128xf32>
    %c0_12 = arith.constant 0 : index
    %c0_13 = arith.constant 0 : index
    %39 = vector.load %arg3[%c0_12, %c0_13] : memref<1x128xf32, #tpu.memory_space<vmem>>, vector<1x128xf32>
    %40 = vector.broadcast %39 : vector<1x128xf32> to vector<512x128xf32>
    %41 = arith.addf %38, %40 : vector<512x128xf32>
    %c0_14 = arith.constant 0 : index
    %c0_15 = arith.constant 0 : index
    %42 = vector.load %arg4[%c0_14, %c0_15] : memref<512x128xf32, #tpu.memory_space<vmem>>, vector<512x128xf32>
    tpu.vector_store %arg4[%c0_14, %c0_15], %41 {strides = array<i32>} : memref<512x128xf32, #tpu.memory_space<vmem>>, vector<512x128xf32>,
    return
  }
  func.func @transform_0(%arg0: i32) -> (i32, i32, i32, i32) {
    %c0_i32 = arith.constant 0 : i32
    %c0_i32_0 = arith.constant 0 : i32
    %c0_i32_1 = arith.constant 0 : i32
    %c0_i32_2 = arith.constant 0 : i32
    return %arg0, %c0_i32, %c0_i32_0, %c0_i32_1 : i32, i32, i32, i32
  }
  func.func @transform_1(%arg0: i32) -> (i32, i32) {
    %c0_i32 = arith.constant 0 : i32
    %c0_i32_0 = arith.constant 0 : i32
    %c0_i32_1 = arith.constant 0 : i32
    return %c0_i32, %c0_i32_0 : i32, i32
  }
  func.func @transform_2(%arg0: i32) -> (i32, i32) {
    %c0_i32 = arith.constant 0 : i32
    %c0_i32_0 = arith.constant 0 : i32
    %c0_i32_1 = arith.constant 0 : i32
    return %c0_i32, %c0_i32_0 : i32, i32
  }
  func.func @transform_3(%arg0: i32) -> (i32, i32) {
    %c0_i32 = arith.constant 0 : i32
    %c0_i32_0 = arith.constant 0 : i32
    return %arg0, %c0_i32 : i32, i32
  }
}

module attributes {stable_mosaic.version = 11 : i64} {
  func.func @_patch_merge_kernel(%arg0: i32, %arg1: memref<32x2x16x128xf32, #tpu.memory_space<vmem>>, %arg2: memref<256x128xbf16, #tpu.memory_space<vmem>>, %arg3: memref<1x128xf32, #tpu.memory_space<vmem>>, %arg4: memref<512x128xf32, #tpu.memory_space<vmem>>) attributes {dimension_semantics = [#tpu.dimension_semantics<parallel>], iteration_bounds = array<i64: 1>, scalar_prefetch = 0 : i64, scratch_operands = 0 : i64, tpu.core_type = #tpu.core_type<tc>, window_params = [{transform_indices = @transform_0, window_bounds = array<i64: 32, 2, 16, 128>}, {pipeline_mode = #tpu.pipeline_mode<synchronous>, transform_indices = @transform_1, window_bounds = array<i64: 256, 128>}, {pipeline_mode = #tpu.pipeline_mode<synchronous>, transform_indices = @transform_2, window_bounds = array<i64: 1, 128>}, {transform_indices = @transform_3, window_bounds = array<i64: 512, 128>}]} {
    %c0 = arith.constant 0 : index
    %c0_0 = arith.constant 0 : index
    %c0_1 = arith.constant 0 : index
    %c0_2 = arith.constant 0 : index
    %0 = vector.load %arg1[%c0, %c0_0, %c0_1, %c0_2] : memref<32x2x16x128xf32, #tpu.memory_space<vmem>>, vector<32x2x16x128xf32>
    %1 = vector.extract_strided_slice %0 {offsets = [0, 0, 0, 0], sizes = [32, 1, 16, 128], strides = [1, 1, 1, 1]} : vector<32x2x16x128xf32> to vector<32x1x16x128xf32>
    %2 = vector.shape_cast %1 : vector<32x1x16x128xf32> to vector<32x16x128xf32>
    %3 = vector.shape_cast %2 : vector<32x16x128xf32> to vector<512x128xf32>
    %4 = vector.extract_strided_slice %0 {offsets = [0, 1, 0, 0], sizes = [32, 1, 16, 128], strides = [1, 1, 1, 1]} : vector<32x2x16x128xf32> to vector<32x1x16x128xf32>
    %5 = vector.shape_cast %4 : vector<32x1x16x128xf32> to vector<32x16x128xf32>
    %6 = vector.shape_cast %5 : vector<32x16x128xf32> to vector<512x128xf32>
    %cst = arith.constant dense<0.000000e+00> : vector<512xf32>
    %7 = vector.multi_reduction <add>, %3, %cst [1] : vector<512x128xf32> to vector<512xf32>
    %8 = vector.shape_cast %7 : vector<512xf32> to vector<512x1xf32>
    %cst_3 = arith.constant dense<0.000000e+00> : vector<512xf32>
    %9 = vector.multi_reduction <add>, %6, %cst_3 [1] : vector<512x128xf32> to vector<512xf32>
    %10 = vector.shape_cast %9 : vector<512xf32> to vector<512x1xf32>
    %11 = arith.addf %8, %10 : vector<512x1xf32>
    %cst_4 = arith.constant 3.906250e-03 : f32
    %12 = vector.broadcast %cst_4 : f32 to vector<512x1xf32>
    %13 = arith.mulf %11, %12 : vector<512x1xf32>
    %14 = vector.broadcast %13 : vector<512x1xf32> to vector<512x128xf32>
    %15 = arith.subf %3, %14 : vector<512x128xf32>
    %16 = vector.broadcast %13 : vector<512x1xf32> to vector<512x128xf32>
    %17 = arith.subf %6, %16 : vector<512x128xf32>
    %18 = arith.mulf %15, %15 : vector<512x128xf32>
    %cst_5 = arith.constant dense<0.000000e+00> : vector<512xf32>
    %19 = vector.multi_reduction <add>, %18, %cst_5 [1] : vector<512x128xf32> to vector<512xf32>
    %20 = vector.shape_cast %19 : vector<512xf32> to vector<512x1xf32>
    %21 = arith.mulf %17, %17 : vector<512x128xf32>
    %cst_6 = arith.constant dense<0.000000e+00> : vector<512xf32>
    %22 = vector.multi_reduction <add>, %21, %cst_6 [1] : vector<512x128xf32> to vector<512xf32>
    %23 = vector.shape_cast %22 : vector<512xf32> to vector<512x1xf32>
    %24 = arith.addf %20, %23 : vector<512x1xf32>
    %cst_7 = arith.constant 3.906250e-03 : f32
    %25 = vector.broadcast %cst_7 : f32 to vector<512x1xf32>
    %26 = arith.mulf %24, %25 : vector<512x1xf32>
    %cst_8 = arith.constant 9.99999974E-6 : f32
    %27 = vector.broadcast %cst_8 : f32 to vector<512x1xf32>
    %28 = arith.addf %26, %27 : vector<512x1xf32>
    %29 = math.rsqrt %28 : vector<512x1xf32>
    %30 = vector.broadcast %29 : vector<512x1xf32> to vector<512x128xf32>
    %31 = arith.mulf %15, %30 : vector<512x128xf32>
    %32 = arith.truncf %31 : vector<512x128xf32> to vector<512x128xbf16>
    %33 = vector.broadcast %29 : vector<512x1xf32> to vector<512x128xf32>
    %34 = arith.mulf %17, %33 : vector<512x128xf32>
    %35 = arith.truncf %34 : vector<512x128xf32> to vector<512x128xbf16>
    %36 = tpu.concatenate %32, %35 in 1 : vector<512x128xbf16>, vector<512x128xbf16> -> vector<512x256xbf16>
    %c0_9 = arith.constant 0 : index
    %c0_10 = arith.constant 0 : index
    %37 = vector.load %arg2[%c0_9, %c0_10] : memref<256x128xbf16, #tpu.memory_space<vmem>>, vector<256x128xbf16>
    %cst_11 = arith.constant dense<0.000000e+00> : vector<512x128xf32>
    %38 = tpu.matmul %36, %37, %cst_11 {dimension_numbers = #tpu.dot_dimension_numbers<[1], [0], [0], [1], [0, 0, 1, 1], [], []>} : vector<512x256xbf16>, vector<256x128xbf16>, vector<512x128xf32> -> vector<512x128xf32>
    %c0_12 = arith.constant 0 : index
    %c0_13 = arith.constant 0 : index
    %39 = vector.load %arg3[%c0_12, %c0_13] : memref<1x128xf32, #tpu.memory_space<vmem>>, vector<1x128xf32>
    %40 = vector.broadcast %39 : vector<1x128xf32> to vector<512x128xf32>
    %41 = arith.addf %38, %40 : vector<512x128xf32>
    %c0_14 = arith.constant 0 : index
    %c0_15 = arith.constant 0 : index
    %42 = vector.load %arg4[%c0_14, %c0_15] : memref<512x128xf32, #tpu.memory_space<vmem>>, vector<512x128xf32>
    tpu.vector_store %arg4[%c0_14, %c0_15], %41 {strides = array<i32>} : memref<512x128xf32, #tpu.memory_space<vmem>>, vector<512x128xf32>,
    return
  }
  func.func @transform_0(%arg0: i32) -> (i32, i32, i32, i32) {
    %c0_i32 = arith.constant 0 : i32
    %c0_i32_0 = arith.constant 0 : i32
    %c0_i32_1 = arith.constant 0 : i32
    %c0_i32_2 = arith.constant 0 : i32
    return %arg0, %c0_i32, %c0_i32_0, %c0_i32_1 : i32, i32, i32, i32
  }
  func.func @transform_1(%arg0: i32) -> (i32, i32) {
    %c0_i32 = arith.constant 0 : i32
    %c0_i32_0 = arith.constant 0 : i32
    %c0_i32_1 = arith.constant 0 : i32
    return %c0_i32, %c0_i32_0 : i32, i32
  }
  func.func @transform_2(%arg0: i32) -> (i32, i32) {
    %c0_i32 = arith.constant 0 : i32
    %c0_i32_0 = arith.constant 0 : i32
    %c0_i32_1 = arith.constant 0 : i32
    return %c0_i32, %c0_i32_0 : i32, i32
  }
  func.func @transform_3(%arg0: i32) -> (i32, i32) {
    %c0_i32 = arith.constant 0 : i32
    %c0_i32_0 = arith.constant 0 : i32
    return %arg0, %c0_i32 : i32, i32
  }
}

</mosaic_0001>

<llo_original>
// kernel: tpu_custom_call.1
$region0: #{tpu_custom_call.1}
  #allocation0 [shape = 'u32[]', space=smem, size = 0x4, offset = 0x4, fixed_abs, tag = 'smem constant byte address 0x4 - core index']
  #allocation1 [shape = 'u32[72,128]{1,0:T(1,128)}', space=vmem, size = 0x9000, scoped, tag = 'internal scratch']
  %s0 = inlined_call_operand.hbm [shape: f32[32,2,16,128], index: 0, kind: input, shape index: {}]
  %s1 = inlined_call_operand.hbm [shape: bf16[256,128], index: 1, kind: input, shape index: {}]
  %s2 = inlined_call_operand.vmem [shape: f32[1,128], index: 2, kind: input, shape index: {}]
  %s3 = inlined_call_operand.hbm [shape: f32[512,128], index: 3, kind: output, shape index: {}]
  %s4 = sld [smem:[#allocation0]]
  $region30: #{tpu_custom_call.1} parent=0
    _
  %s6 = ssub.s32 1, %s4
  %s7 = scalar_select 0, %s6, %s4
  $region1: #{tpu_custom_call.1} parent=0
    #allocation2 [shape = 'u8[524288]{0}', space=vmem, size = 0x80000, scoped, tag = 'input window, operand 0, single buffered']
    #allocation3 [shape = 's32[1]{0}', space=sflag, size = 0x4, scoped, tag = 'scoped memory for tpu_custom_call.1']
    #allocation4 [shape = 's32[1]{0}', space=sflag, size = 0x4, scoped, tag = 'scoped memory for tpu_custom_call.1']
    #allocation5 [shape = 'u8[65536]{0}', space=vmem, size = 0x10000, scoped, tag = 'input window, operand 1, single buffered']
    #allocation6 [shape = 's32[1]{0}', space=sflag, size = 0x4, scoped, tag = 'scoped memory for tpu_custom_call.1']
    #allocation7 [shape = 'u8[262144]{0}', space=vmem, size = 0x40000, scoped, tag = 'output window, operand 0, single buffered']
    %8 = vsyncpa [#allocation3], 0
    %9 = vsyncpa [#allocation6], 0
    %10 = vsyncpa [#allocation4], 0
    // Predicated region
    $region2: #{tpu_custom_call.1} parent=1 // pred_check
      _
    $region3: #{tpu_custom_call.1} parent=1 // pred_check_branch
      %12 = sbr.rel (0) target = $region5
    $region4: #{tpu_custom_call.1} parent=1 // pred_region
      %14 = vsyncadd [#allocation3], 0
      %s15 = sshll.u32 %s0, 4
      %s16 = int_to_ptr.hbm [resolvable:$true] %s15
      %s17 = sshll.u32 [#allocation2], 4
      %s18 = int_to_ptr.vmem [resolvable:$true] %s17
      %23 = dma.hbm_to_vmem [thread:$0]  %s16, 16384, %s18, [#allocation3], 128, 128, 8
    $region5: #{tpu_custom_call.1} parent=1 // pred_fallthru
      _
    // Predicated region
    $region6: #{tpu_custom_call.1} parent=1 // pred_check
      _
    $region7: #{tpu_custom_call.1} parent=1 // pred_check_branch
      %25 = sbr.rel (0) target = $region9
    $region8: #{tpu_custom_call.1} parent=1 // pred_region
      %27 = vsyncadd [#allocation6], 0
      %s28 = sshll.u32 %s1, 4
      %s29 = int_to_ptr.hbm [resolvable:$true] %s28
      %s30 = sshll.u32 [#allocation5], 4
      %s31 = int_to_ptr.vmem [resolvable:$true] %s30
      %36 = dma.hbm_to_vmem [thread:$0]  %s29, 2048, %s31, [#allocation6], 64, 64, 4
    $region9: #{tpu_custom_call.1} parent=1 // pred_fallthru
      _
    // Predicated region
    $region10: #{tpu_custom_call.1} parent=1 // pred_check
      _
    $region11: #{tpu_custom_call.1} parent=1 // pred_check_branch
      %38 = sbr.rel (0) target = $region13
    $region12: #{tpu_custom_call.1} parent=1 // pred_region
      _
    $region13: #{tpu_custom_call.1} parent=1 // pred_fallthru
      _
    // Predicated region
    $region14: #{tpu_custom_call.1} parent=1 // pred_check
      _
    $region15: #{tpu_custom_call.1} parent=1 // pred_check_branch
      %40 = sbr.rel (0) target = $region17
    $region16: #{tpu_custom_call.1} parent=1 // pred_region
      %42 = dma.done [#allocation3], 16384
    $region17: #{tpu_custom_call.1} parent=1 // pred_fallthru
      _
    // Predicated region
    $region18: #{tpu_custom_call.1} parent=1 // pred_check
      _
    $region19: #{tpu_custom_call.1} parent=1 // pred_check_branch
      %44 = sbr.rel (0) target = $region21
    $region20: #{tpu_custom_call.1} parent=1 // pred_region
      %46 = dma.done [#allocation6], 2048
    $region21: #{tpu_custom_call.1} parent=1 // pred_fallthru
      _
    %v47 = vld [vmem:[#allocation2] sm:$0xff]
    %v48 = vld [vmem:[#allocation2 + $0x8] sm:$0xff]
    %v49 = vld [vmem:[#allocation2 + $0x10] sm:$0xff]
    %v50 = vld [vmem:[#allocation2 + $0x18] sm:$0xff]
    %v51 = vld [vmem:[#allocation2 + $0x20] sm:$0xff]
    %v52 = vld [vmem:[#allocation2 + $0x28] sm:$0xff]
    %v53 = vld [vmem:[#allocation2 + $0x30] sm:$0xff]
    %v54 = vld [vmem:[#allocation2 + $0x38] sm:$0xff]
    %v55 = vld [vmem:[#allocation2 + $0x40] sm:$0xff]
    %v56 = vld [vmem:[#allocation2 + $0x48] sm:$0xff]
    %v57 = vld [vmem:[#allocation2 + $0x50] sm:$0xff]
    %v58 = vld [vmem:[#allocation2 + $0x58] sm:$0xff]
    %v59 = vld [vmem:[#allocation2 + $0x60] sm:$0xff]
    %v60 = vld [vmem:[#allocation2 + $0x68] sm:$0xff]
    %v61 = vld [vmem:[#allocation2 + $0x70] sm:$0xff]
    %v62 = vld [vmem:[#allocation2 + $0x78] sm:$0xff]
    %v63 = vld [vmem:[#allocation2 + $0x80] sm:$0xff]
    %v64 = vld [vmem:[#allocation2 + $0x88] sm:$0xff]
    %v65 = vld [vmem:[#allocation2 + $0x90] sm:$0xff]
    %v66 = vld [vmem:[#allocation2 + $0x98] sm:$0xff]
    %v67 = vld [vmem:[#allocation2 + $0xa0] sm:$0xff]
    %v68 = vld [vmem:[#allocation2 + $0xa8] sm:$0xff]
    %v69 = vld [vmem:[#allocation2 + $0xb0] sm:$0xff]
    %v70 = vld [vmem:[#allocation2 + $0xb8] sm:$0xff]
    %v71 = vld [vmem:[#allocation2 + $0xc0] sm:$0xff]
    %v72 = vld [vmem:[#allocation2 + $0xc8] sm:$0xff]
    %v73 = vld [vmem:[#allocation2 + $0xd0] sm:$0xff]
    %v74 = vld [vmem:[#allocation2 + $0xd8] sm:$0xff]
    %v75 = vld [vmem:[#allocation2 + $0xe0] sm:$0xff]
    %v76 = vld [vmem:[#allocation2 + $0xe8] sm:$0xff]
    %v77 = vld [vmem:[#allocation2 + $0xf0] sm:$0xff]
    %v78 = vld [vmem:[#allocation2 + $0xf8] sm:$0xff]
    %v79 = vld [vmem:[#allocation2 + $0x100] sm:$0xff]
    %v80 = vld [vmem:[#allocation2 + $0x108] sm:$0xff]
    %v81 = vld [vmem:[#allocation2 + $0x110] sm:$0xff]
    %v82 = vld [vmem:[#allocation2 + $0x118] sm:$0xff]
    %v83 = vld [vmem:[#allocation2 + $0x120] sm:$0xff]
    %v84 = vld [vmem:[#allocation2 + $0x128] sm:$0xff]
    %v85 = vld [vmem:[#allocation2 + $0x130] sm:$0xff]
    %v86 = vld [vmem:[#allocation2 + $0x138] sm:$0xff]
    %v87 = vld [vmem:[#allocation2 + $0x140] sm:$0xff]
    %v88 = vld [vmem:[#allocation2 + $0x148] sm:$0xff]
    %v89 = vld [vmem:[#allocation2 + $0x150] sm:$0xff]
    %v90 = vld [vmem:[#allocation2 + $0x158] sm:$0xff]
    %v91 = vld [vmem:[#allocation2 + $0x160] sm:$0xff]
    %v92 = vld [vmem:[#allocation2 + $0x168] sm:$0xff]
    %v93 = vld [vmem:[#allocation2 + $0x170] sm:$0xff]
    %v94 = vld [vmem:[#allocation2 + $0x178] sm:$0xff]
    %v95 = vld [vmem:[#allocation2 + $0x180] sm:$0xff]
    %v96 = vld [vmem:[#allocation2 + $0x188] sm:$0xff]
    %v97 = vld [vmem:[#allocation2 + $0x190] sm:$0xff]
    %v98 = vld [vmem:[#allocation2 + $0x198] sm:$0xff]
    %v99 = vld [vmem:[#allocation2 + $0x1a0] sm:$0xff]
    %v100 = vld [vmem:[#allocation2 + $0x1a8] sm:$0xff]
    %v101 = vld [vmem:[#allocation2 + $0x1b0] sm:$0xff]
    %v102 = vld [vmem:[#allocation2 + $0x1b8] sm:$0xff]
    %v103 = vld [vmem:[#allocation2 + $0x1c0] sm:$0xff]
    %v104 = vld [vmem:[#allocation2 + $0x1c8] sm:$0xff]
    %v105 = vld [vmem:[#allocation2 + $0x1d0] sm:$0xff]
    %v106 = vld [vmem:[#allocation2 + $0x1d8] sm:$0xff]
    %v107 = vld [vmem:[#allocation2 + $0x1e0] sm:$0xff]
    %v108 = vld [vmem:[#allocation2 + $0x1e8] sm:$0xff]
    %v109 = vld [vmem:[#allocation2 + $0x1f0] sm:$0xff]
    %v110 = vld [vmem:[#allocation2 + $0x1f8] sm:$0xff]
    %v111 = vld [vmem:[#allocation2 + $0x200] sm:$0xff]
    %v112 = vld [vmem:[#allocation2 + $0x208] sm:$0xff]
    %v113 = vld [vmem:[#allocation2 + $0x210] sm:$0xff]
    %v114 = vld [vmem:[#allocation2 + $0x218] sm:$0xff]
    %v115 = vld [vmem:[#allocation2 + $0x220] sm:$0xff]
    %v116 = vld [vmem:[#allocation2 + $0x228] sm:$0xff]
    %v117 = vld [vmem:[#allocation2 + $0x230] sm:$0xff]
    %v118 = vld [vmem:[#allocation2 + $0x238] sm:$0xff]
    %v119 = vld [vmem:[#allocation2 + $0x240] sm:$0xff]
    %v120 = vld [vmem:[#allocation2 + $0x248] sm:$0xff]
    %v121 = vld [vmem:[#allocation2 + $0x250] sm:$0xff]
    %v122 = vld [vmem:[#allocation2 + $0x258] sm:$0xff]
    %v123 = vld [vmem:[#allocation2 + $0x260] sm:$0xff]
    %v124 = vld [vmem:[#allocation2 + $0x268] sm:$0xff]
    %v125 = vld [vmem:[#allocation2 + $0x270] sm:$0xff]
    %v126 = vld [vmem:[#allocation2 + $0x278] sm:$0xff]
    %v127 = vld [vmem:[#allocation2 + $0x280] sm:$0xff]
    %v128 = vld [vmem:[#allocation2 + $0x288] sm:$0xff]
    %v129 = vld [vmem:[#allocation2 + $0x290] sm:$0xff]
    %v130 = vld [vmem:[#allocation2 + $0x298] sm:$0xff]
    %v131 = vld [vmem:[#allocation2 + $0x2a0] sm:$0xff]
    %v132 = vld [vmem:[#allocation2 + $0x2a8] sm:$0xff]
    %v133 = vld [vmem:[#allocation2 + $0x2b0] sm:$0xff]
    %v134 = vld [vmem:[#allocation2 + $0x2b8] sm:$0xff]
    %v135 = vld [vmem:[#allocation2 + $0x2c0] sm:$0xff]
    %v136 = vld [vmem:[#allocation2 + $0x2c8] sm:$0xff]
    %v137 = vld [vmem:[#allocation2 + $0x2d0] sm:$0xff]
    %v138 = vld [vmem:[#allocation2 + $0x2d8] sm:$0xff]
    %v139 = vld [vmem:[#allocation2 + $0x2e0] sm:$0xff]
    %v140 = vld [vmem:[#allocation2 + $0x2e8] sm:$0xff]
    %v141 = vld [vmem:[#allocation2 + $0x2f0] sm:$0xff]
    %v142 = vld [vmem:[#allocation2 + $0x2f8] sm:$0xff]
    %v143 = vld [vmem:[#allocation2 + $0x300] sm:$0xff]
    %v144 = vld [vmem:[#allocation2 + $0x308] sm:$0xff]
    %v145 = vld [vmem:[#allocation2 + $0x310] sm:$0xff]
    %v146 = vld [vmem:[#allocation2 + $0x318] sm:$0xff]
    %v147 = vld [vmem:[#allocation2 + $0x320] sm:$0xff]
    %v148 = vld [vmem:[#allocation2 + $0x328] sm:$0xff]
    %v149 = vld [vmem:[#allocation2 + $0x330] sm:$0xff]
    %v150 = vld [vmem:[#allocation2 + $0x338] sm:$0xff]
    %v151 = vld [vmem:[#allocation2 + $0x340] sm:$0xff]
    %v152 = vld [vmem:[#allocation2 + $0x348] sm:$0xff]
    %v153 = vld [vmem:[#allocation2 + $0x350] sm:$0xff]
    %v154 = vld [vmem:[#allocation2 + $0x358] sm:$0xff]
    %v155 = vld [vmem:[#allocation2 + $0x360] sm:$0xff]
    %v156 = vld [vmem:[#allocation2 + $0x368] sm:$0xff]
    %v157 = vld [vmem:[#allocation2 + $0x370] sm:$0xff]
    %v158 = vld [vmem:[#allocation2 + $0x378] sm:$0xff]
    %v159 = vld [vmem:[#allocation2 + $0x380] sm:$0xff]
    %v160 = vld [vmem:[#allocation2 + $0x388] sm:$0xff]
    %v161 = vld [vmem:[#allocation2 + $0x390] sm:$0xff]
    %v162 = vld [vmem:[#allocation2 + $0x398] sm:$0xff]
    %v163 = vld [vmem:[#allocation2 + $0x3a0] sm:$0xff]
    %v164 = vld [vmem:[#allocation2 + $0x3a8] sm:$0xff]
    %v165 = vld [vmem:[#allocation2 + $0x3b0] sm:$0xff]
    %v166 = vld [vmem:[#allocation2 + $0x3b8] sm:$0xff]
    %v167 = vld [vmem:[#allocation2 + $0x3c0] sm:$0xff]
    %v168 = vld [vmem:[#allocation2 + $0x3c8] sm:$0xff]
    %v169 = vld [vmem:[#allocation2 + $0x3d0] sm:$0xff]
    %v170 = vld [vmem:[#allocation2 + $0x3d8] sm:$0xff]
    %v171 = vld [vmem:[#allocation2 + $0x3e0] sm:$0xff]
    %v172 = vld [vmem:[#allocation2 + $0x3e8] sm:$0xff]
    %v173 = vld [vmem:[#allocation2 + $0x3f0] sm:$0xff]
    %v174 = vld [vmem:[#allocation2 + $0x3f8] sm:$0xff]
    %175 = vadd.xlane.f32.xlu0 %v47
    %v176 = vpop.xlane.xlu0 %175
    %177 = vadd.xlane.f32.xlu0 %v48
    %v178 = vpop.xlane.xlu0 %177
    %179 = vadd.xlane.f32.xlu0 %v51
    %v180 = vpop.xlane.xlu0 %179
    %181 = vadd.xlane.f32.xlu0 %v52
    %v182 = vpop.xlane.xlu0 %181
    %183 = vadd.xlane.f32.xlu0 %v55
    %v184 = vpop.xlane.xlu0 %183
    %185 = vadd.xlane.f32.xlu0 %v56
    %v186 = vpop.xlane.xlu0 %185
    %187 = vadd.xlane.f32.xlu0 %v59
    %v188 = vpop.xlane.xlu0 %187
    %189 = vadd.xlane.f32.xlu0 %v60
    %v190 = vpop.xlane.xlu0 %189
    %191 = vadd.xlane.f32.xlu0 %v63
    %v192 = vpop.xlane.xlu0 %191
    %193 = vadd.xlane.f32.xlu0 %v64
    %v194 = vpop.xlane.xlu0 %193
    %195 = vadd.xlane.f32.xlu0 %v67
    %v196 = vpop.xlane.xlu0 %195
    %197 = vadd.xlane.f32.xlu0 %v68
    %v198 = vpop.xlane.xlu0 %197
    %199 = vadd.xlane.f32.xlu0 %v71
    %v200 = vpop.xlane.xlu0 %199
    %201 = vadd.xlane.f32.xlu0 %v72
    %v202 = vpop.xlane.xlu0 %201
    %203 = vadd.xlane.f32.xlu0 %v75
    %v204 = vpop.xlane.xlu0 %203
    %205 = vadd.xlane.f32.xlu0 %v76
    %v206 = vpop.xlane.xlu0 %205
    %207 = vadd.xlane.f32.xlu0 %v79
    %v208 = vpop.xlane.xlu0 %207
    %209 = vadd.xlane.f32.xlu0 %v80
    %v210 = vpop.xlane.xlu0 %209
    %211 = vadd.xlane.f32.xlu0 %v83
    %v212 = vpop.xlane.xlu0 %211
    %213 = vadd.xlane.f32.xlu0 %v84
    %v214 = vpop.xlane.xlu0 %213
    %215 = vadd.xlane.f32.xlu0 %v87
    %v216 = vpop.xlane.xlu0 %215
    %217 = vadd.xlane.f32.xlu0 %v88
    %v218 = vpop.xlane.xlu0 %217
    %219 = vadd.xlane.f32.xlu0 %v91
    %v220 = vpop.xlane.xlu0 %219
    %221 = vadd.xlane.f32.xlu0 %v92
    %v222 = vpop.xlane.xlu0 %221
    %223 = vadd.xlane.f32.xlu0 %v95
    %v224 = vpop.xlane.xlu0 %223
    %225 = vadd.xlane.f32.xlu0 %v96
    %v226 = vpop.xlane.xlu0 %225
    %227 = vadd.xlane.f32.xlu0 %v99
    %v228 = vpop.xlane.xlu0 %227
    %229 = vadd.xlane.f32.xlu0 %v100
    %v230 = vpop.xlane.xlu0 %229
    %231 = vadd.xlane.f32.xlu0 %v103
    %v232 = vpop.xlane.xlu0 %231
    %233 = vadd.xlane.f32.xlu0 %v104
    %v234 = vpop.xlane.xlu0 %233
    %235 = vadd.xlane.f32.xlu0 %v107
    %v236 = vpop.xlane.xlu0 %235
    %237 = vadd.xlane.f32.xlu0 %v108
    %v238 = vpop.xlane.xlu0 %237
    %239 = vadd.xlane.f32.xlu0 %v111
    %v240 = vpop.xlane.xlu0 %239
    %241 = vadd.xlane.f32.xlu0 %v112
    %v242 = vpop.xlane.xlu0 %241
    %243 = vadd.xlane.f32.xlu0 %v115
    %v244 = vpop.xlane.xlu0 %243
    %245 = vadd.xlane.f32.xlu0 %v116
    %v246 = vpop.xlane.xlu0 %245
    %247 = vadd.xlane.f32.xlu0 %v119
    %v248 = vpop.xlane.xlu0 %247
    %249 = vadd.xlane.f32.xlu0 %v120
    %v250 = vpop.xlane.xlu0 %249
    %251 = vadd.xlane.f32.xlu0 %v123
    %v252 = vpop.xlane.xlu0 %251
    %253 = vadd.xlane.f32.xlu0 %v124
    %v254 = vpop.xlane.xlu0 %253
    %255 = vadd.xlane.f32.xlu0 %v127
    %v256 = vpop.xlane.xlu0 %255
    %257 = vadd.xlane.f32.xlu0 %v128
    %v258 = vpop.xlane.xlu0 %257
    %259 = vadd.xlane.f32.xlu0 %v131
    %v260 = vpop.xlane.xlu0 %259
    %261 = vadd.xlane.f32.xlu0 %v132
    %v262 = vpop.xlane.xlu0 %261
    %263 = vadd.xlane.f32.xlu0 %v135
    %v264 = vpop.xlane.xlu0 %263
    %265 = vadd.xlane.f32.xlu0 %v136
    %v266 = vpop.xlane.xlu0 %265
    %267 = vadd.xlane.f32.xlu0 %v139
    %v268 = vpop.xlane.xlu0 %267
    %269 = vadd.xlane.f32.xlu0 %v140
    %v270 = vpop.xlane.xlu0 %269
    %271 = vadd.xlane.f32.xlu0 %v143
    %v272 = vpop.xlane.xlu0 %271
    %273 = vadd.xlane.f32.xlu0 %v144
    %v274 = vpop.xlane.xlu0 %273
    %275 = vadd.xlane.f32.xlu0 %v147
    %v276 = vpop.xlane.xlu0 %275
    %277 = vadd.xlane.f32.xlu0 %v148
    %v278 = vpop.xlane.xlu0 %277
    %279 = vadd.xlane.f32.xlu0 %v151
    %v280 = vpop.xlane.xlu0 %279
    %281 = vadd.xlane.f32.xlu0 %v152
    %v282 = vpop.xlane.xlu0 %281
    %283 = vadd.xlane.f32.xlu0 %v155
    %v284 = vpop.xlane.xlu0 %283
    %285 = vadd.xlane.f32.xlu0 %v156
    %v286 = vpop.xlane.xlu0 %285
    %287 = vadd.xlane.f32.xlu0 %v159
    %v288 = vpop.xlane.xlu0 %287
    %289 = vadd.xlane.f32.xlu0 %v160
    %v290 = vpop.xlane.xlu0 %289
    %291 = vadd.xlane.f32.xlu0 %v163
    %v292 = vpop.xlane.xlu0 %291
    %293 = vadd.xlane.f32.xlu0 %v164
    %v294 = vpop.xlane.xlu0 %293
    %295 = vadd.xlane.f32.xlu0 %v167
    %v296 = vpop.xlane.xlu0 %295
    %297 = vadd.xlane.f32.xlu0 %v168
    %v298 = vpop.xlane.xlu0 %297
    %299 = vadd.xlane.f32.xlu0 %v171
    %v300 = vpop.xlane.xlu0 %299
    %301 = vadd.xlane.f32.xlu0 %v172
    %v302 = vpop.xlane.xlu0 %301
    %303 = vadd.xlane.f32.xlu0 %v49
    %v304 = vpop.xlane.xlu0 %303
    %305 = vadd.xlane.f32.xlu0 %v50
    %v306 = vpop.xlane.xlu0 %305
    %307 = vadd.xlane.f32.xlu0 %v53
    %v308 = vpop.xlane.xlu0 %307
    %309 = vadd.xlane.f32.xlu0 %v54
    %v310 = vpop.xlane.xlu0 %309
    %311 = vadd.xlane.f32.xlu0 %v57
    %v312 = vpop.xlane.xlu0 %311
    %313 = vadd.xlane.f32.xlu0 %v58
    %v314 = vpop.xlane.xlu0 %313
    %315 = vadd.xlane.f32.xlu0 %v61
    %v316 = vpop.xlane.xlu0 %315
    %317 = vadd.xlane.f32.xlu0 %v62
    %v318 = vpop.xlane.xlu0 %317
    %319 = vadd.xlane.f32.xlu0 %v65
    %v320 = vpop.xlane.xlu0 %319
    %321 = vadd.xlane.f32.xlu0 %v66
    %v322 = vpop.xlane.xlu0 %321
    %323 = vadd.xlane.f32.xlu0 %v69
    %v324 = vpop.xlane.xlu0 %323
    %325 = vadd.xlane.f32.xlu0 %v70
    %v326 = vpop.xlane.xlu0 %325
    %327 = vadd.xlane.f32.xlu0 %v73
    %v328 = vpop.xlane.xlu0 %327
    %329 = vadd.xlane.f32.xlu0 %v74
    %v330 = vpop.xlane.xlu0 %329
    %331 = vadd.xlane.f32.xlu0 %v77
    %v332 = vpop.xlane.xlu0 %331
    %333 = vadd.xlane.f32.xlu0 %v78
    %v334 = vpop.xlane.xlu0 %333
    %335 = vadd.xlane.f32.xlu0 %v81
    %v336 = vpop.xlane.xlu0 %335
    %337 = vadd.xlane.f32.xlu0 %v82
    %v338 = vpop.xlane.xlu0 %337
    %339 = vadd.xlane.f32.xlu0 %v85
    %v340 = vpop.xlane.xlu0 %339
    %341 = vadd.xlane.f32.xlu0 %v86
    %v342 = vpop.xlane.xlu0 %341
    %343 = vadd.xlane.f32.xlu0 %v89
    %v344 = vpop.xlane.xlu0 %343
    %345 = vadd.xlane.f32.xlu0 %v90
    %v346 = vpop.xlane.xlu0 %345
    %347 = vadd.xlane.f32.xlu0 %v93
    %v348 = vpop.xlane.xlu0 %347
    %349 = vadd.xlane.f32.xlu0 %v94
    %v350 = vpop.xlane.xlu0 %349
    %351 = vadd.xlane.f32.xlu0 %v97
    %v352 = vpop.xlane.xlu0 %351
    %353 = vadd.xlane.f32.xlu0 %v98
    %v354 = vpop.xlane.xlu0 %353
    %355 = vadd.xlane.f32.xlu0 %v101
    %v356 = vpop.xlane.xlu0 %355
    %357 = vadd.xlane.f32.xlu0 %v102
    %v358 = vpop.xlane.xlu0 %357
    %359 = vadd.xlane.f32.xlu0 %v105
    %v360 = vpop.xlane.xlu0 %359
    %361 = vadd.xlane.f32.xlu0 %v106
    %v362 = vpop.xlane.xlu0 %361
    %363 = vadd.xlane.f32.xlu0 %v109
    %v364 = vpop.xlane.xlu0 %363
    %365 = vadd.xlane.f32.xlu0 %v110
    %v366 = vpop.xlane.xlu0 %365
    %367 = vadd.xlane.f32.xlu0 %v113
    %v368 = vpop.xlane.xlu0 %367
    %369 = vadd.xlane.f32.xlu0 %v114
    %v370 = vpop.xlane.xlu0 %369
    %371 = vadd.xlane.f32.xlu0 %v117
    %v372 = vpop.xlane.xlu0 %371
    %373 = vadd.xlane.f32.xlu0 %v118
    %v374 = vpop.xlane.xlu0 %373
    %375 = vadd.xlane.f32.xlu0 %v121
    %v376 = vpop.xlane.xlu0 %375
    %377 = vadd.xlane.f32.xlu0 %v122
    %v378 = vpop.xlane.xlu0 %377
    %379 = vadd.xlane.f32.xlu0 %v125
    %v380 = vpop.xlane.xlu0 %379
    %381 = vadd.xlane.f32.xlu0 %v126
    %v382 = vpop.xlane.xlu0 %381
    %383 = vadd.xlane.f32.xlu0 %v129
    %v384 = vpop.xlane.xlu0 %383
    %385 = vadd.xlane.f32.xlu0 %v130
    %v386 = vpop.xlane.xlu0 %385
    %387 = vadd.xlane.f32.xlu0 %v133
    %v388 = vpop.xlane.xlu0 %387
    %389 = vadd.xlane.f32.xlu0 %v134
    %v390 = vpop.xlane.xlu0 %389
    %391 = vadd.xlane.f32.xlu0 %v137
    %v392 = vpop.xlane.xlu0 %391
    %393 = vadd.xlane.f32.xlu0 %v138
    %v394 = vpop.xlane.xlu0 %393
    %395 = vadd.xlane.f32.xlu0 %v141
    %v396 = vpop.xlane.xlu0 %395
    %397 = vadd.xlane.f32.xlu0 %v142
    %v398 = vpop.xlane.xlu0 %397
    %399 = vadd.xlane.f32.xlu0 %v145
    %v400 = vpop.xlane.xlu0 %399
    %401 = vadd.xlane.f32.xlu0 %v146
    %v402 = vpop.xlane.xlu0 %401
    %403 = vadd.xlane.f32.xlu0 %v149
    %v404 = vpop.xlane.xlu0 %403
    %405 = vadd.xlane.f32.xlu0 %v150
    %v406 = vpop.xlane.xlu0 %405
    %407 = vadd.xlane.f32.xlu0 %v153
    %v408 = vpop.xlane.xlu0 %407
    %409 = vadd.xlane.f32.xlu0 %v154
    %v410 = vpop.xlane.xlu0 %409
    %411 = vadd.xlane.f32.xlu0 %v157
    %v412 = vpop.xlane.xlu0 %411
    %413 = vadd.xlane.f32.xlu0 %v158
    %v414 = vpop.xlane.xlu0 %413
    %415 = vadd.xlane.f32.xlu0 %v161
    %v416 = vpop.xlane.xlu0 %415
    %417 = vadd.xlane.f32.xlu0 %v162
    %v418 = vpop.xlane.xlu0 %417
    %419 = vadd.xlane.f32.xlu0 %v165
    %v420 = vpop.xlane.xlu0 %419
    %421 = vadd.xlane.f32.xlu0 %v166
    %v422 = vpop.xlane.xlu0 %421
    %423 = vadd.xlane.f32.xlu0 %v169
    %v424 = vpop.xlane.xlu0 %423
    %425 = vadd.xlane.f32.xlu0 %v170
    %v426 = vpop.xlane.xlu0 %425
    %427 = vadd.xlane.f32.xlu0 %v173
    %v428 = vpop.xlane.xlu0 %427
    %429 = vadd.xlane.f32.xlu0 %v174
    %v430 = vpop.xlane.xlu0 %429
    %v431 = vadd.f32 %v176, %v304
    %v432 = vadd.f32 %v178, %v306
    %v433 = vadd.f32 %v180, %v308
    %v434 = vadd.f32 %v182, %v310
    %v435 = vadd.f32 %v184, %v312
    %v436 = vadd.f32 %v186, %v314
    %v437 = vadd.f32 %v188, %v316
    %v438 = vadd.f32 %v190, %v318
    %v439 = vadd.f32 %v192, %v320
    %v440 = vadd.f32 %v194, %v322
    %v441 = vadd.f32 %v196, %v324
    %v442 = vadd.f32 %v198, %v326
    %v443 = vadd.f32 %v200, %v328
    %v444 = vadd.f32 %v202, %v330
    %v445 = vadd.f32 %v204, %v332
    %v446 = vadd.f32 %v206, %v334
    %v447 = vadd.f32 %v208, %v336
    %v448 = vadd.f32 %v210, %v338
    %v449 = vadd.f32 %v212, %v340
    %v450 = vadd.f32 %v214, %v342
    %v451 = vadd.f32 %v216, %v344
    %v452 = vadd.f32 %v218, %v346
    %v453 = vadd.f32 %v220, %v348
    %v454 = vadd.f32 %v222, %v350
    %v455 = vadd.f32 %v224, %v352
    %v456 = vadd.f32 %v226, %v354
    %v457 = vadd.f32 %v228, %v356
    %v458 = vadd.f32 %v230, %v358
    %v459 = vadd.f32 %v232, %v360
    %v460 = vadd.f32 %v234, %v362
    %v461 = vadd.f32 %v236, %v364
    %v462 = vadd.f32 %v238, %v366
    %v463 = vadd.f32 %v240, %v368
    %v464 = vadd.f32 %v242, %v370
    %v465 = vadd.f32 %v244, %v372
    %v466 = vadd.f32 %v246, %v374
    %v467 = vadd.f32 %v248, %v376
    %v468 = vadd.f32 %v250, %v378
    %v469 = vadd.f32 %v252, %v380
    %v470 = vadd.f32 %v254, %v382
    %v471 = vadd.f32 %v256, %v384
    %v472 = vadd.f32 %v258, %v386
    %v473 = vadd.f32 %v260, %v388
    %v474 = vadd.f32 %v262, %v390
    %v475 = vadd.f32 %v264, %v392
    %v476 = vadd.f32 %v266, %v394
    %v477 = vadd.f32 %v268, %v396
    %v478 = vadd.f32 %v270, %v398
    %v479 = vadd.f32 %v272, %v400
    %v480 = vadd.f32 %v274, %v402
    %v481 = vadd.f32 %v276, %v404
    %v482 = vadd.f32 %v278, %v406
    %v483 = vadd.f32 %v280, %v408
    %v484 = vadd.f32 %v282, %v410
    %v485 = vadd.f32 %v284, %v412
    %v486 = vadd.f32 %v286, %v414
    %v487 = vadd.f32 %v288, %v416
    %v488 = vadd.f32 %v290, %v418
    %v489 = vadd.f32 %v292, %v420
    %v490 = vadd.f32 %v294, %v422
    %v491 = vadd.f32 %v296, %v424
    %v492 = vadd.f32 %v298, %v426
    %v493 = vadd.f32 %v300, %v428
    %v494 = vadd.f32 %v302, %v430
    %v495 = vmul.f32 %v431, 0.00390625
    %v496 = vmul.f32 %v432, 0.00390625
    %v497 = vmul.f32 %v433, 0.00390625
    %v498 = vmul.f32 %v434, 0.00390625
    %v499 = vmul.f32 %v435, 0.00390625
    %v500 = vmul.f32 %v436, 0.00390625
    %v501 = vmul.f32 %v437, 0.00390625
    %v502 = vmul.f32 %v438, 0.00390625
    %v503 = vmul.f32 %v439, 0.00390625
    %v504 = vmul.f32 %v440, 0.00390625
    %v505 = vmul.f32 %v441, 0.00390625
    %v506 = vmul.f32 %v442, 0.00390625
    %v507 = vmul.f32 %v443, 0.00390625
    %v508 = vmul.f32 %v444, 0.00390625
    %v509 = vmul.f32 %v445, 0.00390625
    %v510 = vmul.f32 %v446, 0.00390625
    %v511 = vmul.f32 %v447, 0.00390625
    %v512 = vmul.f32 %v448, 0.00390625
    %v513 = vmul.f32 %v449, 0.00390625
    %v514 = vmul.f32 %v450, 0.00390625
    %v515 = vmul.f32 %v451, 0.00390625
    %v516 = vmul.f32 %v452, 0.00390625
    %v517 = vmul.f32 %v453, 0.00390625
    %v518 = vmul.f32 %v454, 0.00390625
    %v519 = vmul.f32 %v455, 0.00390625
    %v520 = vmul.f32 %v456, 0.00390625
    %v521 = vmul.f32 %v457, 0.00390625
    %v522 = vmul.f32 %v458, 0.00390625
    %v523 = vmul.f32 %v459, 0.00390625
    %v524 = vmul.f32 %v460, 0.00390625
    %v525 = vmul.f32 %v461, 0.00390625
    %v526 = vmul.f32 %v462, 0.00390625
    %v527 = vmul.f32 %v463, 0.00390625
    %v528 = vmul.f32 %v464, 0.00390625
    %v529 = vmul.f32 %v465, 0.00390625
    %v530 = vmul.f32 %v466, 0.00390625
    %v531 = vmul.f32 %v467, 0.00390625
    %v532 = vmul.f32 %v468, 0.00390625
    %v533 = vmul.f32 %v469, 0.00390625
    %v534 = vmul.f32 %v470, 0.00390625
    %v535 = vmul.f32 %v471, 0.00390625
    %v536 = vmul.f32 %v472, 0.00390625
    %v537 = vmul.f32 %v473, 0.00390625
    %v538 = vmul.f32 %v474, 0.00390625
    %v539 = vmul.f32 %v475, 0.00390625
    %v540 = vmul.f32 %v476, 0.00390625
    %v541 = vmul.f32 %v477, 0.00390625
    %v542 = vmul.f32 %v478, 0.00390625
    %v543 = vmul.f32 %v479, 0.00390625
    %v544 = vmul.f32 %v480, 0.00390625
    %v545 = vmul.f32 %v481, 0.00390625
    %v546 = vmul.f32 %v482, 0.00390625
    %v547 = vmul.f32 %v483, 0.00390625
    %v548 = vmul.f32 %v484, 0.00390625
    %v549 = vmul.f32 %v485, 0.00390625
    %v550 = vmul.f32 %v486, 0.00390625
    %v551 = vmul.f32 %v487, 0.00390625
    %v552 = vmul.f32 %v488, 0.00390625
    %v553 = vmul.f32 %v489, 0.00390625
    %v554 = vmul.f32 %v490, 0.00390625
    %v555 = vmul.f32 %v491, 0.00390625
    %v556 = vmul.f32 %v492, 0.00390625
    %v557 = vmul.f32 %v493, 0.00390625
    %v558 = vmul.f32 %v494, 0.00390625
    %v559 = vsub.f32 %v47, %v495
    %v560 = vsub.f32 %v48, %v496
    %v561 = vsub.f32 %v51, %v497
    %v562 = vsub.f32 %v52, %v498
    %v563 = vsub.f32 %v55, %v499
    %v564 = vsub.f32 %v56, %v500
    %v565 = vsub.f32 %v59, %v501
    %v566 = vsub.f32 %v60, %v502
    %v567 = vsub.f32 %v63, %v503
    %v568 = vsub.f32 %v64, %v504
    %v569 = vsub.f32 %v67, %v505
    %v570 = vsub.f32 %v68, %v506
    %v571 = vsub.f32 %v71, %v507
    %v572 = vsub.f32 %v72, %v508
    %v573 = vsub.f32 %v75, %v509
    %v574 = vsub.f32 %v76, %v510
    %v575 = vsub.f32 %v79, %v511
    %v576 = vsub.f32 %v80, %v512
    %v577 = vsub.f32 %v83, %v513
    %v578 = vsub.f32 %v84, %v514
    %v579 = vsub.f32 %v87, %v515
    %v580 = vsub.f32 %v88, %v516
    %v581 = vsub.f32 %v91, %v517
    %v582 = vsub.f32 %v92, %v518
    %v583 = vsub.f32 %v95, %v519
    %v584 = vsub.f32 %v96, %v520
    %v585 = vsub.f32 %v99, %v521
    %v586 = vsub.f32 %v100, %v522
    %v587 = vsub.f32 %v103, %v523
    %v588 = vsub.f32 %v104, %v524
    %v589 = vsub.f32 %v107, %v525
    %v590 = vsub.f32 %v108, %v526
    %v591 = vsub.f32 %v111, %v527
    %v592 = vsub.f32 %v112, %v528
    %v593 = vsub.f32 %v115, %v529
    %v594 = vsub.f32 %v116, %v530
    %v595 = vsub.f32 %v119, %v531
    %v596 = vsub.f32 %v120, %v532
    %v597 = vsub.f32 %v123, %v533
    %v598 = vsub.f32 %v124, %v534
    %v599 = vsub.f32 %v127, %v535
    %v600 = vsub.f32 %v128, %v536
    %v601 = vsub.f32 %v131, %v537
    %v602 = vsub.f32 %v132, %v538
    %v603 = vsub.f32 %v135, %v539
    %v604 = vsub.f32 %v136, %v540
    %v605 = vsub.f32 %v139, %v541
    %v606 = vsub.f32 %v140, %v542
    %v607 = vsub.f32 %v143, %v543
    %v608 = vsub.f32 %v144, %v544
    %v609 = vsub.f32 %v147, %v545
    %v610 = vsub.f32 %v148, %v546
    %v611 = vsub.f32 %v151, %v547
    %v612 = vsub.f32 %v152, %v548
    %v613 = vsub.f32 %v155, %v549
    %v614 = vsub.f32 %v156, %v550
    %v615 = vsub.f32 %v159, %v551
    %v616 = vsub.f32 %v160, %v552
    %v617 = vsub.f32 %v163, %v553
    %v618 = vsub.f32 %v164, %v554
    %v619 = vsub.f32 %v167, %v555
    %v620 = vsub.f32 %v168, %v556
    %v621 = vsub.f32 %v171, %v557
    %v622 = vsub.f32 %v172, %v558
    %v623 = vsub.f32 %v49, %v495
    %v624 = vsub.f32 %v50, %v496
    %v625 = vsub.f32 %v53, %v497
    %v626 = vsub.f32 %v54, %v498
    %v627 = vsub.f32 %v57, %v499
    %v628 = vsub.f32 %v58, %v500
    %v629 = vsub.f32 %v61, %v501
    %v630 = vsub.f32 %v62, %v502
    %v631 = vsub.f32 %v65, %v503
    %v632 = vsub.f32 %v66, %v504
    %v633 = vsub.f32 %v69, %v505
    %v634 = vsub.f32 %v70, %v506
    %v635 = vsub.f32 %v73, %v507
    %v636 = vsub.f32 %v74, %v508
    %v637 = vsub.f32 %v77, %v509
    %v638 = vsub.f32 %v78, %v510
    %v639 = vsub.f32 %v81, %v511
    %v640 = vsub.f32 %v82, %v512
    %v641 = vsub.f32 %v85, %v513
    %v642 = vsub.f32 %v86, %v514
    %v643 = vsub.f32 %v89, %v515
    %v644 = vsub.f32 %v90, %v516
    %v645 = vsub.f32 %v93, %v517
    %v646 = vsub.f32 %v94, %v518
    %v647 = vsub.f32 %v97, %v519
    %v648 = vsub.f32 %v98, %v520
    %v649 = vsub.f32 %v101, %v521
    %v650 = vsub.f32 %v102, %v522
    %v651 = vsub.f32 %v105, %v523
    %v652 = vsub.f32 %v106, %v524
    %v653 = vsub.f32 %v109, %v525
    %v654 = vsub.f32 %v110, %v526
    %v655 = vsub.f32 %v113, %v527
    %v656 = vsub.f32 %v114, %v528
    %v657 = vsub.f32 %v117, %v529
    %v658 = vsub.f32 %v118, %v530
    %v659 = vsub.f32 %v121, %v531
    %v660 = vsub.f32 %v122, %v532
    %v661 = vsub.f32 %v125, %v533
    %v662 = vsub.f32 %v126, %v534
    %v663 = vsub.f32 %v129, %v535
    %v664 = vsub.f32 %v130, %v536
    %v665 = vsub.f32 %v133, %v537
    %v666 = vsub.f32 %v134, %v538
    %v667 = vsub.f32 %v137, %v539
    %v668 = vsub.f32 %v138, %v540
    %v669 = vsub.f32 %v141, %v541
    %v670 = vsub.f32 %v142, %v542
    %v671 = vsub.f32 %v145, %v543
    %v672 = vsub.f32 %v146, %v544
    %v673 = vsub.f32 %v149, %v545
    %v674 = vsub.f32 %v150, %v546
    %v675 = vsub.f32 %v153, %v547
    %v676 = vsub.f32 %v154, %v548
    %v677 = vsub.f32 %v157, %v549
    %v678 = vsub.f32 %v158, %v550
    %v679 = vsub.f32 %v161, %v551
    %v680 = vsub.f32 %v162, %v552
    %v681 = vsub.f32 %v165, %v553
    %v682 = vsub.f32 %v166, %v554
    %v683 = vsub.f32 %v169, %v555
    %v684 = vsub.f32 %v170, %v556
    %v685 = vsub.f32 %v173, %v557
    %v686 = vsub.f32 %v174, %v558
    %v687 = vmul.f32 %v559, %v559
    %v688 = vmul.f32 %v560, %v560
    %v689 = vmul.f32 %v561, %v561
    %v690 = vmul.f32 %v562, %v562
    %v691 = vmul.f32 %v563, %v563
    %v692 = vmul.f32 %v564, %v564
    %v693 = vmul.f32 %v565, %v565
    %v694 = vmul.f32 %v566, %v566
    %v695 = vmul.f32 %v567, %v567
    %v696 = vmul.f32 %v568, %v568
    %v697 = vmul.f32 %v569, %v569
    %v698 = vmul.f32 %v570, %v570
    %v699 = vmul.f32 %v571, %v571
    %v700 = vmul.f32 %v572, %v572
    %v701 = vmul.f32 %v573, %v573
    %v702 = vmul.f32 %v574, %v574
    %v703 = vmul.f32 %v575, %v575
    %v704 = vmul.f32 %v576, %v576
    %v705 = vmul.f32 %v577, %v577
    %v706 = vmul.f32 %v578, %v578
    %v707 = vmul.f32 %v579, %v579
    %v708 = vmul.f32 %v580, %v580
    %v709 = vmul.f32 %v581, %v581
    %v710 = vmul.f32 %v582, %v582
    %v711 = vmul.f32 %v583, %v583
    %v712 = vmul.f32 %v584, %v584
    %v713 = vmul.f32 %v585, %v585
    %v714 = vmul.f32 %v586, %v586
    %v715 = vmul.f32 %v587, %v587
    %v716 = vmul.f32 %v588, %v588
    %v717 = vmul.f32 %v589, %v589
    %v718 = vmul.f32 %v590, %v590
    %v719 = vmul.f32 %v591, %v591
    %v720 = vmul.f32 %v592, %v592
    %v721 = vmul.f32 %v593, %v593
    %v722 = vmul.f32 %v594, %v594
    %v723 = vmul.f32 %v595, %v595
    %v724 = vmul.f32 %v596, %v596
    %v725 = vmul.f32 %v597, %v597
    %v726 = vmul.f32 %v598, %v598
    %v727 = vmul.f32 %v599, %v599
    %v728 = vmul.f32 %v600, %v600
    %v729 = vmul.f32 %v601, %v601
    %v730 = vmul.f32 %v602, %v602
    %v731 = vmul.f32 %v603, %v603
    %v732 = vmul.f32 %v604, %v604
    %v733 = vmul.f32 %v605, %v605
    %v734 = vmul.f32 %v606, %v606
    %v735 = vmul.f32 %v607, %v607
    %v736 = vmul.f32 %v608, %v608
    %v737 = vmul.f32 %v609, %v609
    %v738 = vmul.f32 %v610, %v610
    %v739 = vmul.f32 %v611, %v611
    %v740 = vmul.f32 %v612, %v612
    %v741 = vmul.f32 %v613, %v613
    %v742 = vmul.f32 %v614, %v614
    %v743 = vmul.f32 %v615, %v615
    %v744 = vmul.f32 %v616, %v616
    %v745 = vmul.f32 %v617, %v617
    %v746 = vmul.f32 %v618, %v618
    %v747 = vmul.f32 %v619, %v619
    %v748 = vmul.f32 %v620, %v620
    %v749 = vmul.f32 %v621, %v621
    %v750 = vmul.f32 %v622, %v622
    %751 = vadd.xlane.f32.xlu0 %v687
    %v752 = vpop.xlane.xlu0 %751
    %753 = vadd.xlane.f32.xlu0 %v688
    %v754 = vpop.xlane.xlu0 %753
    %755 = vadd.xlane.f32.xlu0 %v689
    %v756 = vpop.xlane.xlu0 %755
    %757 = vadd.xlane.f32.xlu0 %v690
    %v758 = vpop.xlane.xlu0 %757
    %759 = vadd.xlane.f32.xlu0 %v691
    %v760 = vpop.xlane.xlu0 %759
    %761 = vadd.xlane.f32.xlu0 %v692
    %v762 = vpop.xlane.xlu0 %761
    %763 = vadd.xlane.f32.xlu0 %v693
    %v764 = vpop.xlane.xlu0 %763
    %765 = vadd.xlane.f32.xlu0 %v694
    %v766 = vpop.xlane.xlu0 %765
    %767 = vadd.xlane.f32.xlu0 %v695
    %v768 = vpop.xlane.xlu0 %767
    %769 = vadd.xlane.f32.xlu0 %v696
    %v770 = vpop.xlane.xlu0 %769
    %771 = vadd.xlane.f32.xlu0 %v697
    %v772 = vpop.xlane.xlu0 %771
    %773 = vadd.xlane.f32.xlu0 %v698
    %v774 = vpop.xlane.xlu0 %773
    %775 = vadd.xlane.f32.xlu0 %v699
    %v776 = vpop.xlane.xlu0 %775
    %777 = vadd.xlane.f32.xlu0 %v700
    %v778 = vpop.xlane.xlu0 %777
    %779 = vadd.xlane.f32.xlu0 %v701
    %v780 = vpop.xlane.xlu0 %779
    %781 = vadd.xlane.f32.xlu0 %v702
    %v782 = vpop.xlane.xlu0 %781
    %783 = vadd.xlane.f32.xlu0 %v703
    %v784 = vpop.xlane.xlu0 %783
    %785 = vadd.xlane.f32.xlu0 %v704
    %v786 = vpop.xlane.xlu0 %785
    %787 = vadd.xlane.f32.xlu0 %v705
    %v788 = vpop.xlane.xlu0 %787
    %789 = vadd.xlane.f32.xlu0 %v706
    %v790 = vpop.xlane.xlu0 %789
    %791 = vadd.xlane.f32.xlu0 %v707
    %v792 = vpop.xlane.xlu0 %791
    %793 = vadd.xlane.f32.xlu0 %v708
    %v794 = vpop.xlane.xlu0 %793
    %795 = vadd.xlane.f32.xlu0 %v709
    %v796 = vpop.xlane.xlu0 %795
    %797 = vadd.xlane.f32.xlu0 %v710
    %v798 = vpop.xlane.xlu0 %797
    %799 = vadd.xlane.f32.xlu0 %v711
    %v800 = vpop.xlane.xlu0 %799
    %801 = vadd.xlane.f32.xlu0 %v712
    %v802 = vpop.xlane.xlu0 %801
    %803 = vadd.xlane.f32.xlu0 %v713
    %v804 = vpop.xlane.xlu0 %803
    %805 = vadd.xlane.f32.xlu0 %v714
    %v806 = vpop.xlane.xlu0 %805
    %807 = vadd.xlane.f32.xlu0 %v715
    %v808 = vpop.xlane.xlu0 %807
    %809 = vadd.xlane.f32.xlu0 %v716
    %v810 = vpop.xlane.xlu0 %809
    %811 = vadd.xlane.f32.xlu0 %v717
    %v812 = vpop.xlane.xlu0 %811
    %813 = vadd.xlane.f32.xlu0 %v718
    %v814 = vpop.xlane.xlu0 %813
    %815 = vadd.xlane.f32.xlu0 %v719
    %v816 = vpop.xlane.xlu0 %815
    %817 = vadd.xlane.f32.xlu0 %v720
    %v818 = vpop.xlane.xlu0 %817
    %819 = vadd.xlane.f32.xlu0 %v721
    %v820 = vpop.xlane.xlu0 %819
    %821 = vadd.xlane.f32.xlu0 %v722
    %v822 = vpop.xlane.xlu0 %821
    %823 = vadd.xlane.f32.xlu0 %v723
    %v824 = vpop.xlane.xlu0 %823
    %825 = vadd.xlane.f32.xlu0 %v724
    %v826 = vpop.xlane.xlu0 %825
    %827 = vadd.xlane.f32.xlu0 %v725
    %v828 = vpop.xlane.xlu0 %827
    %829 = vadd.xlane.f32.xlu0 %v726
    %v830 = vpop.xlane.xlu0 %829
    %831 = vadd.xlane.f32.xlu0 %v727
    %v832 = vpop.xlane.xlu0 %831
    %833 = vadd.xlane.f32.xlu0 %v728
    %v834 = vpop.xlane.xlu0 %833
    %835 = vadd.xlane.f32.xlu0 %v729
    %v836 = vpop.xlane.xlu0 %835
    %837 = vadd.xlane.f32.xlu0 %v730
    %v838 = vpop.xlane.xlu0 %837
    %839 = vadd.xlane.f32.xlu0 %v731
    %v840 = vpop.xlane.xlu0 %839
    %841 = vadd.xlane.f32.xlu0 %v732
    %v842 = vpop.xlane.xlu0 %841
    %843 = vadd.xlane.f32.xlu0 %v733
    %v844 = vpop.xlane.xlu0 %843
    %845 = vadd.xlane.f32.xlu0 %v734
    %v846 = vpop.xlane.xlu0 %845
    %847 = vadd.xlane.f32.xlu0 %v735
    %v848 = vpop.xlane.xlu0 %847
    %849 = vadd.xlane.f32.xlu0 %v736
    %v850 = vpop.xlane.xlu0 %849
    %851 = vadd.xlane.f32.xlu0 %v737
    %v852 = vpop.xlane.xlu0 %851
    %853 = vadd.xlane.f32.xlu0 %v738
    %v854 = vpop.xlane.xlu0 %853
    %855 = vadd.xlane.f32.xlu0 %v739
    %v856 = vpop.xlane.xlu0 %855
    %857 = vadd.xlane.f32.xlu0 %v740
    %v858 = vpop.xlane.xlu0 %857
    %859 = vadd.xlane.f32.xlu0 %v741
    %v860 = vpop.xlane.xlu0 %859
    %861 = vadd.xlane.f32.xlu0 %v742
    %v862 = vpop.xlane.xlu0 %861
    %863 = vadd.xlane.f32.xlu0 %v743
    %v864 = vpop.xlane.xlu0 %863
    %865 = vadd.xlane.f32.xlu0 %v744
    %v866 = vpop.xlane.xlu0 %865
    %867 = vadd.xlane.f32.xlu0 %v745
    %v868 = vpop.xlane.xlu0 %867
    %869 = vadd.xlane.f32.xlu0 %v746
    %v870 = vpop.xlane.xlu0 %869
    %871 = vadd.xlane.f32.xlu0 %v747
    %v872 = vpop.xlane.xlu0 %871
    %873 = vadd.xlane.f32.xlu0 %v748
    %v874 = vpop.xlane.xlu0 %873
    %875 = vadd.xlane.f32.xlu0 %v749
    %v876 = vpop.xlane.xlu0 %875
    %877 = vadd.xlane.f32.xlu0 %v750
    %v878 = vpop.xlane.xlu0 %877
    %v879 = vmul.f32 %v623, %v623
    %v880 = vmul.f32 %v624, %v624
    %v881 = vmul.f32 %v625, %v625
    %v882 = vmul.f32 %v626, %v626
    %v883 = vmul.f32 %v627, %v627
    %v884 = vmul.f32 %v628, %v628
    %v885 = vmul.f32 %v629, %v629
    %v886 = vmul.f32 %v630, %v630
    %v887 = vmul.f32 %v631, %v631
    %v888 = vmul.f32 %v632, %v632
    %v889 = vmul.f32 %v633, %v633
    %v890 = vmul.f32 %v634, %v634
    %v891 = vmul.f32 %v635, %v635
    %v892 = vmul.f32 %v636, %v636
    %v893 = vmul.f32 %v637, %v637
    %v894 = vmul.f32 %v638, %v638
    %v895 = vmul.f32 %v639, %v639
    %v896 = vmul.f32 %v640, %v640
    %v897 = vmul.f32 %v641, %v641
    %v898 = vmul.f32 %v642, %v642
    %v899 = vmul.f32 %v643, %v643
    %v900 = vmul.f32 %v644, %v644
    %v901 = vmul.f32 %v645, %v645
    %v902 = vmul.f32 %v646, %v646
    %v903 = vmul.f32 %v647, %v647
    %v904 = vmul.f32 %v648, %v648
    %v905 = vmul.f32 %v649, %v649
    %v906 = vmul.f32 %v650, %v650
    %v907 = vmul.f32 %v651, %v651
    %v908 = vmul.f32 %v652, %v652
    %v909 = vmul.f32 %v653, %v653
    %v910 = vmul.f32 %v654, %v654
    %v911 = vmul.f32 %v655, %v655
    %v912 = vmul.f32 %v656, %v656
    %v913 = vmul.f32 %v657, %v657
    %v914 = vmul.f32 %v658, %v658
    %v915 = vmul.f32 %v659, %v659
    %v916 = vmul.f32 %v660, %v660
    %v917 = vmul.f32 %v661, %v661
    %v918 = vmul.f32 %v662, %v662
    %v919 = vmul.f32 %v663, %v663
    %v920 = vmul.f32 %v664, %v664
    %v921 = vmul.f32 %v665, %v665
    %v922 = vmul.f32 %v666, %v666
    %v923 = vmul.f32 %v667, %v667
    %v924 = vmul.f32 %v668, %v668
    %v925 = vmul.f32 %v669, %v669
    %v926 = vmul.f32 %v670, %v670
    %v927 = vmul.f32 %v671, %v671
    %v928 = vmul.f32 %v672, %v672
    %v929 = vmul.f32 %v673, %v673
    %v930 = vmul.f32 %v674, %v674
    %v931 = vmul.f32 %v675, %v675
    %v932 = vmul.f32 %v676, %v676
    %v933 = vmul.f32 %v677, %v677
    %v934 = vmul.f32 %v678, %v678
    %v935 = vmul.f32 %v679, %v679
    %v936 = vmul.f32 %v680, %v680
    %v937 = vmul.f32 %v681, %v681
    %v938 = vmul.f32 %v682, %v682
    %v939 = vmul.f32 %v683, %v683
    %v940 = vmul.f32 %v684, %v684
    %v941 = vmul.f32 %v685, %v685
    %v942 = vmul.f32 %v686, %v686
    %943 = vadd.xlane.f32.xlu0 %v879
    %v944 = vpop.xlane.xlu0 %943
    %945 = vadd.xlane.f32.xlu0 %v880
    %v946 = vpop.xlane.xlu0 %945
    %947 = vadd.xlane.f32.xlu0 %v881
    %v948 = vpop.xlane.xlu0 %947
    %949 = vadd.xlane.f32.xlu0 %v882
    %v950 = vpop.xlane.xlu0 %949
    %951 = vadd.xlane.f32.xlu0 %v883
    %v952 = vpop.xlane.xlu0 %951
    %953 = vadd.xlane.f32.xlu0 %v884
    %v954 = vpop.xlane.xlu0 %953
    %955 = vadd.xlane.f32.xlu0 %v885
    %v956 = vpop.xlane.xlu0 %955
    %957 = vadd.xlane.f32.xlu0 %v886
    %v958 = vpop.xlane.xlu0 %957
    %959 = vadd.xlane.f32.xlu0 %v887
    %v960 = vpop.xlane.xlu0 %959
    %961 = vadd.xlane.f32.xlu0 %v888
    %v962 = vpop.xlane.xlu0 %961
    %963 = vadd.xlane.f32.xlu0 %v889
    %v964 = vpop.xlane.xlu0 %963
    %965 = vadd.xlane.f32.xlu0 %v890
    %v966 = vpop.xlane.xlu0 %965
    %967 = vadd.xlane.f32.xlu0 %v891
    %v968 = vpop.xlane.xlu0 %967
    %969 = vadd.xlane.f32.xlu0 %v892
    %v970 = vpop.xlane.xlu0 %969
    %971 = vadd.xlane.f32.xlu0 %v893
    %v972 = vpop.xlane.xlu0 %971
    %973 = vadd.xlane.f32.xlu0 %v894
    %v974 = vpop.xlane.xlu0 %973
    %975 = vadd.xlane.f32.xlu0 %v895
    %v976 = vpop.xlane.xlu0 %975
    %977 = vadd.xlane.f32.xlu0 %v896
    %v978 = vpop.xlane.xlu0 %977
    %979 = vadd.xlane.f32.xlu0 %v897
    %v980 = vpop.xlane.xlu0 %979
    %981 = vadd.xlane.f32.xlu0 %v898
    %v982 = vpop.xlane.xlu0 %981
    %983 = vadd.xlane.f32.xlu0 %v899
    %v984 = vpop.xlane.xlu0 %983
    %985 = vadd.xlane.f32.xlu0 %v900
    %v986 = vpop.xlane.xlu0 %985
    %987 = vadd.xlane.f32.xlu0 %v901
    %v988 = vpop.xlane.xlu0 %987
    %989 = vadd.xlane.f32.xlu0 %v902
    %v990 = vpop.xlane.xlu0 %989
    %991 = vadd.xlane.f32.xlu0 %v903
    %v992 = vpop.xlane.xlu0 %991
    %993 = vadd.xlane.f32.xlu0 %v904
    %v994 = vpop.xlane.xlu0 %993
    %995 = vadd.xlane.f32.xlu0 %v905
    %v996 = vpop.xlane.xlu0 %995
    %997 = vadd.xlane.f32.xlu0 %v906
    %v998 = vpop.xlane.xlu0 %997
    %999 = vadd.xlane.f32.xlu0 %v907
    %v1000 = vpop.xlane.xlu0 %999
    %1001 = vadd.xlane.f32.xlu0 %v908
    %v1002 = vpop.xlane.xlu0 %1001
    %1003 = vadd.xlane.f32.xlu0 %v909
    %v1004 = vpop.xlane.xlu0 %1003
    %1005 = vadd.xlane.f32.xlu0 %v910
    %v1006 = vpop.xlane.xlu0 %1005
    %1007 = vadd.xlane.f32.xlu0 %v911
    %v1008 = vpop.xlane.xlu0 %1007
    %1009 = vadd.xlane.f32.xlu0 %v912
    %v1010 = vpop.xlane.xlu0 %1009
    %1011 = vadd.xlane.f32.xlu0 %v913
    %v1012 = vpop.xlane.xlu0 %1011
    %1013 = vadd.xlane.f32.xlu0 %v914
    %v1014 = vpop.xlane.xlu0 %1013
    %1015 = vadd.xlane.f32.xlu0 %v915
    %v1016 = vpop.xlane.xlu0 %1015
    %1017 = vadd.xlane.f32.xlu0 %v916
    %v1018 = vpop.xlane.xlu0 %1017
    %1019 = vadd.xlane.f32.xlu0 %v917
    %v1020 = vpop.xlane.xlu0 %1019
    %1021 = vadd.xlane.f32.xlu0 %v918
    %v1022 = vpop.xlane.xlu0 %1021
    %1023 = vadd.xlane.f32.xlu0 %v919
    %v1024 = vpop.xlane.xlu0 %1023
    %1025 = vadd.xlane.f32.xlu0 %v920
    %v1026 = vpop.xlane.xlu0 %1025
    %1027 = vadd.xlane.f32.xlu0 %v921
    %v1028 = vpop.xlane.xlu0 %1027
    %1029 = vadd.xlane.f32.xlu0 %v922
    %v1030 = vpop.xlane.xlu0 %1029
    %1031 = vadd.xlane.f32.xlu0 %v923
    %v1032 = vpop.xlane.xlu0 %1031
    %1033 = vadd.xlane.f32.xlu0 %v924
    %v1034 = vpop.xlane.xlu0 %1033
    %1035 = vadd.xlane.f32.xlu0 %v925
    %v1036 = vpop.xlane.xlu0 %1035
    %1037 = vadd.xlane.f32.xlu0 %v926
    %v1038 = vpop.xlane.xlu0 %1037
    %1039 = vadd.xlane.f32.xlu0 %v927
    %v1040 = vpop.xlane.xlu0 %1039
    %1041 = vadd.xlane.f32.xlu0 %v928
    %v1042 = vpop.xlane.xlu0 %1041
    %1043 = vadd.xlane.f32.xlu0 %v929
    %v1044 = vpop.xlane.xlu0 %1043
    %1045 = vadd.xlane.f32.xlu0 %v930
    %v1046 = vpop.xlane.xlu0 %1045
    %1047 = vadd.xlane.f32.xlu0 %v931
    %v1048 = vpop.xlane.xlu0 %1047
    %1049 = vadd.xlane.f32.xlu0 %v932
    %v1050 = vpop.xlane.xlu0 %1049
    %1051 = vadd.xlane.f32.xlu0 %v933
    %v1052 = vpop.xlane.xlu0 %1051
    %1053 = vadd.xlane.f32.xlu0 %v934
    %v1054 = vpop.xlane.xlu0 %1053
    %1055 = vadd.xlane.f32.xlu0 %v935
    %v1056 = vpop.xlane.xlu0 %1055
    %1057 = vadd.xlane.f32.xlu0 %v936
    %v1058 = vpop.xlane.xlu0 %1057
    %1059 = vadd.xlane.f32.xlu0 %v937
    %v1060 = vpop.xlane.xlu0 %1059
    %1061 = vadd.xlane.f32.xlu0 %v938
    %v1062 = vpop.xlane.xlu0 %1061
    %1063 = vadd.xlane.f32.xlu0 %v939
    %v1064 = vpop.xlane.xlu0 %1063
    %1065 = vadd.xlane.f32.xlu0 %v940
    %v1066 = vpop.xlane.xlu0 %1065
    %1067 = vadd.xlane.f32.xlu0 %v941
    %v1068 = vpop.xlane.xlu0 %1067
    %1069 = vadd.xlane.f32.xlu0 %v942
    %v1070 = vpop.xlane.xlu0 %1069
    %v1071 = vadd.f32 %v752, %v944
    %v1072 = vadd.f32 %v754, %v946
    %v1073 = vadd.f32 %v756, %v948
    %v1074 = vadd.f32 %v758, %v950
    %v1075 = vadd.f32 %v760, %v952
    %v1076 = vadd.f32 %v762, %v954
    %v1077 = vadd.f32 %v764, %v956
    %v1078 = vadd.f32 %v766, %v958
    %v1079 = vadd.f32 %v768, %v960
    %v1080 = vadd.f32 %v770, %v962
    %v1081 = vadd.f32 %v772, %v964
    %v1082 = vadd.f32 %v774, %v966
    %v1083 = vadd.f32 %v776, %v968
    %v1084 = vadd.f32 %v778, %v970
    %v1085 = vadd.f32 %v780, %v972
    %v1086 = vadd.f32 %v782, %v974
    %v1087 = vadd.f32 %v784, %v976
    %v1088 = vadd.f32 %v786, %v978
    %v1089 = vadd.f32 %v788, %v980
    %v1090 = vadd.f32 %v790, %v982
    %v1091 = vadd.f32 %v792, %v984
    %v1092 = vadd.f32 %v794, %v986
    %v1093 = vadd.f32 %v796, %v988
    %v1094 = vadd.f32 %v798, %v990
    %v1095 = vadd.f32 %v800, %v992
    %v1096 = vadd.f32 %v802, %v994
    %v1097 = vadd.f32 %v804, %v996
    %v1098 = vadd.f32 %v806, %v998
    %v1099 = vadd.f32 %v808, %v1000
    %v1100 = vadd.f32 %v810, %v1002
    %v1101 = vadd.f32 %v812, %v1004
    %v1102 = vadd.f32 %v814, %v1006
    %v1103 = vadd.f32 %v816, %v1008
    %v1104 = vadd.f32 %v818, %v1010
    %v1105 = vadd.f32 %v820, %v1012
    %v1106 = vadd.f32 %v822, %v1014
    %v1107 = vadd.f32 %v824, %v1016
    %v1108 = vadd.f32 %v826, %v1018
    %v1109 = vadd.f32 %v828, %v1020
    %v1110 = vadd.f32 %v830, %v1022
    %v1111 = vadd.f32 %v832, %v1024
    %v1112 = vadd.f32 %v834, %v1026
    %v1113 = vadd.f32 %v836, %v1028
    %v1114 = vadd.f32 %v838, %v1030
    %v1115 = vadd.f32 %v840, %v1032
    %v1116 = vadd.f32 %v842, %v1034
    %v1117 = vadd.f32 %v844, %v1036
    %v1118 = vadd.f32 %v846, %v1038
    %v1119 = vadd.f32 %v848, %v1040
    %v1120 = vadd.f32 %v850, %v1042
    %v1121 = vadd.f32 %v852, %v1044
    %v1122 = vadd.f32 %v854, %v1046
    %v1123 = vadd.f32 %v856, %v1048
    %v1124 = vadd.f32 %v858, %v1050
    %v1125 = vadd.f32 %v860, %v1052
    %v1126 = vadd.f32 %v862, %v1054
    %v1127 = vadd.f32 %v864, %v1056
    %v1128 = vadd.f32 %v866, %v1058
    %v1129 = vadd.f32 %v868, %v1060
    %v1130 = vadd.f32 %v870, %v1062
    %v1131 = vadd.f32 %v872, %v1064
    %v1132 = vadd.f32 %v874, %v1066
    %v1133 = vadd.f32 %v876, %v1068
    %v1134 = vadd.f32 %v878, %v1070
    %v1135 = vmul.f32 %v1071, 0.00390625
    %v1136 = vmul.f32 %v1072, 0.00390625
    %v1137 = vmul.f32 %v1073, 0.00390625
    %v1138 = vmul.f32 %v1074, 0.00390625
    %v1139 = vmul.f32 %v1075, 0.00390625
    %v1140 = vmul.f32 %v1076, 0.00390625
    %v1141 = vmul.f32 %v1077, 0.00390625
    %v1142 = vmul.f32 %v1078, 0.00390625
    %v1143 = vmul.f32 %v1079, 0.00390625
    %v1144 = vmul.f32 %v1080, 0.00390625
    %v1145 = vmul.f32 %v1081, 0.00390625
    %v1146 = vmul.f32 %v1082, 0.00390625
    %v1147 = vmul.f32 %v1083, 0.00390625
    %v1148 = vmul.f32 %v1084, 0.00390625
    %v1149 = vmul.f32 %v1085, 0.00390625
    %v1150 = vmul.f32 %v1086, 0.00390625
    %v1151 = vmul.f32 %v1087, 0.00390625
    %v1152 = vmul.f32 %v1088, 0.00390625
    %v1153 = vmul.f32 %v1089, 0.00390625
    %v1154 = vmul.f32 %v1090, 0.00390625
    %v1155 = vmul.f32 %v1091, 0.00390625
    %v1156 = vmul.f32 %v1092, 0.00390625
    %v1157 = vmul.f32 %v1093, 0.00390625
    %v1158 = vmul.f32 %v1094, 0.00390625
    %v1159 = vmul.f32 %v1095, 0.00390625
    %v1160 = vmul.f32 %v1096, 0.00390625
    %v1161 = vmul.f32 %v1097, 0.00390625
    %v1162 = vmul.f32 %v1098, 0.00390625
    %v1163 = vmul.f32 %v1099, 0.00390625
    %v1164 = vmul.f32 %v1100, 0.00390625
    %v1165 = vmul.f32 %v1101, 0.00390625
    %v1166 = vmul.f32 %v1102, 0.00390625
    %v1167 = vmul.f32 %v1103, 0.00390625
    %v1168 = vmul.f32 %v1104, 0.00390625
    %v1169 = vmul.f32 %v1105, 0.00390625
    %v1170 = vmul.f32 %v1106, 0.00390625
    %v1171 = vmul.f32 %v1107, 0.00390625
    %v1172 = vmul.f32 %v1108, 0.00390625
    %v1173 = vmul.f32 %v1109, 0.00390625
    %v1174 = vmul.f32 %v1110, 0.00390625
    %v1175 = vmul.f32 %v1111, 0.00390625
    %v1176 = vmul.f32 %v1112, 0.00390625
    %v1177 = vmul.f32 %v1113, 0.00390625
    %v1178 = vmul.f32 %v1114, 0.00390625
    %v1179 = vmul.f32 %v1115, 0.00390625
    %v1180 = vmul.f32 %v1116, 0.00390625
    %v1181 = vmul.f32 %v1117, 0.00390625
    %v1182 = vmul.f32 %v1118, 0.00390625
    %v1183 = vmul.f32 %v1119, 0.00390625
    %v1184 = vmul.f32 %v1120, 0.00390625
    %v1185 = vmul.f32 %v1121, 0.00390625
    %v1186 = vmul.f32 %v1122, 0.00390625
    %v1187 = vmul.f32 %v1123, 0.00390625
    %v1188 = vmul.f32 %v1124, 0.00390625
    %v1189 = vmul.f32 %v1125, 0.00390625
    %v1190 = vmul.f32 %v1126, 0.00390625
    %v1191 = vmul.f32 %v1127, 0.00390625
    %v1192 = vmul.f32 %v1128, 0.00390625
    %v1193 = vmul.f32 %v1129, 0.00390625
    %v1194 = vmul.f32 %v1130, 0.00390625
    %v1195 = vmul.f32 %v1131, 0.00390625
    %v1196 = vmul.f32 %v1132, 0.00390625
    %v1197 = vmul.f32 %v1133, 0.00390625
    %v1198 = vmul.f32 %v1134, 0.00390625
    %v1199 = vadd.f32 %v1135, 1e-05
    %v1200 = vadd.f32 %v1136, 1e-05
    %v1201 = vadd.f32 %v1137, 1e-05
    %v1202 = vadd.f32 %v1138, 1e-05
    %v1203 = vadd.f32 %v1139, 1e-05
    %v1204 = vadd.f32 %v1140, 1e-05
    %v1205 = vadd.f32 %v1141, 1e-05
    %v1206 = vadd.f32 %v1142, 1e-05
    %v1207 = vadd.f32 %v1143, 1e-05
    %v1208 = vadd.f32 %v1144, 1e-05
    %v1209 = vadd.f32 %v1145, 1e-05
    %v1210 = vadd.f32 %v1146, 1e-05
    %v1211 = vadd.f32 %v1147, 1e-05
    %v1212 = vadd.f32 %v1148, 1e-05
    %v1213 = vadd.f32 %v1149, 1e-05
    %v1214 = vadd.f32 %v1150, 1e-05
    %v1215 = vadd.f32 %v1151, 1e-05
    %v1216 = vadd.f32 %v1152, 1e-05
    %v1217 = vadd.f32 %v1153, 1e-05
    %v1218 = vadd.f32 %v1154, 1e-05
    %v1219 = vadd.f32 %v1155, 1e-05
    %v1220 = vadd.f32 %v1156, 1e-05
    %v1221 = vadd.f32 %v1157, 1e-05
    %v1222 = vadd.f32 %v1158, 1e-05
    %v1223 = vadd.f32 %v1159, 1e-05
    %v1224 = vadd.f32 %v1160, 1e-05
    %v1225 = vadd.f32 %v1161, 1e-05
    %v1226 = vadd.f32 %v1162, 1e-05
    %v1227 = vadd.f32 %v1163, 1e-05
    %v1228 = vadd.f32 %v1164, 1e-05
    %v1229 = vadd.f32 %v1165, 1e-05
    %v1230 = vadd.f32 %v1166, 1e-05
    %v1231 = vadd.f32 %v1167, 1e-05
    %v1232 = vadd.f32 %v1168, 1e-05
    %v1233 = vadd.f32 %v1169, 1e-05
    %v1234 = vadd.f32 %v1170, 1e-05
    %v1235 = vadd.f32 %v1171, 1e-05
    %v1236 = vadd.f32 %v1172, 1e-05
    %v1237 = vadd.f32 %v1173, 1e-05
    %v1238 = vadd.f32 %v1174, 1e-05
    %v1239 = vadd.f32 %v1175, 1e-05
    %v1240 = vadd.f32 %v1176, 1e-05
    %v1241 = vadd.f32 %v1177, 1e-05
    %v1242 = vadd.f32 %v1178, 1e-05
    %v1243 = vadd.f32 %v1179, 1e-05
    %v1244 = vadd.f32 %v1180, 1e-05
    %v1245 = vadd.f32 %v1181, 1e-05
    %v1246 = vadd.f32 %v1182, 1e-05
    %v1247 = vadd.f32 %v1183, 1e-05
    %v1248 = vadd.f32 %v1184, 1e-05
    %v1249 = vadd.f32 %v1185, 1e-05
    %v1250 = vadd.f32 %v1186, 1e-05
    %v1251 = vadd.f32 %v1187, 1e-05
    %v1252 = vadd.f32 %v1188, 1e-05
    %v1253 = vadd.f32 %v1189, 1e-05
    %v1254 = vadd.f32 %v1190, 1e-05
    %v1255 = vadd.f32 %v1191, 1e-05
    %v1256 = vadd.f32 %v1192, 1e-05
    %v1257 = vadd.f32 %v1193, 1e-05
    %v1258 = vadd.f32 %v1194, 1e-05
    %v1259 = vadd.f32 %v1195, 1e-05
    %v1260 = vadd.f32 %v1196, 1e-05
    %v1261 = vadd.f32 %v1197, 1e-05
    %v1262 = vadd.f32 %v1198, 1e-05
    %v1263 = vrsqrt.pop %v1199
    %v1264 = vmul.f32 %v1263, %v1199
    %v1265 = vmul.f32 %v1264, %v1263
    %v1266 = vmul.f32 0.5, %v1265
    %v1267 = vsub.f32 1.5, %v1266
    %v1268 = vmul.f32 %v1263, %v1267
    %vm1269 = vweird.f32 %v1199
    %vm1270 = vweird.f32 %v1263
    %vm1271 = vmor %vm1269, %vm1270
    %v1272 = vsel %vm1271, %v1263, %v1268
    %v1273 = vrsqrt.pop %v1200
    %v1274 = vmul.f32 %v1273, %v1200
    %v1275 = vmul.f32 %v1274, %v1273
    %v1276 = vmul.f32 0.5, %v1275
    %v1277 = vsub.f32 1.5, %v1276
    %v1278 = vmul.f32 %v1273, %v1277
    %vm1279 = vweird.f32 %v1200
    %vm1280 = vweird.f32 %v1273
    %vm1281 = vmor %vm1279, %vm1280
    %v1282 = vsel %vm1281, %v1273, %v1278
    %v1283 = vrsqrt.pop %v1201
    %v1284 = vmul.f32 %v1283, %v1201
    %v1285 = vmul.f32 %v1284, %v1283
    %v1286 = vmul.f32 0.5, %v1285
    %v1287 = vsub.f32 1.5, %v1286
    %v1288 = vmul.f32 %v1283, %v1287
    %vm1289 = vweird.f32 %v1201
    %vm1290 = vweird.f32 %v1283
    %vm1291 = vmor %vm1289, %vm1290
    %v1292 = vsel %vm1291, %v1283, %v1288
    %v1293 = vrsqrt.pop %v1202
    %v1294 = vmul.f32 %v1293, %v1202
    %v1295 = vmul.f32 %v1294, %v1293
    %v1296 = vmul.f32 0.5, %v1295
    %v1297 = vsub.f32 1.5, %v1296
    %v1298 = vmul.f32 %v1293, %v1297
    %vm1299 = vweird.f32 %v1202
    %vm1300 = vweird.f32 %v1293
    %vm1301 = vmor %vm1299, %vm1300
    %v1302 = vsel %vm1301, %v1293, %v1298
    %v1303 = vrsqrt.pop %v1203
    %v1304 = vmul.f32 %v1303, %v1203
    %v1305 = vmul.f32 %v1304, %v1303
    %v1306 = vmul.f32 0.5, %v1305
    %v1307 = vsub.f32 1.5, %v1306
    %v1308 = vmul.f32 %v1303, %v1307
    %vm1309 = vweird.f32 %v1203
    %vm1310 = vweird.f32 %v1303
    %vm1311 = vmor %vm1309, %vm1310
    %v1312 = vsel %vm1311, %v1303, %v1308
    %v1313 = vrsqrt.pop %v1204
    %v1314 = vmul.f32 %v1313, %v1204
    %v1315 = vmul.f32 %v1314, %v1313
    %v1316 = vmul.f32 0.5, %v1315
    %v1317 = vsub.f32 1.5, %v1316
    %v1318 = vmul.f32 %v1313, %v1317
    %vm1319 = vweird.f32 %v1204
    %vm1320 = vweird.f32 %v1313
    %vm1321 = vmor %vm1319, %vm1320
    %v1322 = vsel %vm1321, %v1313, %v1318
    %v1323 = vrsqrt.pop %v1205
    %v1324 = vmul.f32 %v1323, %v1205
    %v1325 = vmul.f32 %v1324, %v1323
    %v1326 = vmul.f32 0.5, %v1325
    %v1327 = vsub.f32 1.5, %v1326
    %v1328 = vmul.f32 %v1323, %v1327
    %vm1329 = vweird.f32 %v1205
    %vm1330 = vweird.f32 %v1323
    %vm1331 = vmor %vm1329, %vm1330
    %v1332 = vsel %vm1331, %v1323, %v1328
    %v1333 = vrsqrt.pop %v1206
    %v1334 = vmul.f32 %v1333, %v1206
    %v1335 = vmul.f32 %v1334, %v1333
    %v1336 = vmul.f32 0.5, %v1335
    %v1337 = vsub.f32 1.5, %v1336
    %v1338 = vmul.f32 %v1333, %v1337
    %vm1339 = vweird.f32 %v1206
    %vm1340 = vweird.f32 %v1333
    %vm1341 = vmor %vm1339, %vm1340
    %v1342 = vsel %vm1341, %v1333, %v1338
    %v1343 = vrsqrt.pop %v1207
    %v1344 = vmul.f32 %v1343, %v1207
    %v1345 = vmul.f32 %v1344, %v1343
    %v1346 = vmul.f32 0.5, %v1345
    %v1347 = vsub.f32 1.5, %v1346
    %v1348 = vmul.f32 %v1343, %v1347
    %vm1349 = vweird.f32 %v1207
    %vm1350 = vweird.f32 %v1343
    %vm1351 = vmor %vm1349, %vm1350
    %v1352 = vsel %vm1351, %v1343, %v1348
    %v1353 = vrsqrt.pop %v1208
    %v1354 = vmul.f32 %v1353, %v1208
    %v1355 = vmul.f32 %v1354, %v1353
    %v1356 = vmul.f32 0.5, %v1355
    %v1357 = vsub.f32 1.5, %v1356
    %v1358 = vmul.f32 %v1353, %v1357
    %vm1359 = vweird.f32 %v1208
    %vm1360 = vweird.f32 %v1353
    %vm1361 = vmor %vm1359, %vm1360
    %v1362 = vsel %vm1361, %v1353, %v1358
    %v1363 = vrsqrt.pop %v1209
    %v1364 = vmul.f32 %v1363, %v1209
    %v1365 = vmul.f32 %v1364, %v1363
    %v1366 = vmul.f32 0.5, %v1365
    %v1367 = vsub.f32 1.5, %v1366
    %v1368 = vmul.f32 %v1363, %v1367
    %vm1369 = vweird.f32 %v1209
    %vm1370 = vweird.f32 %v1363
    %vm1371 = vmor %vm1369, %vm1370
    %v1372 = vsel %vm1371, %v1363, %v1368
    %v1373 = vrsqrt.pop %v1210
    %v1374 = vmul.f32 %v1373, %v1210
    %v1375 = vmul.f32 %v1374, %v1373
    %v1376 = vmul.f32 0.5, %v1375
    %v1377 = vsub.f32 1.5, %v1376
    %v1378 = vmul.f32 %v1373, %v1377
    %vm1379 = vweird.f32 %v1210
    %vm1380 = vweird.f32 %v1373
    %vm1381 = vmor %vm1379, %vm1380
    %v1382 = vsel %vm1381, %v1373, %v1378
    %v1383 = vrsqrt.pop %v1211
    %v1384 = vmul.f32 %v1383, %v1211
    %v1385 = vmul.f32 %v1384, %v1383
    %v1386 = vmul.f32 0.5, %v1385
    %v1387 = vsub.f32 1.5, %v1386
    %v1388 = vmul.f32 %v1383, %v1387
    %vm1389 = vweird.f32 %v1211
    %vm1390 = vweird.f32 %v1383
    %vm1391 = vmor %vm1389, %vm1390
    %v1392 = vsel %vm1391, %v1383, %v1388
    %v1393 = vrsqrt.pop %v1212
    %v1394 = vmul.f32 %v1393, %v1212
    %v1395 = vmul.f32 %v1394, %v1393
    %v1396 = vmul.f32 0.5, %v1395
    %v1397 = vsub.f32 1.5, %v1396
    %v1398 = vmul.f32 %v1393, %v1397
    %vm1399 = vweird.f32 %v1212
    %vm1400 = vweird.f32 %v1393
    %vm1401 = vmor %vm1399, %vm1400
    %v1402 = vsel %vm1401, %v1393, %v1398
    %v1403 = vrsqrt.pop %v1213
    %v1404 = vmul.f32 %v1403, %v1213
    %v1405 = vmul.f32 %v1404, %v1403
    %v1406 = vmul.f32 0.5, %v1405
    %v1407 = vsub.f32 1.5, %v1406
    %v1408 = vmul.f32 %v1403, %v1407
    %vm1409 = vweird.f32 %v1213
    %vm1410 = vweird.f32 %v1403
    %vm1411 = vmor %vm1409, %vm1410
    %v1412 = vsel %vm1411, %v1403, %v1408
    %v1413 = vrsqrt.pop %v1214
    %v1414 = vmul.f32 %v1413, %v1214
    %v1415 = vmul.f32 %v1414, %v1413
    %v1416 = vmul.f32 0.5, %v1415
    %v1417 = vsub.f32 1.5, %v1416
    %v1418 = vmul.f32 %v1413, %v1417
    %vm1419 = vweird.f32 %v1214
    %vm1420 = vweird.f32 %v1413
    %vm1421 = vmor %vm1419, %vm1420
    %v1422 = vsel %vm1421, %v1413, %v1418
    %v1423 = vrsqrt.pop %v1215
    %v1424 = vmul.f32 %v1423, %v1215
    %v1425 = vmul.f32 %v1424, %v1423
    %v1426 = vmul.f32 0.5, %v1425
    %v1427 = vsub.f32 1.5, %v1426
    %v1428 = vmul.f32 %v1423, %v1427
    %vm1429 = vweird.f32 %v1215
    %vm1430 = vweird.f32 %v1423
    %vm1431 = vmor %vm1429, %vm1430
    %v1432 = vsel %vm1431, %v1423, %v1428
    %v1433 = vrsqrt.pop %v1216
    %v1434 = vmul.f32 %v1433, %v1216
    %v1435 = vmul.f32 %v1434, %v1433
    %v1436 = vmul.f32 0.5, %v1435
    %v1437 = vsub.f32 1.5, %v1436
    %v1438 = vmul.f32 %v1433, %v1437
    %vm1439 = vweird.f32 %v1216
    %vm1440 = vweird.f32 %v1433
    %vm1441 = vmor %vm1439, %vm1440
    %v1442 = vsel %vm1441, %v1433, %v1438
    %v1443 = vrsqrt.pop %v1217
    %v1444 = vmul.f32 %v1443, %v1217
    %v1445 = vmul.f32 %v1444, %v1443
    %v1446 = vmul.f32 0.5, %v1445
    %v1447 = vsub.f32 1.5, %v1446
    %v1448 = vmul.f32 %v1443, %v1447
    %vm1449 = vweird.f32 %v1217
    %vm1450 = vweird.f32 %v1443
    %vm1451 = vmor %vm1449, %vm1450
    %v1452 = vsel %vm1451, %v1443, %v1448
    %v1453 = vrsqrt.pop %v1218
    %v1454 = vmul.f32 %v1453, %v1218
    %v1455 = vmul.f32 %v1454, %v1453
    %v1456 = vmul.f32 0.5, %v1455
    %v1457 = vsub.f32 1.5, %v1456
    %v1458 = vmul.f32 %v1453, %v1457
    %vm1459 = vweird.f32 %v1218
    %vm1460 = vweird.f32 %v1453
    %vm1461 = vmor %vm1459, %vm1460
    %v1462 = vsel %vm1461, %v1453, %v1458
    %v1463 = vrsqrt.pop %v1219
    %v1464 = vmul.f32 %v1463, %v1219
    %v1465 = vmul.f32 %v1464, %v1463
    %v1466 = vmul.f32 0.5, %v1465
    %v1467 = vsub.f32 1.5, %v1466
    %v1468 = vmul.f32 %v1463, %v1467
    %vm1469 = vweird.f32 %v1219
    %vm1470 = vweird.f32 %v1463
    %vm1471 = vmor %vm1469, %vm1470
    %v1472 = vsel %vm1471, %v1463, %v1468
    %v1473 = vrsqrt.pop %v1220
    %v1474 = vmul.f32 %v1473, %v1220
    %v1475 = vmul.f32 %v1474, %v1473
    %v1476 = vmul.f32 0.5, %v1475
    %v1477 = vsub.f32 1.5, %v1476
    %v1478 = vmul.f32 %v1473, %v1477
    %vm1479 = vweird.f32 %v1220
    %vm1480 = vweird.f32 %v1473
    %vm1481 = vmor %vm1479, %vm1480
    %v1482 = vsel %vm1481, %v1473, %v1478
    %v1483 = vrsqrt.pop %v1221
    %v1484 = vmul.f32 %v1483, %v1221
    %v1485 = vmul.f32 %v1484, %v1483
    %v1486 = vmul.f32 0.5, %v1485
    %v1487 = vsub.f32 1.5, %v1486
    %v1488 = vmul.f32 %v1483, %v1487
    %vm1489 = vweird.f32 %v1221
    %vm1490 = vweird.f32 %v1483
    %vm1491 = vmor %vm1489, %vm1490
    %v1492 = vsel %vm1491, %v1483, %v1488
    %v1493 = vrsqrt.pop %v1222
    %v1494 = vmul.f32 %v1493, %v1222
    %v1495 = vmul.f32 %v1494, %v1493
    %v1496 = vmul.f32 0.5, %v1495
    %v1497 = vsub.f32 1.5, %v1496
    %v1498 = vmul.f32 %v1493, %v1497
    %vm1499 = vweird.f32 %v1222
    %vm1500 = vweird.f32 %v1493
    %vm1501 = vmor %vm1499, %vm1500
    %v1502 = vsel %vm1501, %v1493, %v1498
    %v1503 = vrsqrt.pop %v1223
    %v1504 = vmul.f32 %v1503, %v1223
    %v1505 = vmul.f32 %v1504, %v1503
    %v1506 = vmul.f32 0.5, %v1505
    %v1507 = vsub.f32 1.5, %v1506
    %v1508 = vmul.f32 %v1503, %v1507
    %vm1509 = vweird.f32 %v1223
    %vm1510 = vweird.f32 %v1503
    %vm1511 = vmor %vm1509, %vm1510
    %v1512 = vsel %vm1511, %v1503, %v1508
    %v1513 = vrsqrt.pop %v1224
    %v1514 = vmul.f32 %v1513, %v1224
    %v1515 = vmul.f32 %v1514, %v1513
    %v1516 = vmul.f32 0.5, %v1515
    %v1517 = vsub.f32 1.5, %v1516
    %v1518 = vmul.f32 %v1513, %v1517
    %vm1519 = vweird.f32 %v1224
    %vm1520 = vweird.f32 %v1513
    %vm1521 = vmor %vm1519, %vm1520
    %v1522 = vsel %vm1521, %v1513, %v1518
    %v1523 = vrsqrt.pop %v1225
    %v1524 = vmul.f32 %v1523, %v1225
    %v1525 = vmul.f32 %v1524, %v1523
    %v1526 = vmul.f32 0.5, %v1525
    %v1527 = vsub.f32 1.5, %v1526
    %v1528 = vmul.f32 %v1523, %v1527
    %vm1529 = vweird.f32 %v1225
    %vm1530 = vweird.f32 %v1523
    %vm1531 = vmor %vm1529, %vm1530
    %v1532 = vsel %vm1531, %v1523, %v1528
    %v1533 = vrsqrt.pop %v1226
    %v1534 = vmul.f32 %v1533, %v1226
    %v1535 = vmul.f32 %v1534, %v1533
    %v1536 = vmul.f32 0.5, %v1535
    %v1537 = vsub.f32 1.5, %v1536
    %v1538 = vmul.f32 %v1533, %v1537
    %vm1539 = vweird.f32 %v1226
    %vm1540 = vweird.f32 %v1533
    %vm1541 = vmor %vm1539, %vm1540
    %v1542 = vsel %vm1541, %v1533, %v1538
    %v1543 = vrsqrt.pop %v1227
    %v1544 = vmul.f32 %v1543, %v1227
    %v1545 = vmul.f32 %v1544, %v1543
    %v1546 = vmul.f32 0.5, %v1545
    %v1547 = vsub.f32 1.5, %v1546
    %v1548 = vmul.f32 %v1543, %v1547
    %vm1549 = vweird.f32 %v1227
    %vm1550 = vweird.f32 %v1543
    %vm1551 = vmor %vm1549, %vm1550
    %v1552 = vsel %vm1551, %v1543, %v1548
    %v1553 = vrsqrt.pop %v1228
    %v1554 = vmul.f32 %v1553, %v1228
    %v1555 = vmul.f32 %v1554, %v1553
    %v1556 = vmul.f32 0.5, %v1555
    %v1557 = vsub.f32 1.5, %v1556
    %v1558 = vmul.f32 %v1553, %v1557
    %vm1559 = vweird.f32 %v1228
    %vm1560 = vweird.f32 %v1553
    %vm1561 = vmor %vm1559, %vm1560
    %v1562 = vsel %vm1561, %v1553, %v1558
    %v1563 = vrsqrt.pop %v1229
    %v1564 = vmul.f32 %v1563, %v1229
    %v1565 = vmul.f32 %v1564, %v1563
    %v1566 = vmul.f32 0.5, %v1565
    %v1567 = vsub.f32 1.5, %v1566
    %v1568 = vmul.f32 %v1563, %v1567
    %vm1569 = vweird.f32 %v1229
    %vm1570 = vweird.f32 %v1563
    %vm1571 = vmor %vm1569, %vm1570
    %v1572 = vsel %vm1571, %v1563, %v1568
    %v1573 = vrsqrt.pop %v1230
    %v1574 = vmul.f32 %v1573, %v1230
    %v1575 = vmul.f32 %v1574, %v1573
    %v1576 = vmul.f32 0.5, %v1575
    %v1577 = vsub.f32 1.5, %v1576
    %v1578 = vmul.f32 %v1573, %v1577
    %vm1579 = vweird.f32 %v1230
    %vm1580 = vweird.f32 %v1573
    %vm1581 = vmor %vm1579, %vm1580
    %v1582 = vsel %vm1581, %v1573, %v1578
    %v1583 = vrsqrt.pop %v1231
    %v1584 = vmul.f32 %v1583, %v1231
    %v1585 = vmul.f32 %v1584, %v1583
    %v1586 = vmul.f32 0.5, %v1585
    %v1587 = vsub.f32 1.5, %v1586
    %v1588 = vmul.f32 %v1583, %v1587
    %vm1589 = vweird.f32 %v1231
    %vm1590 = vweird.f32 %v1583
    %vm1591 = vmor %vm1589, %vm1590
    %v1592 = vsel %vm1591, %v1583, %v1588
    %v1593 = vrsqrt.pop %v1232
    %v1594 = vmul.f32 %v1593, %v1232
    %v1595 = vmul.f32 %v1594, %v1593
    %v1596 = vmul.f32 0.5, %v1595
    %v1597 = vsub.f32 1.5, %v1596
    %v1598 = vmul.f32 %v1593, %v1597
    %vm1599 = vweird.f32 %v1232
    %vm1600 = vweird.f32 %v1593
    %vm1601 = vmor %vm1599, %vm1600
    %v1602 = vsel %vm1601, %v1593, %v1598
    %v1603 = vrsqrt.pop %v1233
    %v1604 = vmul.f32 %v1603, %v1233
    %v1605 = vmul.f32 %v1604, %v1603
    %v1606 = vmul.f32 0.5, %v1605
    %v1607 = vsub.f32 1.5, %v1606
    %v1608 = vmul.f32 %v1603, %v1607
    %vm1609 = vweird.f32 %v1233
    %vm1610 = vweird.f32 %v1603
    %vm1611 = vmor %vm1609, %vm1610
    %v1612 = vsel %vm1611, %v1603, %v1608
    %v1613 = vrsqrt.pop %v1234
    %v1614 = vmul.f32 %v1613, %v1234
    %v1615 = vmul.f32 %v1614, %v1613
    %v1616 = vmul.f32 0.5, %v1615
    %v1617 = vsub.f32 1.5, %v1616
    %v1618 = vmul.f32 %v1613, %v1617
    %vm1619 = vweird.f32 %v1234
    %vm1620 = vweird.f32 %v1613
    %vm1621 = vmor %vm1619, %vm1620
    %v1622 = vsel %vm1621, %v1613, %v1618
    %v1623 = vrsqrt.pop %v1235
    %v1624 = vmul.f32 %v1623, %v1235
    %v1625 = vmul.f32 %v1624, %v1623
    %v1626 = vmul.f32 0.5, %v1625
    %v1627 = vsub.f32 1.5, %v1626
    %v1628 = vmul.f32 %v1623, %v1627
    %vm1629 = vweird.f32 %v1235
    %vm1630 = vweird.f32 %v1623
    %vm1631 = vmor %vm1629, %vm1630
    %v1632 = vsel %vm1631, %v1623, %v1628
    %v1633 = vrsqrt.pop %v1236
    %v1634 = vmul.f32 %v1633, %v1236
    %v1635 = vmul.f32 %v1634, %v1633
    %v1636 = vmul.f32 0.5, %v1635
    %v1637 = vsub.f32 1.5, %v1636
    %v1638 = vmul.f32 %v1633, %v1637
    %vm1639 = vweird.f32 %v1236
    %vm1640 = vweird.f32 %v1633
    %vm1641 = vmor %vm1639, %vm1640
    %v1642 = vsel %vm1641, %v1633, %v1638
    %v1643 = vrsqrt.pop %v1237
    %v1644 = vmul.f32 %v1643, %v1237
    %v1645 = vmul.f32 %v1644, %v1643
    %v1646 = vmul.f32 0.5, %v1645
    %v1647 = vsub.f32 1.5, %v1646
    %v1648 = vmul.f32 %v1643, %v1647
    %vm1649 = vweird.f32 %v1237
    %vm1650 = vweird.f32 %v1643
    %vm1651 = vmor %vm1649, %vm1650
    %v1652 = vsel %vm1651, %v1643, %v1648
    %v1653 = vrsqrt.pop %v1238
    %v1654 = vmul.f32 %v1653, %v1238
    %v1655 = vmul.f32 %v1654, %v1653
    %v1656 = vmul.f32 0.5, %v1655
    %v1657 = vsub.f32 1.5, %v1656
    %v1658 = vmul.f32 %v1653, %v1657
    %vm1659 = vweird.f32 %v1238
    %vm1660 = vweird.f32 %v1653
    %vm1661 = vmor %vm1659, %vm1660
    %v1662 = vsel %vm1661, %v1653, %v1658
    %v1663 = vrsqrt.pop %v1239
    %v1664 = vmul.f32 %v1663, %v1239
    %v1665 = vmul.f32 %v1664, %v1663
    %v1666 = vmul.f32 0.5, %v1665
    %v1667 = vsub.f32 1.5, %v1666
    %v1668 = vmul.f32 %v1663, %v1667
    %vm1669 = vweird.f32 %v1239
    %vm1670 = vweird.f32 %v1663
    %vm1671 = vmor %vm1669, %vm1670
    %v1672 = vsel %vm1671, %v1663, %v1668
    %v1673 = vrsqrt.pop %v1240
    %v1674 = vmul.f32 %v1673, %v1240
    %v1675 = vmul.f32 %v1674, %v1673
    %v1676 = vmul.f32 0.5, %v1675
    %v1677 = vsub.f32 1.5, %v1676
    %v1678 = vmul.f32 %v1673, %v1677
    %vm1679 = vweird.f32 %v1240
    %vm1680 = vweird.f32 %v1673
    %vm1681 = vmor %vm1679, %vm1680
    %v1682 = vsel %vm1681, %v1673, %v1678
    %v1683 = vrsqrt.pop %v1241
    %v1684 = vmul.f32 %v1683, %v1241
    %v1685 = vmul.f32 %v1684, %v1683
    %v1686 = vmul.f32 0.5, %v1685
    %v1687 = vsub.f32 1.5, %v1686
    %v1688 = vmul.f32 %v1683, %v1687
    %vm1689 = vweird.f32 %v1241
    %vm1690 = vweird.f32 %v1683
    %vm1691 = vmor %vm1689, %vm1690
    %v1692 = vsel %vm1691, %v1683, %v1688
    %v1693 = vrsqrt.pop %v1242
    %v1694 = vmul.f32 %v1693, %v1242
    %v1695 = vmul.f32 %v1694, %v1693
    %v1696 = vmul.f32 0.5, %v1695
    %v1697 = vsub.f32 1.5, %v1696
    %v1698 = vmul.f32 %v1693, %v1697
    %vm1699 = vweird.f32 %v1242
    %vm1700 = vweird.f32 %v1693
    %vm1701 = vmor %vm1699, %vm1700
    %v1702 = vsel %vm1701, %v1693, %v1698
    %v1703 = vrsqrt.pop %v1243
    %v1704 = vmul.f32 %v1703, %v1243
    %v1705 = vmul.f32 %v1704, %v1703
    %v1706 = vmul.f32 0.5, %v1705
    %v1707 = vsub.f32 1.5, %v1706
    %v1708 = vmul.f32 %v1703, %v1707
    %vm1709 = vweird.f32 %v1243
    %vm1710 = vweird.f32 %v1703
    %vm1711 = vmor %vm1709, %vm1710
    %v1712 = vsel %vm1711, %v1703, %v1708
    %v1713 = vrsqrt.pop %v1244
    %v1714 = vmul.f32 %v1713, %v1244
    %v1715 = vmul.f32 %v1714, %v1713
    %v1716 = vmul.f32 0.5, %v1715
    %v1717 = vsub.f32 1.5, %v1716
    %v1718 = vmul.f32 %v1713, %v1717
    %vm1719 = vweird.f32 %v1244
    %vm1720 = vweird.f32 %v1713
    %vm1721 = vmor %vm1719, %vm1720
    %v1722 = vsel %vm1721, %v1713, %v1718
    %v1723 = vrsqrt.pop %v1245
    %v1724 = vmul.f32 %v1723, %v1245
    %v1725 = vmul.f32 %v1724, %v1723
    %v1726 = vmul.f32 0.5, %v1725
    %v1727 = vsub.f32 1.5, %v1726
    %v1728 = vmul.f32 %v1723, %v1727
    %vm1729 = vweird.f32 %v1245
    %vm1730 = vweird.f32 %v1723
    %vm1731 = vmor %vm1729, %vm1730
    %v1732 = vsel %vm1731, %v1723, %v1728
    %v1733 = vrsqrt.pop %v1246
    %v1734 = vmul.f32 %v1733, %v1246
    %v1735 = vmul.f32 %v1734, %v1733
    %v1736 = vmul.f32 0.5, %v1735
    %v1737 = vsub.f32 1.5, %v1736
    %v1738 = vmul.f32 %v1733, %v1737
    %vm1739 = vweird.f32 %v1246
    %vm1740 = vweird.f32 %v1733
    %vm1741 = vmor %vm1739, %vm1740
    %v1742 = vsel %vm1741, %v1733, %v1738
    %v1743 = vrsqrt.pop %v1247
    %v1744 = vmul.f32 %v1743, %v1247
    %v1745 = vmul.f32 %v1744, %v1743
    %v1746 = vmul.f32 0.5, %v1745
    %v1747 = vsub.f32 1.5, %v1746
    %v1748 = vmul.f32 %v1743, %v1747
    %vm1749 = vweird.f32 %v1247
    %vm1750 = vweird.f32 %v1743
    %vm1751 = vmor %vm1749, %vm1750
    %v1752 = vsel %vm1751, %v1743, %v1748
    %v1753 = vrsqrt.pop %v1248
    %v1754 = vmul.f32 %v1753, %v1248
    %v1755 = vmul.f32 %v1754, %v1753
    %v1756 = vmul.f32 0.5, %v1755
    %v1757 = vsub.f32 1.5, %v1756
    %v1758 = vmul.f32 %v1753, %v1757
    %vm1759 = vweird.f32 %v1248
    %vm1760 = vweird.f32 %v1753
    %vm1761 = vmor %vm1759, %vm1760
    %v1762 = vsel %vm1761, %v1753, %v1758
    %v1763 = vrsqrt.pop %v1249
    %v1764 = vmul.f32 %v1763, %v1249
    %v1765 = vmul.f32 %v1764, %v1763
    %v1766 = vmul.f32 0.5, %v1765
    %v1767 = vsub.f32 1.5, %v1766
    %v1768 = vmul.f32 %v1763, %v1767
    %vm1769 = vweird.f32 %v1249
    %vm1770 = vweird.f32 %v1763
    %vm1771 = vmor %vm1769, %vm1770
    %v1772 = vsel %vm1771, %v1763, %v1768
    %v1773 = vrsqrt.pop %v1250
    %v1774 = vmul.f32 %v1773, %v1250
    %v1775 = vmul.f32 %v1774, %v1773
    %v1776 = vmul.f32 0.5, %v1775
    %v1777 = vsub.f32 1.5, %v1776
    %v1778 = vmul.f32 %v1773, %v1777
    %vm1779 = vweird.f32 %v1250
    %vm1780 = vweird.f32 %v1773
    %vm1781 = vmor %vm1779, %vm1780
    %v1782 = vsel %vm1781, %v1773, %v1778
    %v1783 = vrsqrt.pop %v1251
    %v1784 = vmul.f32 %v1783, %v1251
    %v1785 = vmul.f32 %v1784, %v1783
    %v1786 = vmul.f32 0.5, %v1785
    %v1787 = vsub.f32 1.5, %v1786
    %v1788 = vmul.f32 %v1783, %v1787
    %vm1789 = vweird.f32 %v1251
    %vm1790 = vweird.f32 %v1783
    %vm1791 = vmor %vm1789, %vm1790
    %v1792 = vsel %vm1791, %v1783, %v1788
    %v1793 = vrsqrt.pop %v1252
    %v1794 = vmul.f32 %v1793, %v1252
    %v1795 = vmul.f32 %v1794, %v1793
    %v1796 = vmul.f32 0.5, %v1795
    %v1797 = vsub.f32 1.5, %v1796
    %v1798 = vmul.f32 %v1793, %v1797
    %vm1799 = vweird.f32 %v1252
    %vm1800 = vweird.f32 %v1793
    %vm1801 = vmor %vm1799, %vm1800
    %v1802 = vsel %vm1801, %v1793, %v1798
    %v1803 = vrsqrt.pop %v1253
    %v1804 = vmul.f32 %v1803, %v1253
    %v1805 = vmul.f32 %v1804, %v1803
    %v1806 = vmul.f32 0.5, %v1805
    %v1807 = vsub.f32 1.5, %v1806
    %v1808 = vmul.f32 %v1803, %v1807
    %vm1809 = vweird.f32 %v1253
    %vm1810 = vweird.f32 %v1803
    %vm1811 = vmor %vm1809, %vm1810
    %v1812 = vsel %vm1811, %v1803, %v1808
    %v1813 = vrsqrt.pop %v1254
    %v1814 = vmul.f32 %v1813, %v1254
    %v1815 = vmul.f32 %v1814, %v1813
    %v1816 = vmul.f32 0.5, %v1815
    %v1817 = vsub.f32 1.5, %v1816
    %v1818 = vmul.f32 %v1813, %v1817
    %vm1819 = vweird.f32 %v1254
    %vm1820 = vweird.f32 %v1813
    %vm1821 = vmor %vm1819, %vm1820
    %v1822 = vsel %vm1821, %v1813, %v1818
    %v1823 = vrsqrt.pop %v1255
    %v1824 = vmul.f32 %v1823, %v1255
    %v1825 = vmul.f32 %v1824, %v1823
    %v1826 = vmul.f32 0.5, %v1825
    %v1827 = vsub.f32 1.5, %v1826
    %v1828 = vmul.f32 %v1823, %v1827
    %vm1829 = vweird.f32 %v1255
    %vm1830 = vweird.f32 %v1823
    %vm1831 = vmor %vm1829, %vm1830
    %v1832 = vsel %vm1831, %v1823, %v1828
    %v1833 = vrsqrt.pop %v1256
    %v1834 = vmul.f32 %v1833, %v1256
    %v1835 = vmul.f32 %v1834, %v1833
    %v1836 = vmul.f32 0.5, %v1835
    %v1837 = vsub.f32 1.5, %v1836
    %v1838 = vmul.f32 %v1833, %v1837
    %vm1839 = vweird.f32 %v1256
    %vm1840 = vweird.f32 %v1833
    %vm1841 = vmor %vm1839, %vm1840
    %v1842 = vsel %vm1841, %v1833, %v1838
    %v1843 = vrsqrt.pop %v1257
    %v1844 = vmul.f32 %v1843, %v1257
    %v1845 = vmul.f32 %v1844, %v1843
    %v1846 = vmul.f32 0.5, %v1845
    %v1847 = vsub.f32 1.5, %v1846
    %v1848 = vmul.f32 %v1843, %v1847
    %vm1849 = vweird.f32 %v1257
    %vm1850 = vweird.f32 %v1843
    %vm1851 = vmor %vm1849, %vm1850
    %v1852 = vsel %vm1851, %v1843, %v1848
    %v1853 = vrsqrt.pop %v1258
    %v1854 = vmul.f32 %v1853, %v1258
    %v1855 = vmul.f32 %v1854, %v1853
    %v1856 = vmul.f32 0.5, %v1855
    %v1857 = vsub.f32 1.5, %v1856
    %v1858 = vmul.f32 %v1853, %v1857
    %vm1859 = vweird.f32 %v1258
    %vm1860 = vweird.f32 %v1853
    %vm1861 = vmor %vm1859, %vm1860
    %v1862 = vsel %vm1861, %v1853, %v1858
    %v1863 = vrsqrt.pop %v1259
    %v1864 = vmul.f32 %v1863, %v1259
    %v1865 = vmul.f32 %v1864, %v1863
    %v1866 = vmul.f32 0.5, %v1865
    %v1867 = vsub.f32 1.5, %v1866
    %v1868 = vmul.f32 %v1863, %v1867
    %vm1869 = vweird.f32 %v1259
    %vm1870 = vweird.f32 %v1863
    %vm1871 = vmor %vm1869, %vm1870
    %v1872 = vsel %vm1871, %v1863, %v1868
    %v1873 = vrsqrt.pop %v1260
    %v1874 = vmul.f32 %v1873, %v1260
    %v1875 = vmul.f32 %v1874, %v1873
    %v1876 = vmul.f32 0.5, %v1875
    %v1877 = vsub.f32 1.5, %v1876
    %v1878 = vmul.f32 %v1873, %v1877
    %vm1879 = vweird.f32 %v1260
    %vm1880 = vweird.f32 %v1873
    %vm1881 = vmor %vm1879, %vm1880
    %v1882 = vsel %vm1881, %v1873, %v1878
    %v1883 = vrsqrt.pop %v1261
    %v1884 = vmul.f32 %v1883, %v1261
    %v1885 = vmul.f32 %v1884, %v1883
    %v1886 = vmul.f32 0.5, %v1885
    %v1887 = vsub.f32 1.5, %v1886
    %v1888 = vmul.f32 %v1883, %v1887
    %vm1889 = vweird.f32 %v1261
    %vm1890 = vweird.f32 %v1883
    %vm1891 = vmor %vm1889, %vm1890
    %v1892 = vsel %vm1891, %v1883, %v1888
    %v1893 = vrsqrt.pop %v1262
    %v1894 = vmul.f32 %v1893, %v1262
    %v1895 = vmul.f32 %v1894, %v1893
    %v1896 = vmul.f32 0.5, %v1895
    %v1897 = vsub.f32 1.5, %v1896
    %v1898 = vmul.f32 %v1893, %v1897
    %vm1899 = vweird.f32 %v1262
    %vm1900 = vweird.f32 %v1893
    %vm1901 = vmor %vm1899, %vm1900
    %v1902 = vsel %vm1901, %v1893, %v1898
    %v1903 = vmul.f32 %v559, %v1272
    %v1904 = vmul.f32 %v560, %v1282
    %v1905 = vmul.f32 %v561, %v1292
    %v1906 = vmul.f32 %v562, %v1302
    %v1907 = vmul.f32 %v563, %v1312
    %v1908 = vmul.f32 %v564, %v1322
    %v1909 = vmul.f32 %v565, %v1332
    %v1910 = vmul.f32 %v566, %v1342
    %v1911 = vmul.f32 %v567, %v1352
    %v1912 = vmul.f32 %v568, %v1362
    %v1913 = vmul.f32 %v569, %v1372
    %v1914 = vmul.f32 %v570, %v1382
    %v1915 = vmul.f32 %v571, %v1392
    %v1916 = vmul.f32 %v572, %v1402
    %v1917 = vmul.f32 %v573, %v1412
    %v1918 = vmul.f32 %v574, %v1422
    %v1919 = vmul.f32 %v575, %v1432
    %v1920 = vmul.f32 %v576, %v1442
    %v1921 = vmul.f32 %v577, %v1452
    %v1922 = vmul.f32 %v578, %v1462
    %v1923 = vmul.f32 %v579, %v1472
    %v1924 = vmul.f32 %v580, %v1482
    %v1925 = vmul.f32 %v581, %v1492
    %v1926 = vmul.f32 %v582, %v1502
    %v1927 = vmul.f32 %v583, %v1512
    %v1928 = vmul.f32 %v584, %v1522
    %v1929 = vmul.f32 %v585, %v1532
    %v1930 = vmul.f32 %v586, %v1542
    %v1931 = vmul.f32 %v587, %v1552
    %v1932 = vmul.f32 %v588, %v1562
    %v1933 = vmul.f32 %v589, %v1572
    %v1934 = vmul.f32 %v590, %v1582
    %v1935 = vmul.f32 %v591, %v1592
    %v1936 = vmul.f32 %v592, %v1602
    %v1937 = vmul.f32 %v593, %v1612
    %v1938 = vmul.f32 %v594, %v1622
    %v1939 = vmul.f32 %v595, %v1632
    %v1940 = vmul.f32 %v596, %v1642
    %v1941 = vmul.f32 %v597, %v1652
    %v1942 = vmul.f32 %v598, %v1662
    %v1943 = vmul.f32 %v599, %v1672
    %v1944 = vmul.f32 %v600, %v1682
    %v1945 = vmul.f32 %v601, %v1692
    %v1946 = vmul.f32 %v602, %v1702
    %v1947 = vmul.f32 %v603, %v1712
    %v1948 = vmul.f32 %v604, %v1722
    %v1949 = vmul.f32 %v605, %v1732
    %v1950 = vmul.f32 %v606, %v1742
    %v1951 = vmul.f32 %v607, %v1752
    %v1952 = vmul.f32 %v608, %v1762
    %v1953 = vmul.f32 %v609, %v1772
    %v1954 = vmul.f32 %v610, %v1782
    %v1955 = vmul.f32 %v611, %v1792
    %v1956 = vmul.f32 %v612, %v1802
    %v1957 = vmul.f32 %v613, %v1812
    %v1958 = vmul.f32 %v614, %v1822
    %v1959 = vmul.f32 %v615, %v1832
    %v1960 = vmul.f32 %v616, %v1842
    %v1961 = vmul.f32 %v617, %v1852
    %v1962 = vmul.f32 %v618, %v1862
    %v1963 = vmul.f32 %v619, %v1872
    %v1964 = vmul.f32 %v620, %v1882
    %v1965 = vmul.f32 %v621, %v1892
    %v1966 = vmul.f32 %v622, %v1902
    %v1967 = vpack.c.bf16 %v1903, %v1903
    %v1968 = vpack.c.bf16 %v1904, %v1904
    %v1969 = vpack.c.bf16 %v1905, %v1905
    %v1970 = vpack.c.bf16 %v1906, %v1906
    %v1971 = vpack.c.bf16 %v1907, %v1907
    %v1972 = vpack.c.bf16 %v1908, %v1908
    %v1973 = vpack.c.bf16 %v1909, %v1909
    %v1974 = vpack.c.bf16 %v1910, %v1910
    %v1975 = vpack.c.bf16 %v1911, %v1911
    %v1976 = vpack.c.bf16 %v1912, %v1912
    %v1977 = vpack.c.bf16 %v1913, %v1913
    %v1978 = vpack.c.bf16 %v1914, %v1914
    %v1979 = vpack.c.bf16 %v1915, %v1915
    %v1980 = vpack.c.bf16 %v1916, %v1916
    %v1981 = vpack.c.bf16 %v1917, %v1917
    %v1982 = vpack.c.bf16 %v1918, %v1918
    %v1983 = vpack.c.bf16 %v1919, %v1919
    %v1984 = vpack.c.bf16 %v1920, %v1920
    %v1985 = vpack.c.bf16 %v1921, %v1921
    %v1986 = vpack.c.bf16 %v1922, %v1922
    %v1987 = vpack.c.bf16 %v1923, %v1923
    %v1988 = vpack.c.bf16 %v1924, %v1924
    %v1989 = vpack.c.bf16 %v1925, %v1925
    %v1990 = vpack.c.bf16 %v1926, %v1926
    %v1991 = vpack.c.bf16 %v1927, %v1927
    %v1992 = vpack.c.bf16 %v1928, %v1928
    %v1993 = vpack.c.bf16 %v1929, %v1929
    %v1994 = vpack.c.bf16 %v1930, %v1930
    %v1995 = vpack.c.bf16 %v1931, %v1931
    %v1996 = vpack.c.bf16 %v1932, %v1932
    %v1997 = vpack.c.bf16 %v1933, %v1933
    %v1998 = vpack.c.bf16 %v1934, %v1934
    %v1999 = vpack.c.bf16 %v1935, %v1935
    %v2000 = vpack.c.bf16 %v1936, %v1936
    %v2001 = vpack.c.bf16 %v1937, %v1937
    %v2002 = vpack.c.bf16 %v1938, %v1938
    %v2003 = vpack.c.bf16 %v1939, %v1939
    %v2004 = vpack.c.bf16 %v1940, %v1940
    %v2005 = vpack.c.bf16 %v1941, %v1941
    %v2006 = vpack.c.bf16 %v1942, %v1942
    %v2007 = vpack.c.bf16 %v1943, %v1943
    %v2008 = vpack.c.bf16 %v1944, %v1944
    %v2009 = vpack.c.bf16 %v1945, %v1945
    %v2010 = vpack.c.bf16 %v1946, %v1946
    %v2011 = vpack.c.bf16 %v1947, %v1947
    %v2012 = vpack.c.bf16 %v1948, %v1948
    %v2013 = vpack.c.bf16 %v1949, %v1949
    %v2014 = vpack.c.bf16 %v1950, %v1950
    %v2015 = vpack.c.bf16 %v1951, %v1951
    %v2016 = vpack.c.bf16 %v1952, %v1952
    %v2017 = vpack.c.bf16 %v1953, %v1953
    %v2018 = vpack.c.bf16 %v1954, %v1954
    %v2019 = vpack.c.bf16 %v1955, %v1955
    %v2020 = vpack.c.bf16 %v1956, %v1956
    %v2021 = vpack.c.bf16 %v1957, %v1957
    %v2022 = vpack.c.bf16 %v1958, %v1958
    %v2023 = vpack.c.bf16 %v1959, %v1959
    %v2024 = vpack.c.bf16 %v1960, %v1960
    %v2025 = vpack.c.bf16 %v1961, %v1961
    %v2026 = vpack.c.bf16 %v1962, %v1962
    %v2027 = vpack.c.bf16 %v1963, %v1963
    %v2028 = vpack.c.bf16 %v1964, %v1964
    %v2029 = vpack.c.bf16 %v1965, %v1965
    %v2030 = vpack.c.bf16 %v1966, %v1966
    %v2031 = vmul.f32 %v623, %v1272
    %v2032 = vmul.f32 %v624, %v1282
    %v2033 = vmul.f32 %v625, %v1292
    %v2034 = vmul.f32 %v626, %v1302
    %v2035 = vmul.f32 %v627, %v1312
    %v2036 = vmul.f32 %v628, %v1322
    %v2037 = vmul.f32 %v629, %v1332
    %v2038 = vmul.f32 %v630, %v1342
    %v2039 = vmul.f32 %v631, %v1352
    %v2040 = vmul.f32 %v632, %v1362
    %v2041 = vmul.f32 %v633, %v1372
    %v2042 = vmul.f32 %v634, %v1382
    %v2043 = vmul.f32 %v635, %v1392
    %v2044 = vmul.f32 %v636, %v1402
    %v2045 = vmul.f32 %v637, %v1412
    %v2046 = vmul.f32 %v638, %v1422
    %v2047 = vmul.f32 %v639, %v1432
    %v2048 = vmul.f32 %v640, %v1442
    %v2049 = vmul.f32 %v641, %v1452
    %v2050 = vmul.f32 %v642, %v1462
    %v2051 = vmul.f32 %v643, %v1472
    %v2052 = vmul.f32 %v644, %v1482
    %v2053 = vmul.f32 %v645, %v1492
    %v2054 = vmul.f32 %v646, %v1502
    %v2055 = vmul.f32 %v647, %v1512
    %v2056 = vmul.f32 %v648, %v1522
    %v2057 = vmul.f32 %v649, %v1532
    %v2058 = vmul.f32 %v650, %v1542
    %v2059 = vmul.f32 %v651, %v1552
    %v2060 = vmul.f32 %v652, %v1562
    %v2061 = vmul.f32 %v653, %v1572
    %v2062 = vmul.f32 %v654, %v1582
    %v2063 = vmul.f32 %v655, %v1592
    %v2064 = vmul.f32 %v656, %v1602
    %v2065 = vmul.f32 %v657, %v1612
    %v2066 = vmul.f32 %v658, %v1622
    %v2067 = vmul.f32 %v659, %v1632
    %v2068 = vmul.f32 %v660, %v1642
    %v2069 = vmul.f32 %v661, %v1652
    %v2070 = vmul.f32 %v662, %v1662
    %v2071 = vmul.f32 %v663, %v1672
    %v2072 = vmul.f32 %v664, %v1682
    %v2073 = vmul.f32 %v665, %v1692
    %v2074 = vmul.f32 %v666, %v1702
    %v2075 = vmul.f32 %v667, %v1712
    %v2076 = vmul.f32 %v668, %v1722
    %v2077 = vmul.f32 %v669, %v1732
    %v2078 = vmul.f32 %v670, %v1742
    %v2079 = vmul.f32 %v671, %v1752
    %v2080 = vmul.f32 %v672, %v1762
    %v2081 = vmul.f32 %v673, %v1772
    %v2082 = vmul.f32 %v674, %v1782
    %v2083 = vmul.f32 %v675, %v1792
    %v2084 = vmul.f32 %v676, %v1802
    %v2085 = vmul.f32 %v677, %v1812
    %v2086 = vmul.f32 %v678, %v1822
    %v2087 = vmul.f32 %v679, %v1832
    %v2088 = vmul.f32 %v680, %v1842
    %v2089 = vmul.f32 %v681, %v1852
    %v2090 = vmul.f32 %v682, %v1862
    %v2091 = vmul.f32 %v683, %v1872
    %v2092 = vmul.f32 %v684, %v1882
    %v2093 = vmul.f32 %v685, %v1892
    %v2094 = vmul.f32 %v686, %v1902
    %v2095 = vpack.c.bf16 %v2031, %v2031
    %v2096 = vpack.c.bf16 %v2032, %v2032
    %v2097 = vpack.c.bf16 %v2033, %v2033
    %v2098 = vpack.c.bf16 %v2034, %v2034
    %v2099 = vpack.c.bf16 %v2035, %v2035
    %v2100 = vpack.c.bf16 %v2036, %v2036
    %v2101 = vpack.c.bf16 %v2037, %v2037
    %v2102 = vpack.c.bf16 %v2038, %v2038
    %v2103 = vpack.c.bf16 %v2039, %v2039
    %v2104 = vpack.c.bf16 %v2040, %v2040
    %v2105 = vpack.c.bf16 %v2041, %v2041
    %v2106 = vpack.c.bf16 %v2042, %v2042
    %v2107 = vpack.c.bf16 %v2043, %v2043
    %v2108 = vpack.c.bf16 %v2044, %v2044
    %v2109 = vpack.c.bf16 %v2045, %v2045
    %v2110 = vpack.c.bf16 %v2046, %v2046
    %v2111 = vpack.c.bf16 %v2047, %v2047
    %v2112 = vpack.c.bf16 %v2048, %v2048
    %v2113 = vpack.c.bf16 %v2049, %v2049
    %v2114 = vpack.c.bf16 %v2050, %v2050
    %v2115 = vpack.c.bf16 %v2051, %v2051
    %v2116 = vpack.c.bf16 %v2052, %v2052
    %v2117 = vpack.c.bf16 %v2053, %v2053
    %v2118 = vpack.c.bf16 %v2054, %v2054
    %v2119 = vpack.c.bf16 %v2055, %v2055
    %v2120 = vpack.c.bf16 %v2056, %v2056
    %v2121 = vpack.c.bf16 %v2057, %v2057
    %v2122 = vpack.c.bf16 %v2058, %v2058
    %v2123 = vpack.c.bf16 %v2059, %v2059
    %v2124 = vpack.c.bf16 %v2060, %v2060
    %v2125 = vpack.c.bf16 %v2061, %v2061
    %v2126 = vpack.c.bf16 %v2062, %v2062
    %v2127 = vpack.c.bf16 %v2063, %v2063
    %v2128 = vpack.c.bf16 %v2064, %v2064
    %v2129 = vpack.c.bf16 %v2065, %v2065
    %v2130 = vpack.c.bf16 %v2066, %v2066
    %v2131 = vpack.c.bf16 %v2067, %v2067
    %v2132 = vpack.c.bf16 %v2068, %v2068
    %v2133 = vpack.c.bf16 %v2069, %v2069
    %v2134 = vpack.c.bf16 %v2070, %v2070
    %v2135 = vpack.c.bf16 %v2071, %v2071
    %v2136 = vpack.c.bf16 %v2072, %v2072
    %v2137 = vpack.c.bf16 %v2073, %v2073
    %v2138 = vpack.c.bf16 %v2074, %v2074
    %v2139 = vpack.c.bf16 %v2075, %v2075
    %v2140 = vpack.c.bf16 %v2076, %v2076
    %v2141 = vpack.c.bf16 %v2077, %v2077
    %v2142 = vpack.c.bf16 %v2078, %v2078
    %v2143 = vpack.c.bf16 %v2079, %v2079
    %v2144 = vpack.c.bf16 %v2080, %v2080
    %v2145 = vpack.c.bf16 %v2081, %v2081
    %v2146 = vpack.c.bf16 %v2082, %v2082
    %v2147 = vpack.c.bf16 %v2083, %v2083
    %v2148 = vpack.c.bf16 %v2084, %v2084
    %v2149 = vpack.c.bf16 %v2085, %v2085
    %v2150 = vpack.c.bf16 %v2086, %v2086
    %v2151 = vpack.c.bf16 %v2087, %v2087
    %v2152 = vpack.c.bf16 %v2088, %v2088
    %v2153 = vpack.c.bf16 %v2089, %v2089
    %v2154 = vpack.c.bf16 %v2090, %v2090
    %v2155 = vpack.c.bf16 %v2091, %v2091
    %v2156 = vpack.c.bf16 %v2092, %v2092
    %v2157 = vpack.c.bf16 %v2093, %v2093
    %v2158 = vpack.c.bf16 %v2094, %v2094
    %v2223 = vunpack.c.l.b16 %v1967
    %v2224 = vunpack.c.l.b16 %v1968
    %v2225 = vunpack.c.l.b16 %v1969
    %v2226 = vunpack.c.l.b16 %v1970
    %v2227 = vunpack.c.l.b16 %v1971
    %v2228 = vunpack.c.l.b16 %v1972
    %v2229 = vunpack.c.l.b16 %v1973
    %v2230 = vunpack.c.l.b16 %v1974
    %v2231 = vunpack.c.l.b16 %v1975
    %v2232 = vunpack.c.l.b16 %v1976
    %v2233 = vunpack.c.l.b16 %v1977
    %v2234 = vunpack.c.l.b16 %v1978
    %v2235 = vunpack.c.l.b16 %v1979
    %v2236 = vunpack.c.l.b16 %v1980
    %v2237 = vunpack.c.l.b16 %v1981
    %v2238 = vunpack.c.l.b16 %v1982
    %v2239 = vunpack.c.l.b16 %v1983
    %v2240 = vunpack.c.l.b16 %v1984
    %v2241 = vunpack.c.l.b16 %v1985
    %v2242 = vunpack.c.l.b16 %v1986
    %v2243 = vunpack.c.l.b16 %v1987
    %v2244 = vunpack.c.l.b16 %v1988
    %v2245 = vunpack.c.l.b16 %v1989
    %v2246 = vunpack.c.l.b16 %v1990
    %v2247 = vunpack.c.l.b16 %v1991
    %v2248 = vunpack.c.l.b16 %v1992
    %v2249 = vunpack.c.l.b16 %v1993
    %v2250 = vunpack.c.l.b16 %v1994
    %v2251 = vunpack.c.l.b16 %v1995
    %v2252 = vunpack.c.l.b16 %v1996
    %v2253 = vunpack.c.l.b16 %v1997
    %v2254 = vunpack.c.l.b16 %v1998
    %v2255 = vunpack.c.l.b16 %v1999
    %v2256 = vunpack.c.l.b16 %v2000
    %v2257 = vunpack.c.l.b16 %v2001
    %v2258 = vunpack.c.l.b16 %v2002
    %v2259 = vunpack.c.l.b16 %v2003
    %v2260 = vunpack.c.l.b16 %v2004
    %v2261 = vunpack.c.l.b16 %v2005
    %v2262 = vunpack.c.l.b16 %v2006
    %v2263 = vunpack.c.l.b16 %v2007
    %v2264 = vunpack.c.l.b16 %v2008
    %v2265 = vunpack.c.l.b16 %v2009
    %v2266 = vunpack.c.l.b16 %v2010
    %v2267 = vunpack.c.l.b16 %v2011
    %v2268 = vunpack.c.l.b16 %v2012
    %v2269 = vunpack.c.l.b16 %v2013
    %v2270 = vunpack.c.l.b16 %v2014
    %v2271 = vunpack.c.l.b16 %v2015
    %v2272 = vunpack.c.l.b16 %v2016
    %v2273 = vunpack.c.l.b16 %v2017
    %v2274 = vunpack.c.l.b16 %v2018
    %v2275 = vunpack.c.l.b16 %v2019
    %v2276 = vunpack.c.l.b16 %v2020
    %v2277 = vunpack.c.l.b16 %v2021
    %v2278 = vunpack.c.l.b16 %v2022
    %v2279 = vunpack.c.l.b16 %v2023
    %v2280 = vunpack.c.l.b16 %v2024
    %v2281 = vunpack.c.l.b16 %v2025
    %v2282 = vunpack.c.l.b16 %v2026
    %v2283 = vunpack.c.l.b16 %v2027
    %v2284 = vunpack.c.l.b16 %v2028
    %v2285 = vunpack.c.l.b16 %v2029
    %v2286 = vunpack.c.l.b16 %v2030
    %v2287 = vpack.c.b16 %v2224, %v2223
    %v2288 = vpack.c.b16 %v2226, %v2225
    %v2289 = vpack.c.b16 %v2228, %v2227
    %v2290 = vpack.c.b16 %v2230, %v2229
    %v2291 = vpack.c.b16 %v2232, %v2231
    %v2292 = vpack.c.b16 %v2234, %v2233
    %v2293 = vpack.c.b16 %v2236, %v2235
    %v2294 = vpack.c.b16 %v2238, %v2237
    %v2295 = vpack.c.b16 %v2240, %v2239
    %v2296 = vpack.c.b16 %v2242, %v2241
    %v2297 = vpack.c.b16 %v2244, %v2243
    %v2298 = vpack.c.b16 %v2246, %v2245
    %v2299 = vpack.c.b16 %v2248, %v2247
    %v2300 = vpack.c.b16 %v2250, %v2249
    %v2301 = vpack.c.b16 %v2252, %v2251
    %v2302 = vpack.c.b16 %v2254, %v2253
    %v2303 = vpack.c.b16 %v2256, %v2255
    %v2304 = vpack.c.b16 %v2258, %v2257
    %v2305 = vpack.c.b16 %v2260, %v2259
    %v2306 = vpack.c.b16 %v2262, %v2261
    %v2307 = vpack.c.b16 %v2264, %v2263
    %v2308 = vpack.c.b16 %v2266, %v2265
    %v2309 = vpack.c.b16 %v2268, %v2267
    %v2310 = vpack.c.b16 %v2270, %v2269
    %v2311 = vpack.c.b16 %v2272, %v2271
    %v2312 = vpack.c.b16 %v2274, %v2273
    %v2313 = vpack.c.b16 %v2276, %v2275
    %v2314 = vpack.c.b16 %v2278, %v2277
    %v2315 = vpack.c.b16 %v2280, %v2279
    %v2316 = vpack.c.b16 %v2282, %v2281
    %v2317 = vpack.c.b16 %v2284, %v2283
    %v2318 = vpack.c.b16 %v2286, %v2285
    %v2415 = vunpack.c.l.b16 %v2095
    %v2416 = vunpack.c.l.b16 %v2096
    %v2417 = vunpack.c.l.b16 %v2097
    %v2418 = vunpack.c.l.b16 %v2098
    %v2419 = vunpack.c.l.b16 %v2099
    %v2420 = vunpack.c.l.b16 %v2100
    %v2421 = vunpack.c.l.b16 %v2101
    %v2422 = vunpack.c.l.b16 %v2102
    %v2423 = vunpack.c.l.b16 %v2103
    %v2424 = vunpack.c.l.b16 %v2104
    %v2425 = vunpack.c.l.b16 %v2105
    %v2426 = vunpack.c.l.b16 %v2106
    %v2427 = vunpack.c.l.b16 %v2107
    %v2428 = vunpack.c.l.b16 %v2108
    %v2429 = vunpack.c.l.b16 %v2109
    %v2430 = vunpack.c.l.b16 %v2110
    %v2431 = vunpack.c.l.b16 %v2111
    %v2432 = vunpack.c.l.b16 %v2112
    %v2433 = vunpack.c.l.b16 %v2113
    %v2434 = vunpack.c.l.b16 %v2114
    %v2435 = vunpack.c.l.b16 %v2115
    %v2436 = vunpack.c.l.b16 %v2116
    %v2437 = vunpack.c.l.b16 %v2117
    %v2438 = vunpack.c.l.b16 %v2118
    %v2439 = vunpack.c.l.b16 %v2119
    %v2440 = vunpack.c.l.b16 %v2120
    %v2441 = vunpack.c.l.b16 %v2121
    %v2442 = vunpack.c.l.b16 %v2122
    %v2443 = vunpack.c.l.b16 %v2123
    %v2444 = vunpack.c.l.b16 %v2124
    %v2445 = vunpack.c.l.b16 %v2125
    %v2446 = vunpack.c.l.b16 %v2126
    %v2447 = vunpack.c.l.b16 %v2127
    %v2448 = vunpack.c.l.b16 %v2128
    %v2449 = vunpack.c.l.b16 %v2129
    %v2450 = vunpack.c.l.b16 %v2130
    %v2451 = vunpack.c.l.b16 %v2131
    %v2452 = vunpack.c.l.b16 %v2132
    %v2453 = vunpack.c.l.b16 %v2133
    %v2454 = vunpack.c.l.b16 %v2134
    %v2455 = vunpack.c.l.b16 %v2135
    %v2456 = vunpack.c.l.b16 %v2136
    %v2457 = vunpack.c.l.b16 %v2137
    %v2458 = vunpack.c.l.b16 %v2138
    %v2459 = vunpack.c.l.b16 %v2139
    %v2460 = vunpack.c.l.b16 %v2140
    %v2461 = vunpack.c.l.b16 %v2141
    %v2462 = vunpack.c.l.b16 %v2142
    %v2463 = vunpack.c.l.b16 %v2143
    %v2464 = vunpack.c.l.b16 %v2144
    %v2465 = vunpack.c.l.b16 %v2145
    %v2466 = vunpack.c.l.b16 %v2146
    %v2467 = vunpack.c.l.b16 %v2147
    %v2468 = vunpack.c.l.b16 %v2148
    %v2469 = vunpack.c.l.b16 %v2149
    %v2470 = vunpack.c.l.b16 %v2150
    %v2471 = vunpack.c.l.b16 %v2151
    %v2472 = vunpack.c.l.b16 %v2152
    %v2473 = vunpack.c.l.b16 %v2153
    %v2474 = vunpack.c.l.b16 %v2154
    %v2475 = vunpack.c.l.b16 %v2155
    %v2476 = vunpack.c.l.b16 %v2156
    %v2477 = vunpack.c.l.b16 %v2157
    %v2478 = vunpack.c.l.b16 %v2158
    %v2479 = vpack.c.b16 %v2416, %v2415
    %v2480 = vpack.c.b16 %v2418, %v2417
    %v2481 = vpack.c.b16 %v2420, %v2419
    %v2482 = vpack.c.b16 %v2422, %v2421
    %v2483 = vpack.c.b16 %v2424, %v2423
    %v2484 = vpack.c.b16 %v2426, %v2425
    %v2485 = vpack.c.b16 %v2428, %v2427
    %v2486 = vpack.c.b16 %v2430, %v2429
    %v2487 = vpack.c.b16 %v2432, %v2431
    %v2488 = vpack.c.b16 %v2434, %v2433
    %v2489 = vpack.c.b16 %v2436, %v2435
    %v2490 = vpack.c.b16 %v2438, %v2437
    %v2491 = vpack.c.b16 %v2440, %v2439
    %v2492 = vpack.c.b16 %v2442, %v2441
    %v2493 = vpack.c.b16 %v2444, %v2443
    %v2494 = vpack.c.b16 %v2446, %v2445
    %v2495 = vpack.c.b16 %v2448, %v2447
    %v2496 = vpack.c.b16 %v2450, %v2449
    %v2497 = vpack.c.b16 %v2452, %v2451
    %v2498 = vpack.c.b16 %v2454, %v2453
    %v2499 = vpack.c.b16 %v2456, %v2455
    %v2500 = vpack.c.b16 %v2458, %v2457
    %v2501 = vpack.c.b16 %v2460, %v2459
    %v2502 = vpack.c.b16 %v2462, %v2461
    %v2503 = vpack.c.b16 %v2464, %v2463
    %v2504 = vpack.c.b16 %v2466, %v2465
    %v2505 = vpack.c.b16 %v2468, %v2467
    %v2506 = vpack.c.b16 %v2470, %v2469
    %v2507 = vpack.c.b16 %v2472, %v2471
    %v2508 = vpack.c.b16 %v2474, %v2473
    %v2509 = vpack.c.b16 %v2476, %v2475
    %v2510 = vpack.c.b16 %v2478, %v2477
    %v2543 = vld [vmem:[#allocation5] sm:$0xf]
    %v2544 = vld [vmem:[#allocation5 + $0x4] sm:$0xf]
    %v2545 = vld [vmem:[#allocation5 + $0x8] sm:$0xf]
    %v2546 = vld [vmem:[#allocation5 + $0xc] sm:$0xf]
    %v2547 = vld [vmem:[#allocation5 + $0x10] sm:$0xf]
    %v2548 = vld [vmem:[#allocation5 + $0x14] sm:$0xf]
    %v2549 = vld [vmem:[#allocation5 + $0x18] sm:$0xf]
    %v2550 = vld [vmem:[#allocation5 + $0x1c] sm:$0xf]
    %v2551 = vld [vmem:[#allocation5 + $0x20] sm:$0xf]
    %v2552 = vld [vmem:[#allocation5 + $0x24] sm:$0xf]
    %v2553 = vld [vmem:[#allocation5 + $0x28] sm:$0xf]
    %v2554 = vld [vmem:[#allocation5 + $0x2c] sm:$0xf]
    %v2555 = vld [vmem:[#allocation5 + $0x30] sm:$0xf]
    %v2556 = vld [vmem:[#allocation5 + $0x34] sm:$0xf]
    %v2557 = vld [vmem:[#allocation5 + $0x38] sm:$0xf]
    %v2558 = vld [vmem:[#allocation5 + $0x3c] sm:$0xf]
    %v2559 = vld [vmem:[#allocation5 + $0x40] sm:$0xf]
    %v2560 = vld [vmem:[#allocation5 + $0x44] sm:$0xf]
    %v2561 = vld [vmem:[#allocation5 + $0x48] sm:$0xf]
    %v2562 = vld [vmem:[#allocation5 + $0x4c] sm:$0xf]
    %v2563 = vld [vmem:[#allocation5 + $0x50] sm:$0xf]
    %v2564 = vld [vmem:[#allocation5 + $0x54] sm:$0xf]
    %v2565 = vld [vmem:[#allocation5 + $0x58] sm:$0xf]
    %v2566 = vld [vmem:[#allocation5 + $0x5c] sm:$0xf]
    %v2567 = vld [vmem:[#allocation5 + $0x60] sm:$0xf]
    %v2568 = vld [vmem:[#allocation5 + $0x64] sm:$0xf]
    %v2569 = vld [vmem:[#allocation5 + $0x68] sm:$0xf]
    %v2570 = vld [vmem:[#allocation5 + $0x6c] sm:$0xf]
    %v2571 = vld [vmem:[#allocation5 + $0x70] sm:$0xf]
    %v2572 = vld [vmem:[#allocation5 + $0x74] sm:$0xf]
    %v2573 = vld [vmem:[#allocation5 + $0x78] sm:$0xf]
    %v2574 = vld [vmem:[#allocation5 + $0x7c] sm:$0xf]
    %v2575 = vld [vmem:[%s2] sm:$0x1]
    %v2577 = vperm.slane %v2575, 0
    %v2611 = vunpack.c.l.b16 %v2543
    %v2612 = vunpack.c.l.b16 %v2544
    %v2613 = vunpack.c.l.b16 %v2545
    %v2614 = vunpack.c.l.b16 %v2546
    %v2615 = vunpack.c.l.b16 %v2547
    %v2616 = vunpack.c.l.b16 %v2548
    %v2617 = vunpack.c.l.b16 %v2549
    %v2618 = vunpack.c.l.b16 %v2550
    %v2619 = vunpack.c.l.b16 %v2551
    %v2620 = vunpack.c.l.b16 %v2552
    %v2621 = vunpack.c.l.b16 %v2553
    %v2622 = vunpack.c.l.b16 %v2554
    %v2623 = vunpack.c.l.b16 %v2555
    %v2624 = vunpack.c.l.b16 %v2556
    %v2625 = vunpack.c.l.b16 %v2557
    %v2626 = vunpack.c.l.b16 %v2558
    %v2627 = vunpack.c.l.b16 %v2559
    %v2628 = vunpack.c.l.b16 %v2560
    %v2629 = vunpack.c.l.b16 %v2561
    %v2630 = vunpack.c.l.b16 %v2562
    %v2631 = vunpack.c.l.b16 %v2563
    %v2632 = vunpack.c.l.b16 %v2564
    %v2633 = vunpack.c.l.b16 %v2565
    %v2634 = vunpack.c.l.b16 %v2566
    %v2635 = vunpack.c.l.b16 %v2567
    %v2636 = vunpack.c.l.b16 %v2568
    %v2637 = vunpack.c.l.b16 %v2569
    %v2638 = vunpack.c.l.b16 %v2570
    %v2639 = vunpack.c.l.b16 %v2571
    %v2640 = vunpack.c.l.b16 %v2572
    %v2641 = vunpack.c.l.b16 %v2573
    %v2642 = vunpack.c.l.b16 %v2574
    %v2643 = vpack.c.b16 %v2612, %v2611
    %v2644 = vpack.c.b16 %v2614, %v2613
    %v2645 = vpack.c.b16 %v2616, %v2615
    %v2646 = vpack.c.b16 %v2618, %v2617
    %v2647 = vpack.c.b16 %v2620, %v2619
    %v2648 = vpack.c.b16 %v2622, %v2621
    %v2649 = vpack.c.b16 %v2624, %v2623
    %v2650 = vpack.c.b16 %v2626, %v2625
    %v2651 = vpack.c.b16 %v2628, %v2627
    %v2652 = vpack.c.b16 %v2630, %v2629
    %v2653 = vpack.c.b16 %v2632, %v2631
    %v2654 = vpack.c.b16 %v2634, %v2633
    %v2655 = vpack.c.b16 %v2636, %v2635
    %v2656 = vpack.c.b16 %v2638, %v2637
    %v2657 = vpack.c.b16 %v2640, %v2639
    %v2658 = vpack.c.b16 %v2642, %v2641
    %2675 = vmatpush.bf16.msra.mxu0 %v2650
    %2676 = vmatpush.bf16.msra.mxu0 %v2649
    %2677 = vmatpush.bf16.msra.mxu0 %v2648
    %2678 = vmatpush.bf16.msra.mxu0 %v2647
    %2679 = vmatpush.bf16.msra.mxu0 %v2646
    %2680 = vmatpush.bf16.msra.mxu0 %v2645
    %2681 = vmatpush.bf16.msra.mxu0 %v2644
    %2682 = vmatpush.bf16.msra.mxu0 %v2643
    %2683 = vmatmul.bf16.gmra.mxu0 %v2287
    %v2684 = vpop.f32.mrf.mxu0
    %v2685 = vadd.f32 %v2577, %v2684
    %v2686 = vpop.f32.mrf.mxu0
    %v2687 = vadd.f32 %v2577, %v2686
    %2688 = vmatmul.bf16.gmra.mxu0 %v2288
    %v2689 = vpop.f32.mrf.mxu0
    %v2690 = vadd.f32 %v2577, %v2689
    %v2691 = vpop.f32.mrf.mxu0
    %v2692 = vadd.f32 %v2577, %v2691
    %2693 = vmatmul.bf16.gmra.mxu0 %v2289
    %v2694 = vpop.f32.mrf.mxu0
    %v2695 = vadd.f32 %v2577, %v2694
    %v2696 = vpop.f32.mrf.mxu0
    %v2697 = vadd.f32 %v2577, %v2696
    %2698 = vmatmul.bf16.gmra.mxu0 %v2290
    %v2699 = vpop.f32.mrf.mxu0
    %v2700 = vadd.f32 %v2577, %v2699
    %v2701 = vpop.f32.mrf.mxu0
    %v2702 = vadd.f32 %v2577, %v2701
    %2703 = vmatmul.bf16.gmra.mxu0 %v2291
    %v2704 = vpop.f32.mrf.mxu0
    %v2705 = vadd.f32 %v2577, %v2704
    %v2706 = vpop.f32.mrf.mxu0
    %v2707 = vadd.f32 %v2577, %v2706
    %2708 = vmatmul.bf16.gmra.mxu0 %v2292
    %v2709 = vpop.f32.mrf.mxu0
    %v2710 = vadd.f32 %v2577, %v2709
    %v2711 = vpop.f32.mrf.mxu0
    %v2712 = vadd.f32 %v2577, %v2711
    %2713 = vmatmul.bf16.gmra.mxu0 %v2293
    %v2714 = vpop.f32.mrf.mxu0
    %v2715 = vadd.f32 %v2577, %v2714
    %v2716 = vpop.f32.mrf.mxu0
    %v2717 = vadd.f32 %v2577, %v2716
    %2718 = vmatmul.bf16.gmra.mxu0 %v2294
    %v2719 = vpop.f32.mrf.mxu0
    %v2720 = vadd.f32 %v2577, %v2719
    %v2721 = vpop.f32.mrf.mxu0
    %v2722 = vadd.f32 %v2577, %v2721
    %2723 = vmatmul.bf16.gmra.mxu0 %v2295
    %v2724 = vpop.f32.mrf.mxu0
    %v2725 = vadd.f32 %v2577, %v2724
    %v2726 = vpop.f32.mrf.mxu0
    %v2727 = vadd.f32 %v2577, %v2726
    %2728 = vmatmul.bf16.gmra.mxu0 %v2296
    %v2729 = vpop.f32.mrf.mxu0
    %v2730 = vadd.f32 %v2577, %v2729
    %v2731 = vpop.f32.mrf.mxu0
    %v2732 = vadd.f32 %v2577, %v2731
    %2733 = vmatmul.bf16.gmra.mxu0 %v2297
    %v2734 = vpop.f32.mrf.mxu0
    %v2735 = vadd.f32 %v2577, %v2734
    %v2736 = vpop.f32.mrf.mxu0
    %v2737 = vadd.f32 %v2577, %v2736
    %2738 = vmatmul.bf16.gmra.mxu0 %v2298
    %v2739 = vpop.f32.mrf.mxu0
    %v2740 = vadd.f32 %v2577, %v2739
    %v2741 = vpop.f32.mrf.mxu0
    %v2742 = vadd.f32 %v2577, %v2741
    %2743 = vmatmul.bf16.gmra.mxu0 %v2299
    %v2744 = vpop.f32.mrf.mxu0
    %v2745 = vadd.f32 %v2577, %v2744
    %v2746 = vpop.f32.mrf.mxu0
    %v2747 = vadd.f32 %v2577, %v2746
    %2748 = vmatmul.bf16.gmra.mxu0 %v2300
    %v2749 = vpop.f32.mrf.mxu0
    %v2750 = vadd.f32 %v2577, %v2749
    %v2751 = vpop.f32.mrf.mxu0
    %v2752 = vadd.f32 %v2577, %v2751
    %2753 = vmatmul.bf16.gmra.mxu0 %v2301
    %v2754 = vpop.f32.mrf.mxu0
    %v2755 = vadd.f32 %v2577, %v2754
    %v2756 = vpop.f32.mrf.mxu0
    %v2757 = vadd.f32 %v2577, %v2756
    %2758 = vmatmul.bf16.gmra.mxu0 %v2302
    %v2759 = vpop.f32.mrf.mxu0
    %v2760 = vadd.f32 %v2577, %v2759
    %v2761 = vpop.f32.mrf.mxu0
    %v2762 = vadd.f32 %v2577, %v2761
    %2763 = vmatmul.bf16.gmra.mxu0 %v2303
    %v2764 = vpop.f32.mrf.mxu0
    %v2765 = vadd.f32 %v2577, %v2764
    %v2766 = vpop.f32.mrf.mxu0
    %v2767 = vadd.f32 %v2577, %v2766
    %2768 = vmatmul.bf16.gmra.mxu0 %v2304
    %v2769 = vpop.f32.mrf.mxu0
    %v2770 = vadd.f32 %v2577, %v2769
    %v2771 = vpop.f32.mrf.mxu0
    %v2772 = vadd.f32 %v2577, %v2771
    %2773 = vmatmul.bf16.gmra.mxu0 %v2305
    %v2774 = vpop.f32.mrf.mxu0
    %v2775 = vadd.f32 %v2577, %v2774
    %v2776 = vpop.f32.mrf.mxu0
    %v2777 = vadd.f32 %v2577, %v2776
    %2778 = vmatmul.bf16.gmra.mxu0 %v2306
    %v2779 = vpop.f32.mrf.mxu0
    %v2780 = vadd.f32 %v2577, %v2779
    %v2781 = vpop.f32.mrf.mxu0
    %v2782 = vadd.f32 %v2577, %v2781
    %2783 = vmatmul.bf16.gmra.mxu0 %v2307
    %v2784 = vpop.f32.mrf.mxu0
    %v2785 = vadd.f32 %v2577, %v2784
    %v2786 = vpop.f32.mrf.mxu0
    %v2787 = vadd.f32 %v2577, %v2786
    %2788 = vmatmul.bf16.gmra.mxu0 %v2308
    %v2789 = vpop.f32.mrf.mxu0
    %v2790 = vadd.f32 %v2577, %v2789
    %v2791 = vpop.f32.mrf.mxu0
    %v2792 = vadd.f32 %v2577, %v2791
    %2793 = vmatmul.bf16.gmra.mxu0 %v2309
    %v2794 = vpop.f32.mrf.mxu0
    %v2795 = vadd.f32 %v2577, %v2794
    %v2796 = vpop.f32.mrf.mxu0
    %v2797 = vadd.f32 %v2577, %v2796
    %2798 = vmatmul.bf16.gmra.mxu0 %v2310
    %v2799 = vpop.f32.mrf.mxu0
    %v2800 = vadd.f32 %v2577, %v2799
    %v2801 = vpop.f32.mrf.mxu0
    %v2802 = vadd.f32 %v2577, %v2801
    %2803 = vmatmul.bf16.gmra.mxu0 %v2311
    %v2804 = vpop.f32.mrf.mxu0
    %v2805 = vadd.f32 %v2577, %v2804
    %v2806 = vpop.f32.mrf.mxu0
    %v2807 = vadd.f32 %v2577, %v2806
    %2808 = vmatmul.bf16.gmra.mxu0 %v2312
    %v2809 = vpop.f32.mrf.mxu0
    %v2810 = vadd.f32 %v2577, %v2809
    %v2811 = vpop.f32.mrf.mxu0
    %v2812 = vadd.f32 %v2577, %v2811
    %2813 = vmatmul.bf16.gmra.mxu0 %v2313
    %v2814 = vpop.f32.mrf.mxu0
    %v2815 = vadd.f32 %v2577, %v2814
    %v2816 = vpop.f32.mrf.mxu0
    %v2817 = vadd.f32 %v2577, %v2816
    %2818 = vmatmul.bf16.gmra.mxu0 %v2314
    %v2819 = vpop.f32.mrf.mxu0
    %v2820 = vadd.f32 %v2577, %v2819
    %v2821 = vpop.f32.mrf.mxu0
    %v2822 = vadd.f32 %v2577, %v2821
    %2823 = vmatmul.bf16.gmra.mxu0 %v2315
    %v2824 = vpop.f32.mrf.mxu0
    %v2825 = vadd.f32 %v2577, %v2824
    %v2826 = vpop.f32.mrf.mxu0
    %v2827 = vadd.f32 %v2577, %v2826
    %2828 = vmatmul.bf16.gmra.mxu0 %v2316
    %v2829 = vpop.f32.mrf.mxu0
    %v2830 = vadd.f32 %v2577, %v2829
    %v2831 = vpop.f32.mrf.mxu0
    %v2832 = vadd.f32 %v2577, %v2831
    %2833 = vmatmul.bf16.gmra.mxu0 %v2317
    %v2834 = vpop.f32.mrf.mxu0
    %v2835 = vadd.f32 %v2577, %v2834
    %v2836 = vpop.f32.mrf.mxu0
    %v2837 = vadd.f32 %v2577, %v2836
    %2838 = vmatmul.bf16.gmra.mxu0 %v2318
    %v2839 = vpop.f32.mrf.mxu0
    %v2840 = vadd.f32 %v2577, %v2839
    %v2841 = vpop.f32.mrf.mxu0
    %v2842 = vadd.f32 %v2577, %v2841
    %2843 = vdwg.mxu0
    %2844 = vmatpush.bf16.msra.mxu0 %v2658
    %2845 = vmatpush.bf16.msra.mxu0 %v2657
    %2846 = vmatpush.bf16.msra.mxu0 %v2656
    %2847 = vmatpush.bf16.msra.mxu0 %v2655
    %2848 = vmatpush.bf16.msra.mxu0 %v2654
    %2849 = vmatpush.bf16.msra.mxu0 %v2653
    %2850 = vmatpush.bf16.msra.mxu0 %v2652
    %2851 = vmatpush.bf16.msra.mxu0 %v2651
    %2852 = vmatmul.bf16.gmra.mxu0 %v2479
    %v2853 = vpop.f32.mrf.mxu0
    %v2854 = vadd.f32 %v2685, %v2853
    %v2855 = vpop.f32.mrf.mxu0
    %v2856 = vadd.f32 %v2687, %v2855
    %2857 = vmatmul.bf16.gmra.mxu0 %v2480
    %v2858 = vpop.f32.mrf.mxu0
    %v2859 = vadd.f32 %v2690, %v2858
    %v2860 = vpop.f32.mrf.mxu0
    %v2861 = vadd.f32 %v2692, %v2860
    %2862 = vmatmul.bf16.gmra.mxu0 %v2481
    %v2863 = vpop.f32.mrf.mxu0
    %v2864 = vadd.f32 %v2695, %v2863
    %v2865 = vpop.f32.mrf.mxu0
    %v2866 = vadd.f32 %v2697, %v2865
    %2867 = vmatmul.bf16.gmra.mxu0 %v2482
    %v2868 = vpop.f32.mrf.mxu0
    %v2869 = vadd.f32 %v2700, %v2868
    %v2870 = vpop.f32.mrf.mxu0
    %v2871 = vadd.f32 %v2702, %v2870
    %2872 = vmatmul.bf16.gmra.mxu0 %v2483
    %v2873 = vpop.f32.mrf.mxu0
    %v2874 = vadd.f32 %v2705, %v2873
    %v2875 = vpop.f32.mrf.mxu0
    %v2876 = vadd.f32 %v2707, %v2875
    %2877 = vmatmul.bf16.gmra.mxu0 %v2484
    %v2878 = vpop.f32.mrf.mxu0
    %v2879 = vadd.f32 %v2710, %v2878
    %v2880 = vpop.f32.mrf.mxu0
    %v2881 = vadd.f32 %v2712, %v2880
    %2882 = vmatmul.bf16.gmra.mxu0 %v2485
    %v2883 = vpop.f32.mrf.mxu0
    %v2884 = vadd.f32 %v2715, %v2883
    %v2885 = vpop.f32.mrf.mxu0
    %v2886 = vadd.f32 %v2717, %v2885
    %2887 = vmatmul.bf16.gmra.mxu0 %v2486
    %v2888 = vpop.f32.mrf.mxu0
    %v2889 = vadd.f32 %v2720, %v2888
    %v2890 = vpop.f32.mrf.mxu0
    %v2891 = vadd.f32 %v2722, %v2890
    %2892 = vmatmul.bf16.gmra.mxu0 %v2487
    %v2893 = vpop.f32.mrf.mxu0
    %v2894 = vadd.f32 %v2725, %v2893
    %v2895 = vpop.f32.mrf.mxu0
    %v2896 = vadd.f32 %v2727, %v2895
    %2897 = vmatmul.bf16.gmra.mxu0 %v2488
    %v2898 = vpop.f32.mrf.mxu0
    %v2899 = vadd.f32 %v2730, %v2898
    %v2900 = vpop.f32.mrf.mxu0
    %v2901 = vadd.f32 %v2732, %v2900
    %2902 = vmatmul.bf16.gmra.mxu0 %v2489
    %v2903 = vpop.f32.mrf.mxu0
    %v2904 = vadd.f32 %v2735, %v2903
    %v2905 = vpop.f32.mrf.mxu0
    %v2906 = vadd.f32 %v2737, %v2905
    %2907 = vmatmul.bf16.gmra.mxu0 %v2490
    %v2908 = vpop.f32.mrf.mxu0
    %v2909 = vadd.f32 %v2740, %v2908
    %v2910 = vpop.f32.mrf.mxu0
    %v2911 = vadd.f32 %v2742, %v2910
    %2912 = vmatmul.bf16.gmra.mxu0 %v2491
    %v2913 = vpop.f32.mrf.mxu0
    %v2914 = vadd.f32 %v2745, %v2913
    %v2915 = vpop.f32.mrf.mxu0
    %v2916 = vadd.f32 %v2747, %v2915
    %2917 = vmatmul.bf16.gmra.mxu0 %v2492
    %v2918 = vpop.f32.mrf.mxu0
    %v2919 = vadd.f32 %v2750, %v2918
    %v2920 = vpop.f32.mrf.mxu0
    %v2921 = vadd.f32 %v2752, %v2920
    %2922 = vmatmul.bf16.gmra.mxu0 %v2493
    %v2923 = vpop.f32.mrf.mxu0
    %v2924 = vadd.f32 %v2755, %v2923
    %v2925 = vpop.f32.mrf.mxu0
    %v2926 = vadd.f32 %v2757, %v2925
    %2927 = vmatmul.bf16.gmra.mxu0 %v2494
    %v2928 = vpop.f32.mrf.mxu0
    %v2929 = vadd.f32 %v2760, %v2928
    %v2930 = vpop.f32.mrf.mxu0
    %v2931 = vadd.f32 %v2762, %v2930
    %2932 = vmatmul.bf16.gmra.mxu0 %v2495
    %v2933 = vpop.f32.mrf.mxu0
    %v2934 = vadd.f32 %v2765, %v2933
    %v2935 = vpop.f32.mrf.mxu0
    %v2936 = vadd.f32 %v2767, %v2935
    %2937 = vmatmul.bf16.gmra.mxu0 %v2496
    %v2938 = vpop.f32.mrf.mxu0
    %v2939 = vadd.f32 %v2770, %v2938
    %v2940 = vpop.f32.mrf.mxu0
    %v2941 = vadd.f32 %v2772, %v2940
    %2942 = vmatmul.bf16.gmra.mxu0 %v2497
    %v2943 = vpop.f32.mrf.mxu0
    %v2944 = vadd.f32 %v2775, %v2943
    %v2945 = vpop.f32.mrf.mxu0
    %v2946 = vadd.f32 %v2777, %v2945
    %2947 = vmatmul.bf16.gmra.mxu0 %v2498
    %v2948 = vpop.f32.mrf.mxu0
    %v2949 = vadd.f32 %v2780, %v2948
    %v2950 = vpop.f32.mrf.mxu0
    %v2951 = vadd.f32 %v2782, %v2950
    %2952 = vmatmul.bf16.gmra.mxu0 %v2499
    %v2953 = vpop.f32.mrf.mxu0
    %v2954 = vadd.f32 %v2785, %v2953
    %v2955 = vpop.f32.mrf.mxu0
    %v2956 = vadd.f32 %v2787, %v2955
    %2957 = vmatmul.bf16.gmra.mxu0 %v2500
    %v2958 = vpop.f32.mrf.mxu0
    %v2959 = vadd.f32 %v2790, %v2958
    %v2960 = vpop.f32.mrf.mxu0
    %v2961 = vadd.f32 %v2792, %v2960
    %2962 = vmatmul.bf16.gmra.mxu0 %v2501
    %v2963 = vpop.f32.mrf.mxu0
    %v2964 = vadd.f32 %v2795, %v2963
    %v2965 = vpop.f32.mrf.mxu0
    %v2966 = vadd.f32 %v2797, %v2965
    %2967 = vmatmul.bf16.gmra.mxu0 %v2502
    %v2968 = vpop.f32.mrf.mxu0
    %v2969 = vadd.f32 %v2800, %v2968
    %v2970 = vpop.f32.mrf.mxu0
    %v2971 = vadd.f32 %v2802, %v2970
    %2972 = vmatmul.bf16.gmra.mxu0 %v2503
    %v2973 = vpop.f32.mrf.mxu0
    %v2974 = vadd.f32 %v2805, %v2973
    %v2975 = vpop.f32.mrf.mxu0
    %v2976 = vadd.f32 %v2807, %v2975
    %2977 = vmatmul.bf16.gmra.mxu0 %v2504
    %v2978 = vpop.f32.mrf.mxu0
    %v2979 = vadd.f32 %v2810, %v2978
    %v2980 = vpop.f32.mrf.mxu0
    %v2981 = vadd.f32 %v2812, %v2980
    %2982 = vmatmul.bf16.gmra.mxu0 %v2505
    %v2983 = vpop.f32.mrf.mxu0
    %v2984 = vadd.f32 %v2815, %v2983
    %v2985 = vpop.f32.mrf.mxu0
    %v2986 = vadd.f32 %v2817, %v2985
    %2987 = vmatmul.bf16.gmra.mxu0 %v2506
    %v2988 = vpop.f32.mrf.mxu0
    %v2989 = vadd.f32 %v2820, %v2988
    %v2990 = vpop.f32.mrf.mxu0
    %v2991 = vadd.f32 %v2822, %v2990
    %2992 = vmatmul.bf16.gmra.mxu0 %v2507
    %v2993 = vpop.f32.mrf.mxu0
    %v2994 = vadd.f32 %v2825, %v2993
    %v2995 = vpop.f32.mrf.mxu0
    %v2996 = vadd.f32 %v2827, %v2995
    %2997 = vmatmul.bf16.gmra.mxu0 %v2508
    %v2998 = vpop.f32.mrf.mxu0
    %v2999 = vadd.f32 %v2830, %v2998
    %v3000 = vpop.f32.mrf.mxu0
    %v3001 = vadd.f32 %v2832, %v3000
    %3002 = vmatmul.bf16.gmra.mxu0 %v2509
    %v3003 = vpop.f32.mrf.mxu0
    %v3004 = vadd.f32 %v2835, %v3003
    %v3005 = vpop.f32.mrf.mxu0
    %v3006 = vadd.f32 %v2837, %v3005
    %3007 = vmatmul.bf16.gmra.mxu0 %v2510
    %v3008 = vpop.f32.mrf.mxu0
    %v3009 = vadd.f32 %v2840, %v3008
    %v3010 = vpop.f32.mrf.mxu0
    %v3011 = vadd.f32 %v2842, %v3010
    %3012 = vdwg.mxu0
    %3013 = vst [vmem:[#allocation7] sm:$0xff] %v2854
    %3014 = vst [vmem:[#allocation7 + $0x8] sm:$0xff] %v2856
    %3015 = vst [vmem:[#allocation7 + $0x10] sm:$0xff] %v2859
    %3016 = vst [vmem:[#allocation7 + $0x18] sm:$0xff] %v2861
    %3017 = vst [vmem:[#allocation7 + $0x20] sm:$0xff] %v2864
    %3018 = vst [vmem:[#allocation7 + $0x28] sm:$0xff] %v2866
    %3019 = vst [vmem:[#allocation7 + $0x30] sm:$0xff] %v2869
    %3020 = vst [vmem:[#allocation7 + $0x38] sm:$0xff] %v2871
    %3021 = vst [vmem:[#allocation7 + $0x40] sm:$0xff] %v2874
    %3022 = vst [vmem:[#allocation7 + $0x48] sm:$0xff] %v2876
    %3023 = vst [vmem:[#allocation7 + $0x50] sm:$0xff] %v2879
    %3024 = vst [vmem:[#allocation7 + $0x58] sm:$0xff] %v2881
    %3025 = vst [vmem:[#allocation7 + $0x60] sm:$0xff] %v2884
    %3026 = vst [vmem:[#allocation7 + $0x68] sm:$0xff] %v2886
    %3027 = vst [vmem:[#allocation7 + $0x70] sm:$0xff] %v2889
    %3028 = vst [vmem:[#allocation7 + $0x78] sm:$0xff] %v2891
    %3029 = vst [vmem:[#allocation7 + $0x80] sm:$0xff] %v2894
    %3030 = vst [vmem:[#allocation7 + $0x88] sm:$0xff] %v2896
    %3031 = vst [vmem:[#allocation7 + $0x90] sm:$0xff] %v2899
    %3032 = vst [vmem:[#allocation7 + $0x98] sm:$0xff] %v2901
    %3033 = vst [vmem:[#allocation7 + $0xa0] sm:$0xff] %v2904
    %3034 = vst [vmem:[#allocation7 + $0xa8] sm:$0xff] %v2906
    %3035 = vst [vmem:[#allocation7 + $0xb0] sm:$0xff] %v2909
    %3036 = vst [vmem:[#allocation7 + $0xb8] sm:$0xff] %v2911
    %3037 = vst [vmem:[#allocation7 + $0xc0] sm:$0xff] %v2914
    %3038 = vst [vmem:[#allocation7 + $0xc8] sm:$0xff] %v2916
    %3039 = vst [vmem:[#allocation7 + $0xd0] sm:$0xff] %v2919
    %3040 = vst [vmem:[#allocation7 + $0xd8] sm:$0xff] %v2921
    %3041 = vst [vmem:[#allocation7 + $0xe0] sm:$0xff] %v2924
    %3042 = vst [vmem:[#allocation7 + $0xe8] sm:$0xff] %v2926
    %3043 = vst [vmem:[#allocation7 + $0xf0] sm:$0xff] %v2929
    %3044 = vst [vmem:[#allocation7 + $0xf8] sm:$0xff] %v2931
    %3045 = vst [vmem:[#allocation7 + $0x100] sm:$0xff] %v2934
    %3046 = vst [vmem:[#allocation7 + $0x108] sm:$0xff] %v2936
    %3047 = vst [vmem:[#allocation7 + $0x110] sm:$0xff] %v2939
    %3048 = vst [vmem:[#allocation7 + $0x118] sm:$0xff] %v2941
    %3049 = vst [vmem:[#allocation7 + $0x120] sm:$0xff] %v2944
    %3050 = vst [vmem:[#allocation7 + $0x128] sm:$0xff] %v2946
    %3051 = vst [vmem:[#allocation7 + $0x130] sm:$0xff] %v2949
    %3052 = vst [vmem:[#allocation7 + $0x138] sm:$0xff] %v2951
    %3053 = vst [vmem:[#allocation7 + $0x140] sm:$0xff] %v2954
    %3054 = vst [vmem:[#allocation7 + $0x148] sm:$0xff] %v2956
    %3055 = vst [vmem:[#allocation7 + $0x150] sm:$0xff] %v2959
    %3056 = vst [vmem:[#allocation7 + $0x158] sm:$0xff] %v2961
    %3057 = vst [vmem:[#allocation7 + $0x160] sm:$0xff] %v2964
    %3058 = vst [vmem:[#allocation7 + $0x168] sm:$0xff] %v2966
    %3059 = vst [vmem:[#allocation7 + $0x170] sm:$0xff] %v2969
    %3060 = vst [vmem:[#allocation7 + $0x178] sm:$0xff] %v2971
    %3061 = vst [vmem:[#allocation7 + $0x180] sm:$0xff] %v2974
    %3062 = vst [vmem:[#allocation7 + $0x188] sm:$0xff] %v2976
    %3063 = vst [vmem:[#allocation7 + $0x190] sm:$0xff] %v2979
    %3064 = vst [vmem:[#allocation7 + $0x198] sm:$0xff] %v2981
    %3065 = vst [vmem:[#allocation7 + $0x1a0] sm:$0xff] %v2984
    %3066 = vst [vmem:[#allocation7 + $0x1a8] sm:$0xff] %v2986
    %3067 = vst [vmem:[#allocation7 + $0x1b0] sm:$0xff] %v2989
    %3068 = vst [vmem:[#allocation7 + $0x1b8] sm:$0xff] %v2991
    %3069 = vst [vmem:[#allocation7 + $0x1c0] sm:$0xff] %v2994
    %3070 = vst [vmem:[#allocation7 + $0x1c8] sm:$0xff] %v2996
    %3071 = vst [vmem:[#allocation7 + $0x1d0] sm:$0xff] %v2999
    %3072 = vst [vmem:[#allocation7 + $0x1d8] sm:$0xff] %v3001
    %3073 = vst [vmem:[#allocation7 + $0x1e0] sm:$0xff] %v3004
    %3074 = vst [vmem:[#allocation7 + $0x1e8] sm:$0xff] %v3006
    %3075 = vst [vmem:[#allocation7 + $0x1f0] sm:$0xff] %v3009
    %3076 = vst [vmem:[#allocation7 + $0x1f8] sm:$0xff] %v3011
    // Predicated region
    $region22: #{tpu_custom_call.1} parent=1 // pred_check
      _
    $region23: #{tpu_custom_call.1} parent=1 // pred_check_branch
      %3078 = sbr.rel (0) target = $region25
    $region24: #{tpu_custom_call.1} parent=1 // pred_region
      %3080 = vsyncadd [#allocation4], 0
      %s3081 = sshll.u32 [#allocation7], 4
      %s3082 = int_to_ptr.vmem [resolvable:$true] %s3081
      %s3083 = sshll.u32 %s3, 4
      %s3084 = int_to_ptr.hbm [resolvable:$true] %s3083
      %3089 = dma.vmem_to_hbm [thread:$0]  %s3082, 8192, %s3084, [#allocation4], 128, 128, 8
    $region25: #{tpu_custom_call.1} parent=1 // pred_fallthru
      _
    // Predicated region
    $region26: #{tpu_custom_call.1} parent=1 // pred_check
      _
    $region27: #{tpu_custom_call.1} parent=1 // pred_check_branch
      %3091 = sbr.rel (0) target = $region29
    $region28: #{tpu_custom_call.1} parent=1 // pred_region
      %3093 = dma.done [#allocation4], 8192
    $region29: #{tpu_custom_call.1} parent=1 // pred_fallthru
      _
    %3094 = vsyncpa [#allocation3], 1
    %3095 = vsyncpa [#allocation6], 1
    %3096 = vsyncpa [#allocation4], 1

// kernel: tpu_custom_call.1
$region0: #{tpu_custom_call.1}
  #allocation0 [shape = 'u32[]', space=smem, size = 0x4, offset = 0x4, fixed_abs, tag = 'smem constant byte address 0x4 - core index']
  #allocation1 [shape = 'u32[72,128]{1,0:T(1,128)}', space=vmem, size = 0x9000, scoped, tag = 'internal scratch']
  %s0 = inlined_call_operand.hbm [shape: f32[32,2,16,128], index: 0, kind: input, shape index: {}]
  %s1 = inlined_call_operand.hbm [shape: bf16[256,128], index: 1, kind: input, shape index: {}]
  %s2 = inlined_call_operand.vmem [shape: f32[1,128], index: 2, kind: input, shape index: {}]
  %s3 = inlined_call_operand.hbm [shape: f32[512,128], index: 3, kind: output, shape index: {}]
  %s4 = sld [smem:[#allocation0]]
  $region30: #{tpu_custom_call.1} parent=0
    _
  %s6 = ssub.s32 1, %s4
  %s7 = scalar_select 0, %s6, %s4
  $region1: #{tpu_custom_call.1} parent=0
    #allocation2 [shape = 'u8[524288]{0}', space=vmem, size = 0x80000, scoped, tag = 'input window, operand 0, single buffered']
    #allocation3 [shape = 's32[1]{0}', space=sflag, size = 0x4, scoped, tag = 'scoped memory for tpu_custom_call.1']
    #allocation4 [shape = 's32[1]{0}', space=sflag, size = 0x4, scoped, tag = 'scoped memory for tpu_custom_call.1']
    #allocation5 [shape = 'u8[65536]{0}', space=vmem, size = 0x10000, scoped, tag = 'input window, operand 1, single buffered']
    #allocation6 [shape = 's32[1]{0}', space=sflag, size = 0x4, scoped, tag = 'scoped memory for tpu_custom_call.1']
    #allocation7 [shape = 'u8[262144]{0}', space=vmem, size = 0x40000, scoped, tag = 'output window, operand 0, single buffered']
    %8 = vsyncpa [#allocation3], 0
    %9 = vsyncpa [#allocation6], 0
    %10 = vsyncpa [#allocation4], 0
    // Predicated region
    $region2: #{tpu_custom_call.1} parent=1 // pred_check
      _
    $region3: #{tpu_custom_call.1} parent=1 // pred_check_branch
      %12 = sbr.rel (0) target = $region5
    $region4: #{tpu_custom_call.1} parent=1 // pred_region
      %14 = vsyncadd [#allocation3], 0
      %s15 = sshll.u32 %s0, 4
      %s16 = int_to_ptr.hbm [resolvable:$true] %s15
      %s17 = sshll.u32 [#allocation2], 4
      %s18 = int_to_ptr.vmem [resolvable:$true] %s17
      %23 = dma.hbm_to_vmem [thread:$0]  %s16, 16384, %s18, [#allocation3], 128, 128, 8
    $region5: #{tpu_custom_call.1} parent=1 // pred_fallthru
      _
    // Predicated region
    $region6: #{tpu_custom_call.1} parent=1 // pred_check
      _
    $region7: #{tpu_custom_call.1} parent=1 // pred_check_branch
      %25 = sbr.rel (0) target = $region9
    $region8: #{tpu_custom_call.1} parent=1 // pred_region
      %27 = vsyncadd [#allocation6], 0
      %s28 = sshll.u32 %s1, 4
      %s29 = int_to_ptr.hbm [resolvable:$true] %s28
      %s30 = sshll.u32 [#allocation5], 4
      %s31 = int_to_ptr.vmem [resolvable:$true] %s30
      %36 = dma.hbm_to_vmem [thread:$0]  %s29, 2048, %s31, [#allocation6], 64, 64, 4
    $region9: #{tpu_custom_call.1} parent=1 // pred_fallthru
      _
    // Predicated region
    $region10: #{tpu_custom_call.1} parent=1 // pred_check
      _
    $region11: #{tpu_custom_call.1} parent=1 // pred_check_branch
      %38 = sbr.rel (0) target = $region13
    $region12: #{tpu_custom_call.1} parent=1 // pred_region
      _
    $region13: #{tpu_custom_call.1} parent=1 // pred_fallthru
      _
    // Predicated region
    $region14: #{tpu_custom_call.1} parent=1 // pred_check
      _
    $region15: #{tpu_custom_call.1} parent=1 // pred_check_branch
      %40 = sbr.rel (0) target = $region17
    $region16: #{tpu_custom_call.1} parent=1 // pred_region
      %42 = dma.done [#allocation3], 16384
    $region17: #{tpu_custom_call.1} parent=1 // pred_fallthru
      _
    // Predicated region
    $region18: #{tpu_custom_call.1} parent=1 // pred_check
      _
    $region19: #{tpu_custom_call.1} parent=1 // pred_check_branch
      %44 = sbr.rel (0) target = $region21
    $region20: #{tpu_custom_call.1} parent=1 // pred_region
      %46 = dma.done [#allocation6], 2048
    $region21: #{tpu_custom_call.1} parent=1 // pred_fallthru
      _
    %v47 = vld [vmem:[#allocation2] sm:$0xff]
    %v48 = vld [vmem:[#allocation2 + $0x8] sm:$0xff]
    %v49 = vld [vmem:[#allocation2 + $0x10] sm:$0xff]
    %v50 = vld [vmem:[#allocation2 + $0x18] sm:$0xff]
    %v51 = vld [vmem:[#allocation2 + $0x20] sm:$0xff]
    %v52 = vld [vmem:[#allocation2 + $0x28] sm:$0xff]
    %v53 = vld [vmem:[#allocation2 + $0x30] sm:$0xff]
    %v54 = vld [vmem:[#allocation2 + $0x38] sm:$0xff]
    %v55 = vld [vmem:[#allocation2 + $0x40] sm:$0xff]
    %v56 = vld [vmem:[#allocation2 + $0x48] sm:$0xff]
    %v57 = vld [vmem:[#allocation2 + $0x50] sm:$0xff]
    %v58 = vld [vmem:[#allocation2 + $0x58] sm:$0xff]
    %v59 = vld [vmem:[#allocation2 + $0x60] sm:$0xff]
    %v60 = vld [vmem:[#allocation2 + $0x68] sm:$0xff]
    %v61 = vld [vmem:[#allocation2 + $0x70] sm:$0xff]
    %v62 = vld [vmem:[#allocation2 + $0x78] sm:$0xff]
    %v63 = vld [vmem:[#allocation2 + $0x80] sm:$0xff]
    %v64 = vld [vmem:[#allocation2 + $0x88] sm:$0xff]
    %v65 = vld [vmem:[#allocation2 + $0x90] sm:$0xff]
    %v66 = vld [vmem:[#allocation2 + $0x98] sm:$0xff]
    %v67 = vld [vmem:[#allocation2 + $0xa0] sm:$0xff]
    %v68 = vld [vmem:[#allocation2 + $0xa8] sm:$0xff]
    %v69 = vld [vmem:[#allocation2 + $0xb0] sm:$0xff]
    %v70 = vld [vmem:[#allocation2 + $0xb8] sm:$0xff]
    %v71 = vld [vmem:[#allocation2 + $0xc0] sm:$0xff]
    %v72 = vld [vmem:[#allocation2 + $0xc8] sm:$0xff]
    %v73 = vld [vmem:[#allocation2 + $0xd0] sm:$0xff]
    %v74 = vld [vmem:[#allocation2 + $0xd8] sm:$0xff]
    %v75 = vld [vmem:[#allocation2 + $0xe0] sm:$0xff]
    %v76 = vld [vmem:[#allocation2 + $0xe8] sm:$0xff]
    %v77 = vld [vmem:[#allocation2 + $0xf0] sm:$0xff]
    %v78 = vld [vmem:[#allocation2 + $0xf8] sm:$0xff]
    %v79 = vld [vmem:[#allocation2 + $0x100] sm:$0xff]
    %v80 = vld [vmem:[#allocation2 + $0x108] sm:$0xff]
    %v81 = vld [vmem:[#allocation2 + $0x110] sm:$0xff]
    %v82 = vld [vmem:[#allocation2 + $0x118] sm:$0xff]
    %v83 = vld [vmem:[#allocation2 + $0x120] sm:$0xff]
    %v84 = vld [vmem:[#allocation2 + $0x128] sm:$0xff]
    %v85 = vld [vmem:[#allocation2 + $0x130] sm:$0xff]
    %v86 = vld [vmem:[#allocation2 + $0x138] sm:$0xff]
    %v87 = vld [vmem:[#allocation2 + $0x140] sm:$0xff]
    %v88 = vld [vmem:[#allocation2 + $0x148] sm:$0xff]
    %v89 = vld [vmem:[#allocation2 + $0x150] sm:$0xff]
    %v90 = vld [vmem:[#allocation2 + $0x158] sm:$0xff]
    %v91 = vld [vmem:[#allocation2 + $0x160] sm:$0xff]
    %v92 = vld [vmem:[#allocation2 + $0x168] sm:$0xff]
    %v93 = vld [vmem:[#allocation2 + $0x170] sm:$0xff]
    %v94 = vld [vmem:[#allocation2 + $0x178] sm:$0xff]
    %v95 = vld [vmem:[#allocation2 + $0x180] sm:$0xff]
    %v96 = vld [vmem:[#allocation2 + $0x188] sm:$0xff]
    %v97 = vld [vmem:[#allocation2 + $0x190] sm:$0xff]
    %v98 = vld [vmem:[#allocation2 + $0x198] sm:$0xff]
    %v99 = vld [vmem:[#allocation2 + $0x1a0] sm:$0xff]
    %v100 = vld [vmem:[#allocation2 + $0x1a8] sm:$0xff]
    %v101 = vld [vmem:[#allocation2 + $0x1b0] sm:$0xff]
    %v102 = vld [vmem:[#allocation2 + $0x1b8] sm:$0xff]
    %v103 = vld [vmem:[#allocation2 + $0x1c0] sm:$0xff]
    %v104 = vld [vmem:[#allocation2 + $0x1c8] sm:$0xff]
    %v105 = vld [vmem:[#allocation2 + $0x1d0] sm:$0xff]
    %v106 = vld [vmem:[#allocation2 + $0x1d8] sm:$0xff]
    %v107 = vld [vmem:[#allocation2 + $0x1e0] sm:$0xff]
    %v108 = vld [vmem:[#allocation2 + $0x1e8] sm:$0xff]
    %v109 = vld [vmem:[#allocation2 + $0x1f0] sm:$0xff]
    %v110 = vld [vmem:[#allocation2 + $0x1f8] sm:$0xff]
    %v111 = vld [vmem:[#allocation2 + $0x200] sm:$0xff]
    %v112 = vld [vmem:[#allocation2 + $0x208] sm:$0xff]
    %v113 = vld [vmem:[#allocation2 + $0x210] sm:$0xff]
    %v114 = vld [vmem:[#allocation2 + $0x218] sm:$0xff]
    %v115 = vld [vmem:[#allocation2 + $0x220] sm:$0xff]
    %v116 = vld [vmem:[#allocation2 + $0x228] sm:$0xff]
    %v117 = vld [vmem:[#allocation2 + $0x230] sm:$0xff]
    %v118 = vld [vmem:[#allocation2 + $0x238] sm:$0xff]
    %v119 = vld [vmem:[#allocation2 + $0x240] sm:$0xff]
    %v120 = vld [vmem:[#allocation2 + $0x248] sm:$0xff]
    %v121 = vld [vmem:[#allocation2 + $0x250] sm:$0xff]
    %v122 = vld [vmem:[#allocation2 + $0x258] sm:$0xff]
    %v123 = vld [vmem:[#allocation2 + $0x260] sm:$0xff]
    %v124 = vld [vmem:[#allocation2 + $0x268] sm:$0xff]
    %v125 = vld [vmem:[#allocation2 + $0x270] sm:$0xff]
    %v126 = vld [vmem:[#allocation2 + $0x278] sm:$0xff]
    %v127 = vld [vmem:[#allocation2 + $0x280] sm:$0xff]
    %v128 = vld [vmem:[#allocation2 + $0x288] sm:$0xff]
    %v129 = vld [vmem:[#allocation2 + $0x290] sm:$0xff]
    %v130 = vld [vmem:[#allocation2 + $0x298] sm:$0xff]
    %v131 = vld [vmem:[#allocation2 + $0x2a0] sm:$0xff]
    %v132 = vld [vmem:[#allocation2 + $0x2a8] sm:$0xff]
    %v133 = vld [vmem:[#allocation2 + $0x2b0] sm:$0xff]
    %v134 = vld [vmem:[#allocation2 + $0x2b8] sm:$0xff]
    %v135 = vld [vmem:[#allocation2 + $0x2c0] sm:$0xff]
    %v136 = vld [vmem:[#allocation2 + $0x2c8] sm:$0xff]
    %v137 = vld [vmem:[#allocation2 + $0x2d0] sm:$0xff]
    %v138 = vld [vmem:[#allocation2 + $0x2d8] sm:$0xff]
    %v139 = vld [vmem:[#allocation2 + $0x2e0] sm:$0xff]
    %v140 = vld [vmem:[#allocation2 + $0x2e8] sm:$0xff]
    %v141 = vld [vmem:[#allocation2 + $0x2f0] sm:$0xff]
    %v142 = vld [vmem:[#allocation2 + $0x2f8] sm:$0xff]
    %v143 = vld [vmem:[#allocation2 + $0x300] sm:$0xff]
    %v144 = vld [vmem:[#allocation2 + $0x308] sm:$0xff]
    %v145 = vld [vmem:[#allocation2 + $0x310] sm:$0xff]
    %v146 = vld [vmem:[#allocation2 + $0x318] sm:$0xff]
    %v147 = vld [vmem:[#allocation2 + $0x320] sm:$0xff]
    %v148 = vld [vmem:[#allocation2 + $0x328] sm:$0xff]
    %v149 = vld [vmem:[#allocation2 + $0x330] sm:$0xff]
    %v150 = vld [vmem:[#allocation2 + $0x338] sm:$0xff]
    %v151 = vld [vmem:[#allocation2 + $0x340] sm:$0xff]
    %v152 = vld [vmem:[#allocation2 + $0x348] sm:$0xff]
    %v153 = vld [vmem:[#allocation2 + $0x350] sm:$0xff]
    %v154 = vld [vmem:[#allocation2 + $0x358] sm:$0xff]
    %v155 = vld [vmem:[#allocation2 + $0x360] sm:$0xff]
    %v156 = vld [vmem:[#allocation2 + $0x368] sm:$0xff]
    %v157 = vld [vmem:[#allocation2 + $0x370] sm:$0xff]
    %v158 = vld [vmem:[#allocation2 + $0x378] sm:$0xff]
    %v159 = vld [vmem:[#allocation2 + $0x380] sm:$0xff]
    %v160 = vld [vmem:[#allocation2 + $0x388] sm:$0xff]
    %v161 = vld [vmem:[#allocation2 + $0x390] sm:$0xff]
    %v162 = vld [vmem:[#allocation2 + $0x398] sm:$0xff]
    %v163 = vld [vmem:[#allocation2 + $0x3a0] sm:$0xff]
    %v164 = vld [vmem:[#allocation2 + $0x3a8] sm:$0xff]
    %v165 = vld [vmem:[#allocation2 + $0x3b0] sm:$0xff]
    %v166 = vld [vmem:[#allocation2 + $0x3b8] sm:$0xff]
    %v167 = vld [vmem:[#allocation2 + $0x3c0] sm:$0xff]
    %v168 = vld [vmem:[#allocation2 + $0x3c8] sm:$0xff]
    %v169 = vld [vmem:[#allocation2 + $0x3d0] sm:$0xff]
    %v170 = vld [vmem:[#allocation2 + $0x3d8] sm:$0xff]
    %v171 = vld [vmem:[#allocation2 + $0x3e0] sm:$0xff]
    %v172 = vld [vmem:[#allocation2 + $0x3e8] sm:$0xff]
    %v173 = vld [vmem:[#allocation2 + $0x3f0] sm:$0xff]
    %v174 = vld [vmem:[#allocation2 + $0x3f8] sm:$0xff]
    %175 = vadd.xlane.f32.xlu0 %v47
    %v176 = vpop.xlane.xlu0 %175
    %177 = vadd.xlane.f32.xlu0 %v48
    %v178 = vpop.xlane.xlu0 %177
    %179 = vadd.xlane.f32.xlu0 %v51
    %v180 = vpop.xlane.xlu0 %179
    %181 = vadd.xlane.f32.xlu0 %v52
    %v182 = vpop.xlane.xlu0 %181
    %183 = vadd.xlane.f32.xlu0 %v55
    %v184 = vpop.xlane.xlu0 %183
    %185 = vadd.xlane.f32.xlu0 %v56
    %v186 = vpop.xlane.xlu0 %185
    %187 = vadd.xlane.f32.xlu0 %v59
    %v188 = vpop.xlane.xlu0 %187
    %189 = vadd.xlane.f32.xlu0 %v60
    %v190 = vpop.xlane.xlu0 %189
    %191 = vadd.xlane.f32.xlu0 %v63
    %v192 = vpop.xlane.xlu0 %191
    %193 = vadd.xlane.f32.xlu0 %v64
    %v194 = vpop.xlane.xlu0 %193
    %195 = vadd.xlane.f32.xlu0 %v67
    %v196 = vpop.xlane.xlu0 %195
    %197 = vadd.xlane.f32.xlu0 %v68
    %v198 = vpop.xlane.xlu0 %197
    %199 = vadd.xlane.f32.xlu0 %v71
    %v200 = vpop.xlane.xlu0 %199
    %201 = vadd.xlane.f32.xlu0 %v72
    %v202 = vpop.xlane.xlu0 %201
    %203 = vadd.xlane.f32.xlu0 %v75
    %v204 = vpop.xlane.xlu0 %203
    %205 = vadd.xlane.f32.xlu0 %v76
    %v206 = vpop.xlane.xlu0 %205
    %207 = vadd.xlane.f32.xlu0 %v79
    %v208 = vpop.xlane.xlu0 %207
    %209 = vadd.xlane.f32.xlu0 %v80
    %v210 = vpop.xlane.xlu0 %209
    %211 = vadd.xlane.f32.xlu0 %v83
    %v212 = vpop.xlane.xlu0 %211
    %213 = vadd.xlane.f32.xlu0 %v84
    %v214 = vpop.xlane.xlu0 %213
    %215 = vadd.xlane.f32.xlu0 %v87
    %v216 = vpop.xlane.xlu0 %215
    %217 = vadd.xlane.f32.xlu0 %v88
    %v218 = vpop.xlane.xlu0 %217
    %219 = vadd.xlane.f32.xlu0 %v91
    %v220 = vpop.xlane.xlu0 %219
    %221 = vadd.xlane.f32.xlu0 %v92
    %v222 = vpop.xlane.xlu0 %221
    %223 = vadd.xlane.f32.xlu0 %v95
    %v224 = vpop.xlane.xlu0 %223
    %225 = vadd.xlane.f32.xlu0 %v96
    %v226 = vpop.xlane.xlu0 %225
    %227 = vadd.xlane.f32.xlu0 %v99
    %v228 = vpop.xlane.xlu0 %227
    %229 = vadd.xlane.f32.xlu0 %v100
    %v230 = vpop.xlane.xlu0 %229
    %231 = vadd.xlane.f32.xlu0 %v103
    %v232 = vpop.xlane.xlu0 %231
    %233 = vadd.xlane.f32.xlu0 %v104
    %v234 = vpop.xlane.xlu0 %233
    %235 = vadd.xlane.f32.xlu0 %v107
    %v236 = vpop.xlane.xlu0 %235
    %237 = vadd.xlane.f32.xlu0 %v108
    %v238 = vpop.xlane.xlu0 %237
    %239 = vadd.xlane.f32.xlu0 %v111
    %v240 = vpop.xlane.xlu0 %239
    %241 = vadd.xlane.f32.xlu0 %v112
    %v242 = vpop.xlane.xlu0 %241
    %243 = vadd.xlane.f32.xlu0 %v115
    %v244 = vpop.xlane.xlu0 %243
    %245 = vadd.xlane.f32.xlu0 %v116
    %v246 = vpop.xlane.xlu0 %245
    %247 = vadd.xlane.f32.xlu0 %v119
    %v248 = vpop.xlane.xlu0 %247
    %249 = vadd.xlane.f32.xlu0 %v120
    %v250 = vpop.xlane.xlu0 %249
    %251 = vadd.xlane.f32.xlu0 %v123
    %v252 = vpop.xlane.xlu0 %251
    %253 = vadd.xlane.f32.xlu0 %v124
    %v254 = vpop.xlane.xlu0 %253
    %255 = vadd.xlane.f32.xlu0 %v127
    %v256 = vpop.xlane.xlu0 %255
    %257 = vadd.xlane.f32.xlu0 %v128
    %v258 = vpop.xlane.xlu0 %257
    %259 = vadd.xlane.f32.xlu0 %v131
    %v260 = vpop.xlane.xlu0 %259
    %261 = vadd.xlane.f32.xlu0 %v132
    %v262 = vpop.xlane.xlu0 %261
    %263 = vadd.xlane.f32.xlu0 %v135
    %v264 = vpop.xlane.xlu0 %263
    %265 = vadd.xlane.f32.xlu0 %v136
    %v266 = vpop.xlane.xlu0 %265
    %267 = vadd.xlane.f32.xlu0 %v139
    %v268 = vpop.xlane.xlu0 %267
    %269 = vadd.xlane.f32.xlu0 %v140
    %v270 = vpop.xlane.xlu0 %269
    %271 = vadd.xlane.f32.xlu0 %v143
    %v272 = vpop.xlane.xlu0 %271
    %273 = vadd.xlane.f32.xlu0 %v144
    %v274 = vpop.xlane.xlu0 %273
    %275 = vadd.xlane.f32.xlu0 %v147
    %v276 = vpop.xlane.xlu0 %275
    %277 = vadd.xlane.f32.xlu0 %v148
    %v278 = vpop.xlane.xlu0 %277
    %279 = vadd.xlane.f32.xlu0 %v151
    %v280 = vpop.xlane.xlu0 %279
    %281 = vadd.xlane.f32.xlu0 %v152
    %v282 = vpop.xlane.xlu0 %281
    %283 = vadd.xlane.f32.xlu0 %v155
    %v284 = vpop.xlane.xlu0 %283
    %285 = vadd.xlane.f32.xlu0 %v156
    %v286 = vpop.xlane.xlu0 %285
    %287 = vadd.xlane.f32.xlu0 %v159
    %v288 = vpop.xlane.xlu0 %287
    %289 = vadd.xlane.f32.xlu0 %v160
    %v290 = vpop.xlane.xlu0 %289
    %291 = vadd.xlane.f32.xlu0 %v163
    %v292 = vpop.xlane.xlu0 %291
    %293 = vadd.xlane.f32.xlu0 %v164
    %v294 = vpop.xlane.xlu0 %293
    %295 = vadd.xlane.f32.xlu0 %v167
    %v296 = vpop.xlane.xlu0 %295
    %297 = vadd.xlane.f32.xlu0 %v168
    %v298 = vpop.xlane.xlu0 %297
    %299 = vadd.xlane.f32.xlu0 %v171
    %v300 = vpop.xlane.xlu0 %299
    %301 = vadd.xlane.f32.xlu0 %v172
    %v302 = vpop.xlane.xlu0 %301
    %303 = vadd.xlane.f32.xlu0 %v49
    %v304 = vpop.xlane.xlu0 %303
    %305 = vadd.xlane.f32.xlu0 %v50
    %v306 = vpop.xlane.xlu0 %305
    %307 = vadd.xlane.f32.xlu0 %v53
    %v308 = vpop.xlane.xlu0 %307
    %309 = vadd.xlane.f32.xlu0 %v54
    %v310 = vpop.xlane.xlu0 %309
    %311 = vadd.xlane.f32.xlu0 %v57
    %v312 = vpop.xlane.xlu0 %311
    %313 = vadd.xlane.f32.xlu0 %v58
    %v314 = vpop.xlane.xlu0 %313
    %315 = vadd.xlane.f32.xlu0 %v61
    %v316 = vpop.xlane.xlu0 %315
    %317 = vadd.xlane.f32.xlu0 %v62
    %v318 = vpop.xlane.xlu0 %317
    %319 = vadd.xlane.f32.xlu0 %v65
    %v320 = vpop.xlane.xlu0 %319
    %321 = vadd.xlane.f32.xlu0 %v66
    %v322 = vpop.xlane.xlu0 %321
    %323 = vadd.xlane.f32.xlu0 %v69
    %v324 = vpop.xlane.xlu0 %323
    %325 = vadd.xlane.f32.xlu0 %v70
    %v326 = vpop.xlane.xlu0 %325
    %327 = vadd.xlane.f32.xlu0 %v73
    %v328 = vpop.xlane.xlu0 %327
    %329 = vadd.xlane.f32.xlu0 %v74
    %v330 = vpop.xlane.xlu0 %329
    %331 = vadd.xlane.f32.xlu0 %v77
    %v332 = vpop.xlane.xlu0 %331
    %333 = vadd.xlane.f32.xlu0 %v78
    %v334 = vpop.xlane.xlu0 %333
    %335 = vadd.xlane.f32.xlu0 %v81
    %v336 = vpop.xlane.xlu0 %335
    %337 = vadd.xlane.f32.xlu0 %v82
    %v338 = vpop.xlane.xlu0 %337
    %339 = vadd.xlane.f32.xlu0 %v85
    %v340 = vpop.xlane.xlu0 %339
    %341 = vadd.xlane.f32.xlu0 %v86
    %v342 = vpop.xlane.xlu0 %341
    %343 = vadd.xlane.f32.xlu0 %v89
    %v344 = vpop.xlane.xlu0 %343
    %345 = vadd.xlane.f32.xlu0 %v90
    %v346 = vpop.xlane.xlu0 %345
    %347 = vadd.xlane.f32.xlu0 %v93
    %v348 = vpop.xlane.xlu0 %347
    %349 = vadd.xlane.f32.xlu0 %v94
    %v350 = vpop.xlane.xlu0 %349
    %351 = vadd.xlane.f32.xlu0 %v97
    %v352 = vpop.xlane.xlu0 %351
    %353 = vadd.xlane.f32.xlu0 %v98
    %v354 = vpop.xlane.xlu0 %353
    %355 = vadd.xlane.f32.xlu0 %v101
    %v356 = vpop.xlane.xlu0 %355
    %357 = vadd.xlane.f32.xlu0 %v102
    %v358 = vpop.xlane.xlu0 %357
    %359 = vadd.xlane.f32.xlu0 %v105
    %v360 = vpop.xlane.xlu0 %359
    %361 = vadd.xlane.f32.xlu0 %v106
    %v362 = vpop.xlane.xlu0 %361
    %363 = vadd.xlane.f32.xlu0 %v109
    %v364 = vpop.xlane.xlu0 %363
    %365 = vadd.xlane.f32.xlu0 %v110
    %v366 = vpop.xlane.xlu0 %365
    %367 = vadd.xlane.f32.xlu0 %v113
    %v368 = vpop.xlane.xlu0 %367
    %369 = vadd.xlane.f32.xlu0 %v114
    %v370 = vpop.xlane.xlu0 %369
    %371 = vadd.xlane.f32.xlu0 %v117
    %v372 = vpop.xlane.xlu0 %371
    %373 = vadd.xlane.f32.xlu0 %v118
    %v374 = vpop.xlane.xlu0 %373
    %375 = vadd.xlane.f32.xlu0 %v121
    %v376 = vpop.xlane.xlu0 %375
    %377 = vadd.xlane.f32.xlu0 %v122
    %v378 = vpop.xlane.xlu0 %377
    %379 = vadd.xlane.f32.xlu0 %v125
    %v380 = vpop.xlane.xlu0 %379
    %381 = vadd.xlane.f32.xlu0 %v126
    %v382 = vpop.xlane.xlu0 %381
    %383 = vadd.xlane.f32.xlu0 %v129
    %v384 = vpop.xlane.xlu0 %383
    %385 = vadd.xlane.f32.xlu0 %v130
    %v386 = vpop.xlane.xlu0 %385
    %387 = vadd.xlane.f32.xlu0 %v133
    %v388 = vpop.xlane.xlu0 %387
    %389 = vadd.xlane.f32.xlu0 %v134
    %v390 = vpop.xlane.xlu0 %389
    %391 = vadd.xlane.f32.xlu0 %v137
    %v392 = vpop.xlane.xlu0 %391
    %393 = vadd.xlane.f32.xlu0 %v138
    %v394 = vpop.xlane.xlu0 %393
    %395 = vadd.xlane.f32.xlu0 %v141
    %v396 = vpop.xlane.xlu0 %395
    %397 = vadd.xlane.f32.xlu0 %v142
    %v398 = vpop.xlane.xlu0 %397
    %399 = vadd.xlane.f32.xlu0 %v145
    %v400 = vpop.xlane.xlu0 %399
    %401 = vadd.xlane.f32.xlu0 %v146
    %v402 = vpop.xlane.xlu0 %401
    %403 = vadd.xlane.f32.xlu0 %v149
    %v404 = vpop.xlane.xlu0 %403
    %405 = vadd.xlane.f32.xlu0 %v150
    %v406 = vpop.xlane.xlu0 %405
    %407 = vadd.xlane.f32.xlu0 %v153
    %v408 = vpop.xlane.xlu0 %407
    %409 = vadd.xlane.f32.xlu0 %v154
    %v410 = vpop.xlane.xlu0 %409
    %411 = vadd.xlane.f32.xlu0 %v157
    %v412 = vpop.xlane.xlu0 %411
    %413 = vadd.xlane.f32.xlu0 %v158
    %v414 = vpop.xlane.xlu0 %413
    %415 = vadd.xlane.f32.xlu0 %v161
    %v416 = vpop.xlane.xlu0 %415
    %417 = vadd.xlane.f32.xlu0 %v162
    %v418 = vpop.xlane.xlu0 %417
    %419 = vadd.xlane.f32.xlu0 %v165
    %v420 = vpop.xlane.xlu0 %419
    %421 = vadd.xlane.f32.xlu0 %v166
    %v422 = vpop.xlane.xlu0 %421
    %423 = vadd.xlane.f32.xlu0 %v169
    %v424 = vpop.xlane.xlu0 %423
    %425 = vadd.xlane.f32.xlu0 %v170
    %v426 = vpop.xlane.xlu0 %425
    %427 = vadd.xlane.f32.xlu0 %v173
    %v428 = vpop.xlane.xlu0 %427
    %429 = vadd.xlane.f32.xlu0 %v174
    %v430 = vpop.xlane.xlu0 %429
    %v431 = vadd.f32 %v176, %v304
    %v432 = vadd.f32 %v178, %v306
    %v433 = vadd.f32 %v180, %v308
    %v434 = vadd.f32 %v182, %v310
    %v435 = vadd.f32 %v184, %v312
    %v436 = vadd.f32 %v186, %v314
    %v437 = vadd.f32 %v188, %v316
    %v438 = vadd.f32 %v190, %v318
    %v439 = vadd.f32 %v192, %v320
    %v440 = vadd.f32 %v194, %v322
    %v441 = vadd.f32 %v196, %v324
    %v442 = vadd.f32 %v198, %v326
    %v443 = vadd.f32 %v200, %v328
    %v444 = vadd.f32 %v202, %v330
    %v445 = vadd.f32 %v204, %v332
    %v446 = vadd.f32 %v206, %v334
    %v447 = vadd.f32 %v208, %v336
    %v448 = vadd.f32 %v210, %v338
    %v449 = vadd.f32 %v212, %v340
    %v450 = vadd.f32 %v214, %v342
    %v451 = vadd.f32 %v216, %v344
    %v452 = vadd.f32 %v218, %v346
    %v453 = vadd.f32 %v220, %v348
    %v454 = vadd.f32 %v222, %v350
    %v455 = vadd.f32 %v224, %v352
    %v456 = vadd.f32 %v226, %v354
    %v457 = vadd.f32 %v228, %v356
    %v458 = vadd.f32 %v230, %v358
    %v459 = vadd.f32 %v232, %v360
    %v460 = vadd.f32 %v234, %v362
    %v461 = vadd.f32 %v236, %v364
    %v462 = vadd.f32 %v238, %v366
    %v463 = vadd.f32 %v240, %v368
    %v464 = vadd.f32 %v242, %v370
    %v465 = vadd.f32 %v244, %v372
    %v466 = vadd.f32 %v246, %v374
    %v467 = vadd.f32 %v248, %v376
    %v468 = vadd.f32 %v250, %v378
    %v469 = vadd.f32 %v252, %v380
    %v470 = vadd.f32 %v254, %v382
    %v471 = vadd.f32 %v256, %v384
    %v472 = vadd.f32 %v258, %v386
    %v473 = vadd.f32 %v260, %v388
    %v474 = vadd.f32 %v262, %v390
    %v475 = vadd.f32 %v264, %v392
    %v476 = vadd.f32 %v266, %v394
    %v477 = vadd.f32 %v268, %v396
    %v478 = vadd.f32 %v270, %v398
    %v479 = vadd.f32 %v272, %v400
    %v480 = vadd.f32 %v274, %v402
    %v481 = vadd.f32 %v276, %v404
    %v482 = vadd.f32 %v278, %v406
    %v483 = vadd.f32 %v280, %v408
    %v484 = vadd.f32 %v282, %v410
    %v485 = vadd.f32 %v284, %v412
    %v486 = vadd.f32 %v286, %v414
    %v487 = vadd.f32 %v288, %v416
    %v488 = vadd.f32 %v290, %v418
    %v489 = vadd.f32 %v292, %v420
    %v490 = vadd.f32 %v294, %v422
    %v491 = vadd.f32 %v296, %v424
    %v492 = vadd.f32 %v298, %v426
    %v493 = vadd.f32 %v300, %v428
    %v494 = vadd.f32 %v302, %v430
    %v495 = vmul.f32 %v431, 0.00390625
    %v496 = vmul.f32 %v432, 0.00390625
    %v497 = vmul.f32 %v433, 0.00390625
    %v498 = vmul.f32 %v434, 0.00390625
    %v499 = vmul.f32 %v435, 0.00390625
    %v500 = vmul.f32 %v436, 0.00390625
    %v501 = vmul.f32 %v437, 0.00390625
    %v502 = vmul.f32 %v438, 0.00390625
    %v503 = vmul.f32 %v439, 0.00390625
    %v504 = vmul.f32 %v440, 0.00390625
    %v505 = vmul.f32 %v441, 0.00390625
    %v506 = vmul.f32 %v442, 0.00390625
    %v507 = vmul.f32 %v443, 0.00390625
    %v508 = vmul.f32 %v444, 0.00390625
    %v509 = vmul.f32 %v445, 0.00390625
    %v510 = vmul.f32 %v446, 0.00390625
    %v511 = vmul.f32 %v447, 0.00390625
    %v512 = vmul.f32 %v448, 0.00390625
    %v513 = vmul.f32 %v449, 0.00390625
    %v514 = vmul.f32 %v450, 0.00390625
    %v515 = vmul.f32 %v451, 0.00390625
    %v516 = vmul.f32 %v452, 0.00390625
    %v517 = vmul.f32 %v453, 0.00390625
    %v518 = vmul.f32 %v454, 0.00390625
    %v519 = vmul.f32 %v455, 0.00390625
    %v520 = vmul.f32 %v456, 0.00390625
    %v521 = vmul.f32 %v457, 0.00390625
    %v522 = vmul.f32 %v458, 0.00390625
    %v523 = vmul.f32 %v459, 0.00390625
    %v524 = vmul.f32 %v460, 0.00390625
    %v525 = vmul.f32 %v461, 0.00390625
    %v526 = vmul.f32 %v462, 0.00390625
    %v527 = vmul.f32 %v463, 0.00390625
    %v528 = vmul.f32 %v464, 0.00390625
    %v529 = vmul.f32 %v465, 0.00390625
    %v530 = vmul.f32 %v466, 0.00390625
    %v531 = vmul.f32 %v467, 0.00390625
    %v532 = vmul.f32 %v468, 0.00390625
    %v533 = vmul.f32 %v469, 0.00390625
    %v534 = vmul.f32 %v470, 0.00390625
    %v535 = vmul.f32 %v471, 0.00390625
    %v536 = vmul.f32 %v472, 0.00390625
    %v537 = vmul.f32 %v473, 0.00390625
    %v538 = vmul.f32 %v474, 0.00390625
    %v539 = vmul.f32 %v475, 0.00390625
    %v540 = vmul.f32 %v476, 0.00390625
    %v541 = vmul.f32 %v477, 0.00390625
    %v542 = vmul.f32 %v478, 0.00390625
    %v543 = vmul.f32 %v479, 0.00390625
    %v544 = vmul.f32 %v480, 0.00390625
    %v545 = vmul.f32 %v481, 0.00390625
    %v546 = vmul.f32 %v482, 0.00390625
    %v547 = vmul.f32 %v483, 0.00390625
    %v548 = vmul.f32 %v484, 0.00390625
    %v549 = vmul.f32 %v485, 0.00390625
    %v550 = vmul.f32 %v486, 0.00390625
    %v551 = vmul.f32 %v487, 0.00390625
    %v552 = vmul.f32 %v488, 0.00390625
    %v553 = vmul.f32 %v489, 0.00390625
    %v554 = vmul.f32 %v490, 0.00390625
    %v555 = vmul.f32 %v491, 0.00390625
    %v556 = vmul.f32 %v492, 0.00390625
    %v557 = vmul.f32 %v493, 0.00390625
    %v558 = vmul.f32 %v494, 0.00390625
    %v559 = vsub.f32 %v47, %v495
    %v560 = vsub.f32 %v48, %v496
    %v561 = vsub.f32 %v51, %v497
    %v562 = vsub.f32 %v52, %v498
    %v563 = vsub.f32 %v55, %v499
    %v564 = vsub.f32 %v56, %v500
    %v565 = vsub.f32 %v59, %v501
    %v566 = vsub.f32 %v60, %v502
    %v567 = vsub.f32 %v63, %v503
    %v568 = vsub.f32 %v64, %v504
    %v569 = vsub.f32 %v67, %v505
    %v570 = vsub.f32 %v68, %v506
    %v571 = vsub.f32 %v71, %v507
    %v572 = vsub.f32 %v72, %v508
    %v573 = vsub.f32 %v75, %v509
    %v574 = vsub.f32 %v76, %v510
    %v575 = vsub.f32 %v79, %v511
    %v576 = vsub.f32 %v80, %v512
    %v577 = vsub.f32 %v83, %v513
    %v578 = vsub.f32 %v84, %v514
    %v579 = vsub.f32 %v87, %v515
    %v580 = vsub.f32 %v88, %v516
    %v581 = vsub.f32 %v91, %v517
    %v582 = vsub.f32 %v92, %v518
    %v583 = vsub.f32 %v95, %v519
    %v584 = vsub.f32 %v96, %v520
    %v585 = vsub.f32 %v99, %v521
    %v586 = vsub.f32 %v100, %v522
    %v587 = vsub.f32 %v103, %v523
    %v588 = vsub.f32 %v104, %v524
    %v589 = vsub.f32 %v107, %v525
    %v590 = vsub.f32 %v108, %v526
    %v591 = vsub.f32 %v111, %v527
    %v592 = vsub.f32 %v112, %v528
    %v593 = vsub.f32 %v115, %v529
    %v594 = vsub.f32 %v116, %v530
    %v595 = vsub.f32 %v119, %v531
    %v596 = vsub.f32 %v120, %v532
    %v597 = vsub.f32 %v123, %v533
    %v598 = vsub.f32 %v124, %v534
    %v599 = vsub.f32 %v127, %v535
    %v600 = vsub.f32 %v128, %v536
    %v601 = vsub.f32 %v131, %v537
    %v602 = vsub.f32 %v132, %v538
    %v603 = vsub.f32 %v135, %v539
    %v604 = vsub.f32 %v136, %v540
    %v605 = vsub.f32 %v139, %v541
    %v606 = vsub.f32 %v140, %v542
    %v607 = vsub.f32 %v143, %v543
    %v608 = vsub.f32 %v144, %v544
    %v609 = vsub.f32 %v147, %v545
    %v610 = vsub.f32 %v148, %v546
    %v611 = vsub.f32 %v151, %v547
    %v612 = vsub.f32 %v152, %v548
    %v613 = vsub.f32 %v155, %v549
    %v614 = vsub.f32 %v156, %v550
    %v615 = vsub.f32 %v159, %v551
    %v616 = vsub.f32 %v160, %v552
    %v617 = vsub.f32 %v163, %v553
    %v618 = vsub.f32 %v164, %v554
    %v619 = vsub.f32 %v167, %v555
    %v620 = vsub.f32 %v168, %v556
    %v621 = vsub.f32 %v171, %v557
    %v622 = vsub.f32 %v172, %v558
    %v623 = vsub.f32 %v49, %v495
    %v624 = vsub.f32 %v50, %v496
    %v625 = vsub.f32 %v53, %v497
    %v626 = vsub.f32 %v54, %v498
    %v627 = vsub.f32 %v57, %v499
    %v628 = vsub.f32 %v58, %v500
    %v629 = vsub.f32 %v61, %v501
    %v630 = vsub.f32 %v62, %v502
    %v631 = vsub.f32 %v65, %v503
    %v632 = vsub.f32 %v66, %v504
    %v633 = vsub.f32 %v69, %v505
    %v634 = vsub.f32 %v70, %v506
    %v635 = vsub.f32 %v73, %v507
    %v636 = vsub.f32 %v74, %v508
    %v637 = vsub.f32 %v77, %v509
    %v638 = vsub.f32 %v78, %v510
    %v639 = vsub.f32 %v81, %v511
    %v640 = vsub.f32 %v82, %v512
    %v641 = vsub.f32 %v85, %v513
    %v642 = vsub.f32 %v86, %v514
    %v643 = vsub.f32 %v89, %v515
    %v644 = vsub.f32 %v90, %v516
    %v645 = vsub.f32 %v93, %v517
    %v646 = vsub.f32 %v94, %v518
    %v647 = vsub.f32 %v97, %v519
    %v648 = vsub.f32 %v98, %v520
    %v649 = vsub.f32 %v101, %v521
    %v650 = vsub.f32 %v102, %v522
    %v651 = vsub.f32 %v105, %v523
    %v652 = vsub.f32 %v106, %v524
    %v653 = vsub.f32 %v109, %v525
    %v654 = vsub.f32 %v110, %v526
    %v655 = vsub.f32 %v113, %v527
    %v656 = vsub.f32 %v114, %v528
    %v657 = vsub.f32 %v117, %v529
    %v658 = vsub.f32 %v118, %v530
    %v659 = vsub.f32 %v121, %v531
    %v660 = vsub.f32 %v122, %v532
    %v661 = vsub.f32 %v125, %v533
    %v662 = vsub.f32 %v126, %v534
    %v663 = vsub.f32 %v129, %v535
    %v664 = vsub.f32 %v130, %v536
    %v665 = vsub.f32 %v133, %v537
    %v666 = vsub.f32 %v134, %v538
    %v667 = vsub.f32 %v137, %v539
    %v668 = vsub.f32 %v138, %v540
    %v669 = vsub.f32 %v141, %v541
    %v670 = vsub.f32 %v142, %v542
    %v671 = vsub.f32 %v145, %v543
    %v672 = vsub.f32 %v146, %v544
    %v673 = vsub.f32 %v149, %v545
    %v674 = vsub.f32 %v150, %v546
    %v675 = vsub.f32 %v153, %v547
    %v676 = vsub.f32 %v154, %v548
    %v677 = vsub.f32 %v157, %v549
    %v678 = vsub.f32 %v158, %v550
    %v679 = vsub.f32 %v161, %v551
    %v680 = vsub.f32 %v162, %v552
    %v681 = vsub.f32 %v165, %v553
    %v682 = vsub.f32 %v166, %v554
    %v683 = vsub.f32 %v169, %v555
    %v684 = vsub.f32 %v170, %v556
    %v685 = vsub.f32 %v173, %v557
    %v686 = vsub.f32 %v174, %v558
    %v687 = vmul.f32 %v559, %v559
    %v688 = vmul.f32 %v560, %v560
    %v689 = vmul.f32 %v561, %v561
    %v690 = vmul.f32 %v562, %v562
    %v691 = vmul.f32 %v563, %v563
    %v692 = vmul.f32 %v564, %v564
    %v693 = vmul.f32 %v565, %v565
    %v694 = vmul.f32 %v566, %v566
    %v695 = vmul.f32 %v567, %v567
    %v696 = vmul.f32 %v568, %v568
    %v697 = vmul.f32 %v569, %v569
    %v698 = vmul.f32 %v570, %v570
    %v699 = vmul.f32 %v571, %v571
    %v700 = vmul.f32 %v572, %v572
    %v701 = vmul.f32 %v573, %v573
    %v702 = vmul.f32 %v574, %v574
    %v703 = vmul.f32 %v575, %v575
    %v704 = vmul.f32 %v576, %v576
    %v705 = vmul.f32 %v577, %v577
    %v706 = vmul.f32 %v578, %v578
    %v707 = vmul.f32 %v579, %v579
    %v708 = vmul.f32 %v580, %v580
    %v709 = vmul.f32 %v581, %v581
    %v710 = vmul.f32 %v582, %v582
    %v711 = vmul.f32 %v583, %v583
    %v712 = vmul.f32 %v584, %v584
    %v713 = vmul.f32 %v585, %v585
    %v714 = vmul.f32 %v586, %v586
    %v715 = vmul.f32 %v587, %v587
    %v716 = vmul.f32 %v588, %v588
    %v717 = vmul.f32 %v589, %v589
    %v718 = vmul.f32 %v590, %v590
    %v719 = vmul.f32 %v591, %v591
    %v720 = vmul.f32 %v592, %v592
    %v721 = vmul.f32 %v593, %v593
    %v722 = vmul.f32 %v594, %v594
    %v723 = vmul.f32 %v595, %v595
    %v724 = vmul.f32 %v596, %v596
    %v725 = vmul.f32 %v597, %v597
    %v726 = vmul.f32 %v598, %v598
    %v727 = vmul.f32 %v599, %v599
    %v728 = vmul.f32 %v600, %v600
    %v729 = vmul.f32 %v601, %v601
    %v730 = vmul.f32 %v602, %v602
    %v731 = vmul.f32 %v603, %v603
    %v732 = vmul.f32 %v604, %v604
    %v733 = vmul.f32 %v605, %v605
    %v734 = vmul.f32 %v606, %v606
    %v735 = vmul.f32 %v607, %v607
    %v736 = vmul.f32 %v608, %v608
    %v737 = vmul.f32 %v609, %v609
    %v738 = vmul.f32 %v610, %v610
    %v739 = vmul.f32 %v611, %v611
    %v740 = vmul.f32 %v612, %v612
    %v741 = vmul.f32 %v613, %v613
    %v742 = vmul.f32 %v614, %v614
    %v743 = vmul.f32 %v615, %v615
    %v744 = vmul.f32 %v616, %v616
    %v745 = vmul.f32 %v617, %v617
    %v746 = vmul.f32 %v618, %v618
    %v747 = vmul.f32 %v619, %v619
    %v748 = vmul.f32 %v620, %v620
    %v749 = vmul.f32 %v621, %v621
    %v750 = vmul.f32 %v622, %v622
    %751 = vadd.xlane.f32.xlu0 %v687
    %v752 = vpop.xlane.xlu0 %751
    %753 = vadd.xlane.f32.xlu0 %v688
    %v754 = vpop.xlane.xlu0 %753
    %755 = vadd.xlane.f32.xlu0 %v689
    %v756 = vpop.xlane.xlu0 %755
    %757 = vadd.xlane.f32.xlu0 %v690
    %v758 = vpop.xlane.xlu0 %757
    %759 = vadd.xlane.f32.xlu0 %v691
    %v760 = vpop.xlane.xlu0 %759
    %761 = vadd.xlane.f32.xlu0 %v692
    %v762 = vpop.xlane.xlu0 %761
    %763 = vadd.xlane.f32.xlu0 %v693
    %v764 = vpop.xlane.xlu0 %763
    %765 = vadd.xlane.f32.xlu0 %v694
    %v766 = vpop.xlane.xlu0 %765
    %767 = vadd.xlane.f32.xlu0 %v695
    %v768 = vpop.xlane.xlu0 %767
    %769 = vadd.xlane.f32.xlu0 %v696
    %v770 = vpop.xlane.xlu0 %769
    %771 = vadd.xlane.f32.xlu0 %v697
    %v772 = vpop.xlane.xlu0 %771
    %773 = vadd.xlane.f32.xlu0 %v698
    %v774 = vpop.xlane.xlu0 %773
    %775 = vadd.xlane.f32.xlu0 %v699
    %v776 = vpop.xlane.xlu0 %775
    %777 = vadd.xlane.f32.xlu0 %v700
    %v778 = vpop.xlane.xlu0 %777
    %779 = vadd.xlane.f32.xlu0 %v701
    %v780 = vpop.xlane.xlu0 %779
    %781 = vadd.xlane.f32.xlu0 %v702
    %v782 = vpop.xlane.xlu0 %781
    %783 = vadd.xlane.f32.xlu0 %v703
    %v784 = vpop.xlane.xlu0 %783
    %785 = vadd.xlane.f32.xlu0 %v704
    %v786 = vpop.xlane.xlu0 %785
    %787 = vadd.xlane.f32.xlu0 %v705
    %v788 = vpop.xlane.xlu0 %787
    %789 = vadd.xlane.f32.xlu0 %v706
    %v790 = vpop.xlane.xlu0 %789
    %791 = vadd.xlane.f32.xlu0 %v707
    %v792 = vpop.xlane.xlu0 %791
    %793 = vadd.xlane.f32.xlu0 %v708
    %v794 = vpop.xlane.xlu0 %793
    %795 = vadd.xlane.f32.xlu0 %v709
    %v796 = vpop.xlane.xlu0 %795
    %797 = vadd.xlane.f32.xlu0 %v710
    %v798 = vpop.xlane.xlu0 %797
    %799 = vadd.xlane.f32.xlu0 %v711
    %v800 = vpop.xlane.xlu0 %799
    %801 = vadd.xlane.f32.xlu0 %v712
    %v802 = vpop.xlane.xlu0 %801
    %803 = vadd.xlane.f32.xlu0 %v713
    %v804 = vpop.xlane.xlu0 %803
    %805 = vadd.xlane.f32.xlu0 %v714
    %v806 = vpop.xlane.xlu0 %805
    %807 = vadd.xlane.f32.xlu0 %v715
    %v808 = vpop.xlane.xlu0 %807
    %809 = vadd.xlane.f32.xlu0 %v716
    %v810 = vpop.xlane.xlu0 %809
    %811 = vadd.xlane.f32.xlu0 %v717
    %v812 = vpop.xlane.xlu0 %811
    %813 = vadd.xlane.f32.xlu0 %v718
    %v814 = vpop.xlane.xlu0 %813
    %815 = vadd.xlane.f32.xlu0 %v719
    %v816 = vpop.xlane.xlu0 %815
    %817 = vadd.xlane.f32.xlu0 %v720
    %v818 = vpop.xlane.xlu0 %817
    %819 = vadd.xlane.f32.xlu0 %v721
    %v820 = vpop.xlane.xlu0 %819
    %821 = vadd.xlane.f32.xlu0 %v722
    %v822 = vpop.xlane.xlu0 %821
    %823 = vadd.xlane.f32.xlu0 %v723
    %v824 = vpop.xlane.xlu0 %823
    %825 = vadd.xlane.f32.xlu0 %v724
    %v826 = vpop.xlane.xlu0 %825
    %827 = vadd.xlane.f32.xlu0 %v725
    %v828 = vpop.xlane.xlu0 %827
    %829 = vadd.xlane.f32.xlu0 %v726
    %v830 = vpop.xlane.xlu0 %829
    %831 = vadd.xlane.f32.xlu0 %v727
    %v832 = vpop.xlane.xlu0 %831
    %833 = vadd.xlane.f32.xlu0 %v728
    %v834 = vpop.xlane.xlu0 %833
    %835 = vadd.xlane.f32.xlu0 %v729
    %v836 = vpop.xlane.xlu0 %835
    %837 = vadd.xlane.f32.xlu0 %v730
    %v838 = vpop.xlane.xlu0 %837
    %839 = vadd.xlane.f32.xlu0 %v731
    %v840 = vpop.xlane.xlu0 %839
    %841 = vadd.xlane.f32.xlu0 %v732
    %v842 = vpop.xlane.xlu0 %841
    %843 = vadd.xlane.f32.xlu0 %v733
    %v844 = vpop.xlane.xlu0 %843
    %845 = vadd.xlane.f32.xlu0 %v734
    %v846 = vpop.xlane.xlu0 %845
    %847 = vadd.xlane.f32.xlu0 %v735
    %v848 = vpop.xlane.xlu0 %847
    %849 = vadd.xlane.f32.xlu0 %v736
    %v850 = vpop.xlane.xlu0 %849
    %851 = vadd.xlane.f32.xlu0 %v737
    %v852 = vpop.xlane.xlu0 %851
    %853 = vadd.xlane.f32.xlu0 %v738
    %v854 = vpop.xlane.xlu0 %853
    %855 = vadd.xlane.f32.xlu0 %v739
    %v856 = vpop.xlane.xlu0 %855
    %857 = vadd.xlane.f32.xlu0 %v740
    %v858 = vpop.xlane.xlu0 %857
    %859 = vadd.xlane.f32.xlu0 %v741
    %v860 = vpop.xlane.xlu0 %859
    %861 = vadd.xlane.f32.xlu0 %v742
    %v862 = vpop.xlane.xlu0 %861
    %863 = vadd.xlane.f32.xlu0 %v743
    %v864 = vpop.xlane.xlu0 %863
    %865 = vadd.xlane.f32.xlu0 %v744
    %v866 = vpop.xlane.xlu0 %865
    %867 = vadd.xlane.f32.xlu0 %v745
    %v868 = vpop.xlane.xlu0 %867
    %869 = vadd.xlane.f32.xlu0 %v746
    %v870 = vpop.xlane.xlu0 %869
    %871 = vadd.xlane.f32.xlu0 %v747
    %v872 = vpop.xlane.xlu0 %871
    %873 = vadd.xlane.f32.xlu0 %v748
    %v874 = vpop.xlane.xlu0 %873
    %875 = vadd.xlane.f32.xlu0 %v749
    %v876 = vpop.xlane.xlu0 %875
    %877 = vadd.xlane.f32.xlu0 %v750
    %v878 = vpop.xlane.xlu0 %877
    %v879 = vmul.f32 %v623, %v623
    %v880 = vmul.f32 %v624, %v624
    %v881 = vmul.f32 %v625, %v625
    %v882 = vmul.f32 %v626, %v626
    %v883 = vmul.f32 %v627, %v627
    %v884 = vmul.f32 %v628, %v628
    %v885 = vmul.f32 %v629, %v629
    %v886 = vmul.f32 %v630, %v630
    %v887 = vmul.f32 %v631, %v631
    %v888 = vmul.f32 %v632, %v632
    %v889 = vmul.f32 %v633, %v633
    %v890 = vmul.f32 %v634, %v634
    %v891 = vmul.f32 %v635, %v635
    %v892 = vmul.f32 %v636, %v636
    %v893 = vmul.f32 %v637, %v637
    %v894 = vmul.f32 %v638, %v638
    %v895 = vmul.f32 %v639, %v639
    %v896 = vmul.f32 %v640, %v640
    %v897 = vmul.f32 %v641, %v641
    %v898 = vmul.f32 %v642, %v642
    %v899 = vmul.f32 %v643, %v643
    %v900 = vmul.f32 %v644, %v644
    %v901 = vmul.f32 %v645, %v645
    %v902 = vmul.f32 %v646, %v646
    %v903 = vmul.f32 %v647, %v647
    %v904 = vmul.f32 %v648, %v648
    %v905 = vmul.f32 %v649, %v649
    %v906 = vmul.f32 %v650, %v650
    %v907 = vmul.f32 %v651, %v651
    %v908 = vmul.f32 %v652, %v652
    %v909 = vmul.f32 %v653, %v653
    %v910 = vmul.f32 %v654, %v654
    %v911 = vmul.f32 %v655, %v655
    %v912 = vmul.f32 %v656, %v656
    %v913 = vmul.f32 %v657, %v657
    %v914 = vmul.f32 %v658, %v658
    %v915 = vmul.f32 %v659, %v659
    %v916 = vmul.f32 %v660, %v660
    %v917 = vmul.f32 %v661, %v661
    %v918 = vmul.f32 %v662, %v662
    %v919 = vmul.f32 %v663, %v663
    %v920 = vmul.f32 %v664, %v664
    %v921 = vmul.f32 %v665, %v665
    %v922 = vmul.f32 %v666, %v666
    %v923 = vmul.f32 %v667, %v667
    %v924 = vmul.f32 %v668, %v668
    %v925 = vmul.f32 %v669, %v669
    %v926 = vmul.f32 %v670, %v670
    %v927 = vmul.f32 %v671, %v671
    %v928 = vmul.f32 %v672, %v672
    %v929 = vmul.f32 %v673, %v673
    %v930 = vmul.f32 %v674, %v674
    %v931 = vmul.f32 %v675, %v675
    %v932 = vmul.f32 %v676, %v676
    %v933 = vmul.f32 %v677, %v677
    %v934 = vmul.f32 %v678, %v678
    %v935 = vmul.f32 %v679, %v679
    %v936 = vmul.f32 %v680, %v680
    %v937 = vmul.f32 %v681, %v681
    %v938 = vmul.f32 %v682, %v682
    %v939 = vmul.f32 %v683, %v683
    %v940 = vmul.f32 %v684, %v684
    %v941 = vmul.f32 %v685, %v685
    %v942 = vmul.f32 %v686, %v686
    %943 = vadd.xlane.f32.xlu0 %v879
    %v944 = vpop.xlane.xlu0 %943
    %945 = vadd.xlane.f32.xlu0 %v880
    %v946 = vpop.xlane.xlu0 %945
    %947 = vadd.xlane.f32.xlu0 %v881
    %v948 = vpop.xlane.xlu0 %947
    %949 = vadd.xlane.f32.xlu0 %v882
    %v950 = vpop.xlane.xlu0 %949
    %951 = vadd.xlane.f32.xlu0 %v883
    %v952 = vpop.xlane.xlu0 %951
    %953 = vadd.xlane.f32.xlu0 %v884
    %v954 = vpop.xlane.xlu0 %953
    %955 = vadd.xlane.f32.xlu0 %v885
    %v956 = vpop.xlane.xlu0 %955
    %957 = vadd.xlane.f32.xlu0 %v886
    %v958 = vpop.xlane.xlu0 %957
    %959 = vadd.xlane.f32.xlu0 %v887
    %v960 = vpop.xlane.xlu0 %959
    %961 = vadd.xlane.f32.xlu0 %v888
    %v962 = vpop.xlane.xlu0 %961
    %963 = vadd.xlane.f32.xlu0 %v889
    %v964 = vpop.xlane.xlu0 %963
    %965 = vadd.xlane.f32.xlu0 %v890
    %v966 = vpop.xlane.xlu0 %965
    %967 = vadd.xlane.f32.xlu0 %v891
    %v968 = vpop.xlane.xlu0 %967
    %969 = vadd.xlane.f32.xlu0 %v892
    %v970 = vpop.xlane.xlu0 %969
    %971 = vadd.xlane.f32.xlu0 %v893
    %v972 = vpop.xlane.xlu0 %971
    %973 = vadd.xlane.f32.xlu0 %v894
    %v974 = vpop.xlane.xlu0 %973
    %975 = vadd.xlane.f32.xlu0 %v895
    %v976 = vpop.xlane.xlu0 %975
    %977 = vadd.xlane.f32.xlu0 %v896
    %v978 = vpop.xlane.xlu0 %977
    %979 = vadd.xlane.f32.xlu0 %v897
    %v980 = vpop.xlane.xlu0 %979
    %981 = vadd.xlane.f32.xlu0 %v898
    %v982 = vpop.xlane.xlu0 %981
    %983 = vadd.xlane.f32.xlu0 %v899
    %v984 = vpop.xlane.xlu0 %983
    %985 = vadd.xlane.f32.xlu0 %v900
    %v986 = vpop.xlane.xlu0 %985
    %987 = vadd.xlane.f32.xlu0 %v901
    %v988 = vpop.xlane.xlu0 %987
    %989 = vadd.xlane.f32.xlu0 %v902
    %v990 = vpop.xlane.xlu0 %989
    %991 = vadd.xlane.f32.xlu0 %v903
    %v992 = vpop.xlane.xlu0 %991
    %993 = vadd.xlane.f32.xlu0 %v904
    %v994 = vpop.xlane.xlu0 %993
    %995 = vadd.xlane.f32.xlu0 %v905
    %v996 = vpop.xlane.xlu0 %995
    %997 = vadd.xlane.f32.xlu0 %v906
    %v998 = vpop.xlane.xlu0 %997
    %999 = vadd.xlane.f32.xlu0 %v907
    %v1000 = vpop.xlane.xlu0 %999
    %1001 = vadd.xlane.f32.xlu0 %v908
    %v1002 = vpop.xlane.xlu0 %1001
    %1003 = vadd.xlane.f32.xlu0 %v909
    %v1004 = vpop.xlane.xlu0 %1003
    %1005 = vadd.xlane.f32.xlu0 %v910
    %v1006 = vpop.xlane.xlu0 %1005
    %1007 = vadd.xlane.f32.xlu0 %v911
    %v1008 = vpop.xlane.xlu0 %1007
    %1009 = vadd.xlane.f32.xlu0 %v912
    %v1010 = vpop.xlane.xlu0 %1009
    %1011 = vadd.xlane.f32.xlu0 %v913
    %v1012 = vpop.xlane.xlu0 %1011
    %1013 = vadd.xlane.f32.xlu0 %v914
    %v1014 = vpop.xlane.xlu0 %1013
    %1015 = vadd.xlane.f32.xlu0 %v915
    %v1016 = vpop.xlane.xlu0 %1015
    %1017 = vadd.xlane.f32.xlu0 %v916
    %v1018 = vpop.xlane.xlu0 %1017
    %1019 = vadd.xlane.f32.xlu0 %v917
    %v1020 = vpop.xlane.xlu0 %1019
    %1021 = vadd.xlane.f32.xlu0 %v918
    %v1022 = vpop.xlane.xlu0 %1021
    %1023 = vadd.xlane.f32.xlu0 %v919
    %v1024 = vpop.xlane.xlu0 %1023
    %1025 = vadd.xlane.f32.xlu0 %v920
    %v1026 = vpop.xlane.xlu0 %1025
    %1027 = vadd.xlane.f32.xlu0 %v921
    %v1028 = vpop.xlane.xlu0 %1027
    %1029 = vadd.xlane.f32.xlu0 %v922
    %v1030 = vpop.xlane.xlu0 %1029
    %1031 = vadd.xlane.f32.xlu0 %v923
    %v1032 = vpop.xlane.xlu0 %1031
    %1033 = vadd.xlane.f32.xlu0 %v924
    %v1034 = vpop.xlane.xlu0 %1033
    %1035 = vadd.xlane.f32.xlu0 %v925
    %v1036 = vpop.xlane.xlu0 %1035
    %1037 = vadd.xlane.f32.xlu0 %v926
    %v1038 = vpop.xlane.xlu0 %1037
    %1039 = vadd.xlane.f32.xlu0 %v927
    %v1040 = vpop.xlane.xlu0 %1039
    %1041 = vadd.xlane.f32.xlu0 %v928
    %v1042 = vpop.xlane.xlu0 %1041
    %1043 = vadd.xlane.f32.xlu0 %v929
    %v1044 = vpop.xlane.xlu0 %1043
    %1045 = vadd.xlane.f32.xlu0 %v930
    %v1046 = vpop.xlane.xlu0 %1045
    %1047 = vadd.xlane.f32.xlu0 %v931
    %v1048 = vpop.xlane.xlu0 %1047
    %1049 = vadd.xlane.f32.xlu0 %v932
    %v1050 = vpop.xlane.xlu0 %1049
    %1051 = vadd.xlane.f32.xlu0 %v933
    %v1052 = vpop.xlane.xlu0 %1051
    %1053 = vadd.xlane.f32.xlu0 %v934
    %v1054 = vpop.xlane.xlu0 %1053
    %1055 = vadd.xlane.f32.xlu0 %v935
    %v1056 = vpop.xlane.xlu0 %1055
    %1057 = vadd.xlane.f32.xlu0 %v936
    %v1058 = vpop.xlane.xlu0 %1057
    %1059 = vadd.xlane.f32.xlu0 %v937
    %v1060 = vpop.xlane.xlu0 %1059
    %1061 = vadd.xlane.f32.xlu0 %v938
    %v1062 = vpop.xlane.xlu0 %1061
    %1063 = vadd.xlane.f32.xlu0 %v939
    %v1064 = vpop.xlane.xlu0 %1063
    %1065 = vadd.xlane.f32.xlu0 %v940
    %v1066 = vpop.xlane.xlu0 %1065
    %1067 = vadd.xlane.f32.xlu0 %v941
    %v1068 = vpop.xlane.xlu0 %1067
    %1069 = vadd.xlane.f32.xlu0 %v942
    %v1070 = vpop.xlane.xlu0 %1069
    %v1071 = vadd.f32 %v752, %v944
    %v1072 = vadd.f32 %v754, %v946
    %v1073 = vadd.f32 %v756, %v948
    %v1074 = vadd.f32 %v758, %v950
    %v1075 = vadd.f32 %v760, %v952
    %v1076 = vadd.f32 %v762, %v954
    %v1077 = vadd.f32 %v764, %v956
    %v1078 = vadd.f32 %v766, %v958
    %v1079 = vadd.f32 %v768, %v960
    %v1080 = vadd.f32 %v770, %v962
    %v1081 = vadd.f32 %v772, %v964
    %v1082 = vadd.f32 %v774, %v966
    %v1083 = vadd.f32 %v776, %v968
    %v1084 = vadd.f32 %v778, %v970
    %v1085 = vadd.f32 %v780, %v972
    %v1086 = vadd.f32 %v782, %v974
    %v1087 = vadd.f32 %v784, %v976
    %v1088 = vadd.f32 %v786, %v978
    %v1089 = vadd.f32 %v788, %v980
    %v1090 = vadd.f32 %v790, %v982
    %v1091 = vadd.f32 %v792, %v984
    %v1092 = vadd.f32 %v794, %v986
    %v1093 = vadd.f32 %v796, %v988
    %v1094 = vadd.f32 %v798, %v990
    %v1095 = vadd.f32 %v800, %v992
    %v1096 = vadd.f32 %v802, %v994
    %v1097 = vadd.f32 %v804, %v996
    %v1098 = vadd.f32 %v806, %v998
    %v1099 = vadd.f32 %v808, %v1000
    %v1100 = vadd.f32 %v810, %v1002
    %v1101 = vadd.f32 %v812, %v1004
    %v1102 = vadd.f32 %v814, %v1006
    %v1103 = vadd.f32 %v816, %v1008
    %v1104 = vadd.f32 %v818, %v1010
    %v1105 = vadd.f32 %v820, %v1012
    %v1106 = vadd.f32 %v822, %v1014
    %v1107 = vadd.f32 %v824, %v1016
    %v1108 = vadd.f32 %v826, %v1018
    %v1109 = vadd.f32 %v828, %v1020
    %v1110 = vadd.f32 %v830, %v1022
    %v1111 = vadd.f32 %v832, %v1024
    %v1112 = vadd.f32 %v834, %v1026
    %v1113 = vadd.f32 %v836, %v1028
    %v1114 = vadd.f32 %v838, %v1030
    %v1115 = vadd.f32 %v840, %v1032
    %v1116 = vadd.f32 %v842, %v1034
    %v1117 = vadd.f32 %v844, %v1036
    %v1118 = vadd.f32 %v846, %v1038
    %v1119 = vadd.f32 %v848, %v1040
    %v1120 = vadd.f32 %v850, %v1042
    %v1121 = vadd.f32 %v852, %v1044
    %v1122 = vadd.f32 %v854, %v1046
    %v1123 = vadd.f32 %v856, %v1048
    %v1124 = vadd.f32 %v858, %v1050
    %v1125 = vadd.f32 %v860, %v1052
    %v1126 = vadd.f32 %v862, %v1054
    %v1127 = vadd.f32 %v864, %v1056
    %v1128 = vadd.f32 %v866, %v1058
    %v1129 = vadd.f32 %v868, %v1060
    %v1130 = vadd.f32 %v870, %v1062
    %v1131 = vadd.f32 %v872, %v1064
    %v1132 = vadd.f32 %v874, %v1066
    %v1133 = vadd.f32 %v876, %v1068
    %v1134 = vadd.f32 %v878, %v1070
    %v1135 = vmul.f32 %v1071, 0.00390625
    %v1136 = vmul.f32 %v1072, 0.00390625
    %v1137 = vmul.f32 %v1073, 0.00390625
    %v1138 = vmul.f32 %v1074, 0.00390625
    %v1139 = vmul.f32 %v1075, 0.00390625
    %v1140 = vmul.f32 %v1076, 0.00390625
    %v1141 = vmul.f32 %v1077, 0.00390625
    %v1142 = vmul.f32 %v1078, 0.00390625
    %v1143 = vmul.f32 %v1079, 0.00390625
    %v1144 = vmul.f32 %v1080, 0.00390625
    %v1145 = vmul.f32 %v1081, 0.00390625
    %v1146 = vmul.f32 %v1082, 0.00390625
    %v1147 = vmul.f32 %v1083, 0.00390625
    %v1148 = vmul.f32 %v1084, 0.00390625
    %v1149 = vmul.f32 %v1085, 0.00390625
    %v1150 = vmul.f32 %v1086, 0.00390625
    %v1151 = vmul.f32 %v1087, 0.00390625
    %v1152 = vmul.f32 %v1088, 0.00390625
    %v1153 = vmul.f32 %v1089, 0.00390625
    %v1154 = vmul.f32 %v1090, 0.00390625
    %v1155 = vmul.f32 %v1091, 0.00390625
    %v1156 = vmul.f32 %v1092, 0.00390625
    %v1157 = vmul.f32 %v1093, 0.00390625
    %v1158 = vmul.f32 %v1094, 0.00390625
    %v1159 = vmul.f32 %v1095, 0.00390625
    %v1160 = vmul.f32 %v1096, 0.00390625
    %v1161 = vmul.f32 %v1097, 0.00390625
    %v1162 = vmul.f32 %v1098, 0.00390625
    %v1163 = vmul.f32 %v1099, 0.00390625
    %v1164 = vmul.f32 %v1100, 0.00390625
    %v1165 = vmul.f32 %v1101, 0.00390625
    %v1166 = vmul.f32 %v1102, 0.00390625
    %v1167 = vmul.f32 %v1103, 0.00390625
    %v1168 = vmul.f32 %v1104, 0.00390625
    %v1169 = vmul.f32 %v1105, 0.00390625
    %v1170 = vmul.f32 %v1106, 0.00390625
    %v1171 = vmul.f32 %v1107, 0.00390625
    %v1172 = vmul.f32 %v1108, 0.00390625
    %v1173 = vmul.f32 %v1109, 0.00390625
    %v1174 = vmul.f32 %v1110, 0.00390625
    %v1175 = vmul.f32 %v1111, 0.00390625
    %v1176 = vmul.f32 %v1112, 0.00390625
    %v1177 = vmul.f32 %v1113, 0.00390625
    %v1178 = vmul.f32 %v1114, 0.00390625
    %v1179 = vmul.f32 %v1115, 0.00390625
    %v1180 = vmul.f32 %v1116, 0.00390625
    %v1181 = vmul.f32 %v1117, 0.00390625
    %v1182 = vmul.f32 %v1118, 0.00390625
    %v1183 = vmul.f32 %v1119, 0.00390625
    %v1184 = vmul.f32 %v1120, 0.00390625
    %v1185 = vmul.f32 %v1121, 0.00390625
    %v1186 = vmul.f32 %v1122, 0.00390625
    %v1187 = vmul.f32 %v1123, 0.00390625
    %v1188 = vmul.f32 %v1124, 0.00390625
    %v1189 = vmul.f32 %v1125, 0.00390625
    %v1190 = vmul.f32 %v1126, 0.00390625
    %v1191 = vmul.f32 %v1127, 0.00390625
    %v1192 = vmul.f32 %v1128, 0.00390625
    %v1193 = vmul.f32 %v1129, 0.00390625
    %v1194 = vmul.f32 %v1130, 0.00390625
    %v1195 = vmul.f32 %v1131, 0.00390625
    %v1196 = vmul.f32 %v1132, 0.00390625
    %v1197 = vmul.f32 %v1133, 0.00390625
    %v1198 = vmul.f32 %v1134, 0.00390625
    %v1199 = vadd.f32 %v1135, 1e-05
    %v1200 = vadd.f32 %v1136, 1e-05
    %v1201 = vadd.f32 %v1137, 1e-05
    %v1202 = vadd.f32 %v1138, 1e-05
    %v1203 = vadd.f32 %v1139, 1e-05
    %v1204 = vadd.f32 %v1140, 1e-05
    %v1205 = vadd.f32 %v1141, 1e-05
    %v1206 = vadd.f32 %v1142, 1e-05
    %v1207 = vadd.f32 %v1143, 1e-05
    %v1208 = vadd.f32 %v1144, 1e-05
    %v1209 = vadd.f32 %v1145, 1e-05
    %v1210 = vadd.f32 %v1146, 1e-05
    %v1211 = vadd.f32 %v1147, 1e-05
    %v1212 = vadd.f32 %v1148, 1e-05
    %v1213 = vadd.f32 %v1149, 1e-05
    %v1214 = vadd.f32 %v1150, 1e-05
    %v1215 = vadd.f32 %v1151, 1e-05
    %v1216 = vadd.f32 %v1152, 1e-05
    %v1217 = vadd.f32 %v1153, 1e-05
    %v1218 = vadd.f32 %v1154, 1e-05
    %v1219 = vadd.f32 %v1155, 1e-05
    %v1220 = vadd.f32 %v1156, 1e-05
    %v1221 = vadd.f32 %v1157, 1e-05
    %v1222 = vadd.f32 %v1158, 1e-05
    %v1223 = vadd.f32 %v1159, 1e-05
    %v1224 = vadd.f32 %v1160, 1e-05
    %v1225 = vadd.f32 %v1161, 1e-05
    %v1226 = vadd.f32 %v1162, 1e-05
    %v1227 = vadd.f32 %v1163, 1e-05
    %v1228 = vadd.f32 %v1164, 1e-05
    %v1229 = vadd.f32 %v1165, 1e-05
    %v1230 = vadd.f32 %v1166, 1e-05
    %v1231 = vadd.f32 %v1167, 1e-05
    %v1232 = vadd.f32 %v1168, 1e-05
    %v1233 = vadd.f32 %v1169, 1e-05
    %v1234 = vadd.f32 %v1170, 1e-05
    %v1235 = vadd.f32 %v1171, 1e-05
    %v1236 = vadd.f32 %v1172, 1e-05
    %v1237 = vadd.f32 %v1173, 1e-05
    %v1238 = vadd.f32 %v1174, 1e-05
    %v1239 = vadd.f32 %v1175, 1e-05
    %v1240 = vadd.f32 %v1176, 1e-05
    %v1241 = vadd.f32 %v1177, 1e-05
    %v1242 = vadd.f32 %v1178, 1e-05
    %v1243 = vadd.f32 %v1179, 1e-05
    %v1244 = vadd.f32 %v1180, 1e-05
    %v1245 = vadd.f32 %v1181, 1e-05
    %v1246 = vadd.f32 %v1182, 1e-05
    %v1247 = vadd.f32 %v1183, 1e-05
    %v1248 = vadd.f32 %v1184, 1e-05
    %v1249 = vadd.f32 %v1185, 1e-05
    %v1250 = vadd.f32 %v1186, 1e-05
    %v1251 = vadd.f32 %v1187, 1e-05
    %v1252 = vadd.f32 %v1188, 1e-05
    %v1253 = vadd.f32 %v1189, 1e-05
    %v1254 = vadd.f32 %v1190, 1e-05
    %v1255 = vadd.f32 %v1191, 1e-05
    %v1256 = vadd.f32 %v1192, 1e-05
    %v1257 = vadd.f32 %v1193, 1e-05
    %v1258 = vadd.f32 %v1194, 1e-05
    %v1259 = vadd.f32 %v1195, 1e-05
    %v1260 = vadd.f32 %v1196, 1e-05
    %v1261 = vadd.f32 %v1197, 1e-05
    %v1262 = vadd.f32 %v1198, 1e-05
    %v1263 = vrsqrt.pop %v1199
    %v1264 = vmul.f32 %v1263, %v1199
    %v1265 = vmul.f32 %v1264, %v1263
    %v1266 = vmul.f32 0.5, %v1265
    %v1267 = vsub.f32 1.5, %v1266
    %v1268 = vmul.f32 %v1263, %v1267
    %vm1269 = vweird.f32 %v1199
    %vm1270 = vweird.f32 %v1263
    %vm1271 = vmor %vm1269, %vm1270
    %v1272 = vsel %vm1271, %v1263, %v1268
    %v1273 = vrsqrt.pop %v1200
    %v1274 = vmul.f32 %v1273, %v1200
    %v1275 = vmul.f32 %v1274, %v1273
    %v1276 = vmul.f32 0.5, %v1275
    %v1277 = vsub.f32 1.5, %v1276
    %v1278 = vmul.f32 %v1273, %v1277
    %vm1279 = vweird.f32 %v1200
    %vm1280 = vweird.f32 %v1273
    %vm1281 = vmor %vm1279, %vm1280
    %v1282 = vsel %vm1281, %v1273, %v1278
    %v1283 = vrsqrt.pop %v1201
    %v1284 = vmul.f32 %v1283, %v1201
    %v1285 = vmul.f32 %v1284, %v1283
    %v1286 = vmul.f32 0.5, %v1285
    %v1287 = vsub.f32 1.5, %v1286
    %v1288 = vmul.f32 %v1283, %v1287
    %vm1289 = vweird.f32 %v1201
    %vm1290 = vweird.f32 %v1283
    %vm1291 = vmor %vm1289, %vm1290
    %v1292 = vsel %vm1291, %v1283, %v1288
    %v1293 = vrsqrt.pop %v1202
    %v1294 = vmul.f32 %v1293, %v1202
    %v1295 = vmul.f32 %v1294, %v1293
    %v1296 = vmul.f32 0.5, %v1295
    %v1297 = vsub.f32 1.5, %v1296
    %v1298 = vmul.f32 %v1293, %v1297
    %vm1299 = vweird.f32 %v1202
    %vm1300 = vweird.f32 %v1293
    %vm1301 = vmor %vm1299, %vm1300
    %v1302 = vsel %vm1301, %v1293, %v1298
    %v1303 = vrsqrt.pop %v1203
    %v1304 = vmul.f32 %v1303, %v1203
    %v1305 = vmul.f32 %v1304, %v1303
    %v1306 = vmul.f32 0.5, %v1305
    %v1307 = vsub.f32 1.5, %v1306
    %v1308 = vmul.f32 %v1303, %v1307
    %vm1309 = vweird.f32 %v1203
    %vm1310 = vweird.f32 %v1303
    %vm1311 = vmor %vm1309, %vm1310
    %v1312 = vsel %vm1311, %v1303, %v1308
    %v1313 = vrsqrt.pop %v1204
    %v1314 = vmul.f32 %v1313, %v1204
    %v1315 = vmul.f32 %v1314, %v1313
    %v1316 = vmul.f32 0.5, %v1315
    %v1317 = vsub.f32 1.5, %v1316
    %v1318 = vmul.f32 %v1313, %v1317
    %vm1319 = vweird.f32 %v1204
    %vm1320 = vweird.f32 %v1313
    %vm1321 = vmor %vm1319, %vm1320
    %v1322 = vsel %vm1321, %v1313, %v1318
    %v1323 = vrsqrt.pop %v1205
    %v1324 = vmul.f32 %v1323, %v1205
    %v1325 = vmul.f32 %v1324, %v1323
    %v1326 = vmul.f32 0.5, %v1325
    %v1327 = vsub.f32 1.5, %v1326
    %v1328 = vmul.f32 %v1323, %v1327
    %vm1329 = vweird.f32 %v1205
    %vm1330 = vweird.f32 %v1323
    %vm1331 = vmor %vm1329, %vm1330
    %v1332 = vsel %vm1331, %v1323, %v1328
    %v1333 = vrsqrt.pop %v1206
    %v1334 = vmul.f32 %v1333, %v1206
    %v1335 = vmul.f32 %v1334, %v1333
    %v1336 = vmul.f32 0.5, %v1335
    %v1337 = vsub.f32 1.5, %v1336
    %v1338 = vmul.f32 %v1333, %v1337
    %vm1339 = vweird.f32 %v1206
    %vm1340 = vweird.f32 %v1333
    %vm1341 = vmor %vm1339, %vm1340
    %v1342 = vsel %vm1341, %v1333, %v1338
    %v1343 = vrsqrt.pop %v1207
    %v1344 = vmul.f32 %v1343, %v1207
    %v1345 = vmul.f32 %v1344, %v1343
    %v1346 = vmul.f32 0.5, %v1345
    %v1347 = vsub.f32 1.5, %v1346
    %v1348 = vmul.f32 %v1343, %v1347
    %vm1349 = vweird.f32 %v1207
    %vm1350 = vweird.f32 %v1343
    %vm1351 = vmor %vm1349, %vm1350
    %v1352 = vsel %vm1351, %v1343, %v1348
    %v1353 = vrsqrt.pop %v1208
    %v1354 = vmul.f32 %v1353, %v1208
    %v1355 = vmul.f32 %v1354, %v1353
    %v1356 = vmul.f32 0.5, %v1355
    %v1357 = vsub.f32 1.5, %v1356
    %v1358 = vmul.f32 %v1353, %v1357
    %vm1359 = vweird.f32 %v1208
    %vm1360 = vweird.f32 %v1353
    %vm1361 = vmor %vm1359, %vm1360
    %v1362 = vsel %vm1361, %v1353, %v1358
    %v1363 = vrsqrt.pop %v1209
    %v1364 = vmul.f32 %v1363, %v1209
    %v1365 = vmul.f32 %v1364, %v1363
    %v1366 = vmul.f32 0.5, %v1365
    %v1367 = vsub.f32 1.5, %v1366
    %v1368 = vmul.f32 %v1363, %v1367
    %vm1369 = vweird.f32 %v1209
    %vm1370 = vweird.f32 %v1363
    %vm1371 = vmor %vm1369, %vm1370
    %v1372 = vsel %vm1371, %v1363, %v1368
    %v1373 = vrsqrt.pop %v1210
    %v1374 = vmul.f32 %v1373, %v1210
    %v1375 = vmul.f32 %v1374, %v1373
    %v1376 = vmul.f32 0.5, %v1375
    %v1377 = vsub.f32 1.5, %v1376
    %v1378 = vmul.f32 %v1373, %v1377
    %vm1379 = vweird.f32 %v1210
    %vm1380 = vweird.f32 %v1373
    %vm1381 = vmor %vm1379, %vm1380
    %v1382 = vsel %vm1381, %v1373, %v1378
    %v1383 = vrsqrt.pop %v1211
    %v1384 = vmul.f32 %v1383, %v1211
    %v1385 = vmul.f32 %v1384, %v1383
    %v1386 = vmul.f32 0.5, %v1385
    %v1387 = vsub.f32 1.5, %v1386
    %v1388 = vmul.f32 %v1383, %v1387
    %vm1389 = vweird.f32 %v1211
    %vm1390 = vweird.f32 %v1383
    %vm1391 = vmor %vm1389, %vm1390
    %v1392 = vsel %vm1391, %v1383, %v1388
    %v1393 = vrsqrt.pop %v1212
    %v1394 = vmul.f32 %v1393, %v1212
    %v1395 = vmul.f32 %v1394, %v1393
    %v1396 = vmul.f32 0.5, %v1395
    %v1397 = vsub.f32 1.5, %v1396
    %v1398 = vmul.f32 %v1393, %v1397
    %vm1399 = vweird.f32 %v1212
    %vm1400 = vweird.f32 %v1393
    %vm1401 = vmor %vm1399, %vm1400
    %v1402 = vsel %vm1401, %v1393, %v1398
    %v1403 = vrsqrt.pop %v1213
    %v1404 = vmul.f32 %v1403, %v1213
    %v1405 = vmul.f32 %v1404, %v1403
    %v1406 = vmul.f32 0.5, %v1405
    %v1407 = vsub.f32 1.5, %v1406
    %v1408 = vmul.f32 %v1403, %v1407
    %vm1409 = vweird.f32 %v1213
    %vm1410 = vweird.f32 %v1403
    %vm1411 = vmor %vm1409, %vm1410
    %v1412 = vsel %vm1411, %v1403, %v1408
    %v1413 = vrsqrt.pop %v1214
    %v1414 = vmul.f32 %v1413, %v1214
    %v1415 = vmul.f32 %v1414, %v1413
    %v1416 = vmul.f32 0.5, %v1415
    %v1417 = vsub.f32 1.5, %v1416
    %v1418 = vmul.f32 %v1413, %v1417
    %vm1419 = vweird.f32 %v1214
    %vm1420 = vweird.f32 %v1413
    %vm1421 = vmor %vm1419, %vm1420
    %v1422 = vsel %vm1421, %v1413, %v1418
    %v1423 = vrsqrt.pop %v1215
    %v1424 = vmul.f32 %v1423, %v1215
    %v1425 = vmul.f32 %v1424, %v1423
    %v1426 = vmul.f32 0.5, %v1425
    %v1427 = vsub.f32 1.5, %v1426
    %v1428 = vmul.f32 %v1423, %v1427
    %vm1429 = vweird.f32 %v1215
    %vm1430 = vweird.f32 %v1423
    %vm1431 = vmor %vm1429, %vm1430
    %v1432 = vsel %vm1431, %v1423, %v1428
    %v1433 = vrsqrt.pop %v1216
    %v1434 = vmul.f32 %v1433, %v1216
    %v1435 = vmul.f32 %v1434, %v1433
    %v1436 = vmul.f32 0.5, %v1435
    %v1437 = vsub.f32 1.5, %v1436
    %v1438 = vmul.f32 %v1433, %v1437
    %vm1439 = vweird.f32 %v1216
    %vm1440 = vweird.f32 %v1433
    %vm1441 = vmor %vm1439, %vm1440
    %v1442 = vsel %vm1441, %v1433, %v1438
    %v1443 = vrsqrt.pop %v1217
    %v1444 = vmul.f32 %v1443, %v1217
    %v1445 = vmul.f32 %v1444, %v1443
    %v1446 = vmul.f32 0.5, %v1445
    %v1447 = vsub.f32 1.5, %v1446
    %v1448 = vmul.f32 %v1443, %v1447
    %vm1449 = vweird.f32 %v1217
    %vm1450 = vweird.f32 %v1443
    %vm1451 = vmor %vm1449, %vm1450
    %v1452 = vsel %vm1451, %v1443, %v1448
    %v1453 = vrsqrt.pop %v1218
    %v1454 = vmul.f32 %v1453, %v1218
    %v1455 = vmul.f32 %v1454, %v1453
    %v1456 = vmul.f32 0.5, %v1455
    %v1457 = vsub.f32 1.5, %v1456
    %v1458 = vmul.f32 %v1453, %v1457
    %vm1459 = vweird.f32 %v1218
    %vm1460 = vweird.f32 %v1453
    %vm1461 = vmor %vm1459, %vm1460
    %v1462 = vsel %vm1461, %v1453, %v1458
    %v1463 = vrsqrt.pop %v1219
    %v1464 = vmul.f32 %v1463, %v1219
    %v1465 = vmul.f32 %v1464, %v1463
    %v1466 = vmul.f32 0.5, %v1465
    %v1467 = vsub.f32 1.5, %v1466
    %v1468 = vmul.f32 %v1463, %v1467
    %vm1469 = vweird.f32 %v1219
    %vm1470 = vweird.f32 %v1463
    %vm1471 = vmor %vm1469, %vm1470
    %v1472 = vsel %vm1471, %v1463, %v1468
    %v1473 = vrsqrt.pop %v1220
    %v1474 = vmul.f32 %v1473, %v1220
    %v1475 = vmul.f32 %v1474, %v1473
    %v1476 = vmul.f32 0.5, %v1475
    %v1477 = vsub.f32 1.5, %v1476
    %v1478 = vmul.f32 %v1473, %v1477
    %vm1479 = vweird.f32 %v1220
    %vm1480 = vweird.f32 %v1473
    %vm1481 = vmor %vm1479, %vm1480
    %v1482 = vsel %vm1481, %v1473, %v1478
    %v1483 = vrsqrt.pop %v1221
    %v1484 = vmul.f32 %v1483, %v1221
    %v1485 = vmul.f32 %v1484, %v1483
    %v1486 = vmul.f32 0.5, %v1485
    %v1487 = vsub.f32 1.5, %v1486
    %v1488 = vmul.f32 %v1483, %v1487
    %vm1489 = vweird.f32 %v1221
    %vm1490 = vweird.f32 %v1483
    %vm1491 = vmor %vm1489, %vm1490
    %v1492 = vsel %vm1491, %v1483, %v1488
    %v1493 = vrsqrt.pop %v1222
    %v1494 = vmul.f32 %v1493, %v1222
    %v1495 = vmul.f32 %v1494, %v1493
    %v1496 = vmul.f32 0.5, %v1495
    %v1497 = vsub.f32 1.5, %v1496
    %v1498 = vmul.f32 %v1493, %v1497
    %vm1499 = vweird.f32 %v1222
    %vm1500 = vweird.f32 %v1493
    %vm1501 = vmor %vm1499, %vm1500
    %v1502 = vsel %vm1501, %v1493, %v1498
    %v1503 = vrsqrt.pop %v1223
    %v1504 = vmul.f32 %v1503, %v1223
    %v1505 = vmul.f32 %v1504, %v1503
    %v1506 = vmul.f32 0.5, %v1505
    %v1507 = vsub.f32 1.5, %v1506
    %v1508 = vmul.f32 %v1503, %v1507
    %vm1509 = vweird.f32 %v1223
    %vm1510 = vweird.f32 %v1503
    %vm1511 = vmor %vm1509, %vm1510
    %v1512 = vsel %vm1511, %v1503, %v1508
    %v1513 = vrsqrt.pop %v1224
    %v1514 = vmul.f32 %v1513, %v1224
    %v1515 = vmul.f32 %v1514, %v1513
    %v1516 = vmul.f32 0.5, %v1515
    %v1517 = vsub.f32 1.5, %v1516
    %v1518 = vmul.f32 %v1513, %v1517
    %vm1519 = vweird.f32 %v1224
    %vm1520 = vweird.f32 %v1513
    %vm1521 = vmor %vm1519, %vm1520
    %v1522 = vsel %vm1521, %v1513, %v1518
    %v1523 = vrsqrt.pop %v1225
    %v1524 = vmul.f32 %v1523, %v1225
    %v1525 = vmul.f32 %v1524, %v1523
    %v1526 = vmul.f32 0.5, %v1525
    %v1527 = vsub.f32 1.5, %v1526
    %v1528 = vmul.f32 %v1523, %v1527
    %vm1529 = vweird.f32 %v1225
    %vm1530 = vweird.f32 %v1523
    %vm1531 = vmor %vm1529, %vm1530
    %v1532 = vsel %vm1531, %v1523, %v1528
    %v1533 = vrsqrt.pop %v1226
    %v1534 = vmul.f32 %v1533, %v1226
    %v1535 = vmul.f32 %v1534, %v1533
    %v1536 = vmul.f32 0.5, %v1535
    %v1537 = vsub.f32 1.5, %v1536
    %v1538 = vmul.f32 %v1533, %v1537
    %vm1539 = vweird.f32 %v1226
    %vm1540 = vweird.f32 %v1533
    %vm1541 = vmor %vm1539, %vm1540
    %v1542 = vsel %vm1541, %v1533, %v1538
    %v1543 = vrsqrt.pop %v1227
    %v1544 = vmul.f32 %v1543, %v1227
    %v1545 = vmul.f32 %v1544, %v1543
    %v1546 = vmul.f32 0.5, %v1545
    %v1547 = vsub.f32 1.5, %v1546
    %v1548 = vmul.f32 %v1543, %v1547
    %vm1549 = vweird.f32 %v1227
    %vm1550 = vweird.f32 %v1543
    %vm1551 = vmor %vm1549, %vm1550
    %v1552 = vsel %vm1551, %v1543, %v1548
    %v1553 = vrsqrt.pop %v1228
    %v1554 = vmul.f32 %v1553, %v1228
    %v1555 = vmul.f32 %v1554, %v1553
    %v1556 = vmul.f32 0.5, %v1555
    %v1557 = vsub.f32 1.5, %v1556
    %v1558 = vmul.f32 %v1553, %v1557
    %vm1559 = vweird.f32 %v1228
    %vm1560 = vweird.f32 %v1553
    %vm1561 = vmor %vm1559, %vm1560
    %v1562 = vsel %vm1561, %v1553, %v1558
    %v1563 = vrsqrt.pop %v1229
    %v1564 = vmul.f32 %v1563, %v1229
    %v1565 = vmul.f32 %v1564, %v1563
    %v1566 = vmul.f32 0.5, %v1565
    %v1567 = vsub.f32 1.5, %v1566
    %v1568 = vmul.f32 %v1563, %v1567
    %vm1569 = vweird.f32 %v1229
    %vm1570 = vweird.f32 %v1563
    %vm1571 = vmor %vm1569, %vm1570
    %v1572 = vsel %vm1571, %v1563, %v1568
    %v1573 = vrsqrt.pop %v1230
    %v1574 = vmul.f32 %v1573, %v1230
    %v1575 = vmul.f32 %v1574, %v1573
    %v1576 = vmul.f32 0.5, %v1575
    %v1577 = vsub.f32 1.5, %v1576
    %v1578 = vmul.f32 %v1573, %v1577
    %vm1579 = vweird.f32 %v1230
    %vm1580 = vweird.f32 %v1573
    %vm1581 = vmor %vm1579, %vm1580
    %v1582 = vsel %vm1581, %v1573, %v1578
    %v1583 = vrsqrt.pop %v1231
    %v1584 = vmul.f32 %v1583, %v1231
    %v1585 = vmul.f32 %v1584, %v1583
    %v1586 = vmul.f32 0.5, %v1585
    %v1587 = vsub.f32 1.5, %v1586
    %v1588 = vmul.f32 %v1583, %v1587
    %vm1589 = vweird.f32 %v1231
    %vm1590 = vweird.f32 %v1583
    %vm1591 = vmor %vm1589, %vm1590
    %v1592 = vsel %vm1591, %v1583, %v1588
    %v1593 = vrsqrt.pop %v1232
    %v1594 = vmul.f32 %v1593, %v1232
    %v1595 = vmul.f32 %v1594, %v1593
    %v1596 = vmul.f32 0.5, %v1595
    %v1597 = vsub.f32 1.5, %v1596
    %v1598 = vmul.f32 %v1593, %v1597
    %vm1599 = vweird.f32 %v1232
    %vm1600 = vweird.f32 %v1593
    %vm1601 = vmor %vm1599, %vm1600
    %v1602 = vsel %vm1601, %v1593, %v1598
    %v1603 = vrsqrt.pop %v1233
    %v1604 = vmul.f32 %v1603, %v1233
    %v1605 = vmul.f32 %v1604, %v1603
    %v1606 = vmul.f32 0.5, %v1605
    %v1607 = vsub.f32 1.5, %v1606
    %v1608 = vmul.f32 %v1603, %v1607
    %vm1609 = vweird.f32 %v1233
    %vm1610 = vweird.f32 %v1603
    %vm1611 = vmor %vm1609, %vm1610
    %v1612 = vsel %vm1611, %v1603, %v1608
    %v1613 = vrsqrt.pop %v1234
    %v1614 = vmul.f32 %v1613, %v1234
    %v1615 = vmul.f32 %v1614, %v1613
    %v1616 = vmul.f32 0.5, %v1615
    %v1617 = vsub.f32 1.5, %v1616
    %v1618 = vmul.f32 %v1613, %v1617
    %vm1619 = vweird.f32 %v1234
    %vm1620 = vweird.f32 %v1613
    %vm1621 = vmor %vm1619, %vm1620
    %v1622 = vsel %vm1621, %v1613, %v1618
    %v1623 = vrsqrt.pop %v1235
    %v1624 = vmul.f32 %v1623, %v1235
    %v1625 = vmul.f32 %v1624, %v1623
    %v1626 = vmul.f32 0.5, %v1625
    %v1627 = vsub.f32 1.5, %v1626
    %v1628 = vmul.f32 %v1623, %v1627
    %vm1629 = vweird.f32 %v1235
    %vm1630 = vweird.f32 %v1623
    %vm1631 = vmor %vm1629, %vm1630
    %v1632 = vsel %vm1631, %v1623, %v1628
    %v1633 = vrsqrt.pop %v1236
    %v1634 = vmul.f32 %v1633, %v1236
    %v1635 = vmul.f32 %v1634, %v1633
    %v1636 = vmul.f32 0.5, %v1635
    %v1637 = vsub.f32 1.5, %v1636
    %v1638 = vmul.f32 %v1633, %v1637
    %vm1639 = vweird.f32 %v1236
    %vm1640 = vweird.f32 %v1633
    %vm1641 = vmor %vm1639, %vm1640
    %v1642 = vsel %vm1641, %v1633, %v1638
    %v1643 = vrsqrt.pop %v1237
    %v1644 = vmul.f32 %v1643, %v1237
    %v1645 = vmul.f32 %v1644, %v1643
    %v1646 = vmul.f32 0.5, %v1645
    %v1647 = vsub.f32 1.5, %v1646
    %v1648 = vmul.f32 %v1643, %v1647
    %vm1649 = vweird.f32 %v1237
    %vm1650 = vweird.f32 %v1643
    %vm1651 = vmor %vm1649, %vm1650
    %v1652 = vsel %vm1651, %v1643, %v1648
    %v1653 = vrsqrt.pop %v1238
    %v1654 = vmul.f32 %v1653, %v1238
    %v1655 = vmul.f32 %v1654, %v1653
    %v1656 = vmul.f32 0.5, %v1655
    %v1657 = vsub.f32 1.5, %v1656
    %v1658 = vmul.f32 %v1653, %v1657
    %vm1659 = vweird.f32 %v1238
    %vm1660 = vweird.f32 %v1653
    %vm1661 = vmor %vm1659, %vm1660
    %v1662 = vsel %vm1661, %v1653, %v1658
    %v1663 = vrsqrt.pop %v1239
    %v1664 = vmul.f32 %v1663, %v1239
    %v1665 = vmul.f32 %v1664, %v1663
    %v1666 = vmul.f32 0.5, %v1665
    %v1667 = vsub.f32 1.5, %v1666
    %v1668 = vmul.f32 %v1663, %v1667
    %vm1669 = vweird.f32 %v1239
    %vm1670 = vweird.f32 %v1663
    %vm1671 = vmor %vm1669, %vm1670
    %v1672 = vsel %vm1671, %v1663, %v1668
    %v1673 = vrsqrt.pop %v1240
    %v1674 = vmul.f32 %v1673, %v1240
    %v1675 = vmul.f32 %v1674, %v1673
    %v1676 = vmul.f32 0.5, %v1675
    %v1677 = vsub.f32 1.5, %v1676
    %v1678 = vmul.f32 %v1673, %v1677
    %vm1679 = vweird.f32 %v1240
    %vm1680 = vweird.f32 %v1673
    %vm1681 = vmor %vm1679, %vm1680
    %v1682 = vsel %vm1681, %v1673, %v1678
    %v1683 = vrsqrt.pop %v1241
    %v1684 = vmul.f32 %v1683, %v1241
    %v1685 = vmul.f32 %v1684, %v1683
    %v1686 = vmul.f32 0.5, %v1685
    %v1687 = vsub.f32 1.5, %v1686
    %v1688 = vmul.f32 %v1683, %v1687
    %vm1689 = vweird.f32 %v1241
    %vm1690 = vweird.f32 %v1683
    %vm1691 = vmor %vm1689, %vm1690
    %v1692 = vsel %vm1691, %v1683, %v1688
    %v1693 = vrsqrt.pop %v1242
    %v1694 = vmul.f32 %v1693, %v1242
    %v1695 = vmul.f32 %v1694, %v1693
    %v1696 = vmul.f32 0.5, %v1695
    %v1697 = vsub.f32 1.5, %v1696
    %v1698 = vmul.f32 %v1693, %v1697
    %vm1699 = vweird.f32 %v1242
    %vm1700 = vweird.f32 %v1693
    %vm1701 = vmor %vm1699, %vm1700
    %v1702 = vsel %vm1701, %v1693, %v1698
    %v1703 = vrsqrt.pop %v1243
    %v1704 = vmul.f32 %v1703, %v1243
    %v1705 = vmul.f32 %v1704, %v1703
    %v1706 = vmul.f32 0.5, %v1705
    %v1707 = vsub.f32 1.5, %v1706
    %v1708 = vmul.f32 %v1703, %v1707
    %vm1709 = vweird.f32 %v1243
    %vm1710 = vweird.f32 %v1703
    %vm1711 = vmor %vm1709, %vm1710
    %v1712 = vsel %vm1711, %v1703, %v1708
    %v1713 = vrsqrt.pop %v1244
    %v1714 = vmul.f32 %v1713, %v1244
    %v1715 = vmul.f32 %v1714, %v1713
    %v1716 = vmul.f32 0.5, %v1715
    %v1717 = vsub.f32 1.5, %v1716
    %v1718 = vmul.f32 %v1713, %v1717
    %vm1719 = vweird.f32 %v1244
    %vm1720 = vweird.f32 %v1713
    %vm1721 = vmor %vm1719, %vm1720
    %v1722 = vsel %vm1721, %v1713, %v1718
    %v1723 = vrsqrt.pop %v1245
    %v1724 = vmul.f32 %v1723, %v1245
    %v1725 = vmul.f32 %v1724, %v1723
    %v1726 = vmul.f32 0.5, %v1725
    %v1727 = vsub.f32 1.5, %v1726
    %v1728 = vmul.f32 %v1723, %v1727
    %vm1729 = vweird.f32 %v1245
    %vm1730 = vweird.f32 %v1723
    %vm1731 = vmor %vm1729, %vm1730
    %v1732 = vsel %vm1731, %v1723, %v1728
    %v1733 = vrsqrt.pop %v1246
    %v1734 = vmul.f32 %v1733, %v1246
    %v1735 = vmul.f32 %v1734, %v1733
    %v1736 = vmul.f32 0.5, %v1735
    %v1737 = vsub.f32 1.5, %v1736
    %v1738 = vmul.f32 %v1733, %v1737
    %vm1739 = vweird.f32 %v1246
    %vm1740 = vweird.f32 %v1733
    %vm1741 = vmor %vm1739, %vm1740
    %v1742 = vsel %vm1741, %v1733, %v1738
    %v1743 = vrsqrt.pop %v1247
    %v1744 = vmul.f32 %v1743, %v1247
    %v1745 = vmul.f32 %v1744, %v1743
    %v1746 = vmul.f32 0.5, %v1745
    %v1747 = vsub.f32 1.5, %v1746
    %v1748 = vmul.f32 %v1743, %v1747
    %vm1749 = vweird.f32 %v1247
    %vm1750 = vweird.f32 %v1743
    %vm1751 = vmor %vm1749, %vm1750
    %v1752 = vsel %vm1751, %v1743, %v1748
    %v1753 = vrsqrt.pop %v1248
    %v1754 = vmul.f32 %v1753, %v1248
    %v1755 = vmul.f32 %v1754, %v1753
    %v1756 = vmul.f32 0.5, %v1755
    %v1757 = vsub.f32 1.5, %v1756
    %v1758 = vmul.f32 %v1753, %v1757
    %vm1759 = vweird.f32 %v1248
    %vm1760 = vweird.f32 %v1753
    %vm1761 = vmor %vm1759, %vm1760
    %v1762 = vsel %vm1761, %v1753, %v1758
    %v1763 = vrsqrt.pop %v1249
    %v1764 = vmul.f32 %v1763, %v1249
    %v1765 = vmul.f32 %v1764, %v1763
    %v1766 = vmul.f32 0.5, %v1765
    %v1767 = vsub.f32 1.5, %v1766
    %v1768 = vmul.f32 %v1763, %v1767
    %vm1769 = vweird.f32 %v1249
    %vm1770 = vweird.f32 %v1763
    %vm1771 = vmor %vm1769, %vm1770
    %v1772 = vsel %vm1771, %v1763, %v1768
    %v1773 = vrsqrt.pop %v1250
    %v1774 = vmul.f32 %v1773, %v1250
    %v1775 = vmul.f32 %v1774, %v1773
    %v1776 = vmul.f32 0.5, %v1775
    %v1777 = vsub.f32 1.5, %v1776
    %v1778 = vmul.f32 %v1773, %v1777
    %vm1779 = vweird.f32 %v1250
    %vm1780 = vweird.f32 %v1773
    %vm1781 = vmor %vm1779, %vm1780
    %v1782 = vsel %vm1781, %v1773, %v1778
    %v1783 = vrsqrt.pop %v1251
    %v1784 = vmul.f32 %v1783, %v1251
    %v1785 = vmul.f32 %v1784, %v1783
    %v1786 = vmul.f32 0.5, %v1785
    %v1787 = vsub.f32 1.5, %v1786
    %v1788 = vmul.f32 %v1783, %v1787
    %vm1789 = vweird.f32 %v1251
    %vm1790 = vweird.f32 %v1783
    %vm1791 = vmor %vm1789, %vm1790
    %v1792 = vsel %vm1791, %v1783, %v1788
    %v1793 = vrsqrt.pop %v1252
    %v1794 = vmul.f32 %v1793, %v1252
    %v1795 = vmul.f32 %v1794, %v1793
    %v1796 = vmul.f32 0.5, %v1795
    %v1797 = vsub.f32 1.5, %v1796
    %v1798 = vmul.f32 %v1793, %v1797
    %vm1799 = vweird.f32 %v1252
    %vm1800 = vweird.f32 %v1793
    %vm1801 = vmor %vm1799, %vm1800
    %v1802 = vsel %vm1801, %v1793, %v1798
    %v1803 = vrsqrt.pop %v1253
    %v1804 = vmul.f32 %v1803, %v1253
    %v1805 = vmul.f32 %v1804, %v1803
    %v1806 = vmul.f32 0.5, %v1805
    %v1807 = vsub.f32 1.5, %v1806
    %v1808 = vmul.f32 %v1803, %v1807
    %vm1809 = vweird.f32 %v1253
    %vm1810 = vweird.f32 %v1803
    %vm1811 = vmor %vm1809, %vm1810
    %v1812 = vsel %vm1811, %v1803, %v1808
    %v1813 = vrsqrt.pop %v1254
    %v1814 = vmul.f32 %v1813, %v1254
    %v1815 = vmul.f32 %v1814, %v1813
    %v1816 = vmul.f32 0.5, %v1815
    %v1817 = vsub.f32 1.5, %v1816
    %v1818 = vmul.f32 %v1813, %v1817
    %vm1819 = vweird.f32 %v1254
    %vm1820 = vweird.f32 %v1813
    %vm1821 = vmor %vm1819, %vm1820
    %v1822 = vsel %vm1821, %v1813, %v1818
    %v1823 = vrsqrt.pop %v1255
    %v1824 = vmul.f32 %v1823, %v1255
    %v1825 = vmul.f32 %v1824, %v1823
    %v1826 = vmul.f32 0.5, %v1825
    %v1827 = vsub.f32 1.5, %v1826
    %v1828 = vmul.f32 %v1823, %v1827
    %vm1829 = vweird.f32 %v1255
    %vm1830 = vweird.f32 %v1823
    %vm1831 = vmor %vm1829, %vm1830
    %v1832 = vsel %vm1831, %v1823, %v1828
    %v1833 = vrsqrt.pop %v1256
    %v1834 = vmul.f32 %v1833, %v1256
    %v1835 = vmul.f32 %v1834, %v1833
    %v1836 = vmul.f32 0.5, %v1835
    %v1837 = vsub.f32 1.5, %v1836
    %v1838 = vmul.f32 %v1833, %v1837
    %vm1839 = vweird.f32 %v1256
    %vm1840 = vweird.f32 %v1833
    %vm1841 = vmor %vm1839, %vm1840
    %v1842 = vsel %vm1841, %v1833, %v1838
    %v1843 = vrsqrt.pop %v1257
    %v1844 = vmul.f32 %v1843, %v1257
    %v1845 = vmul.f32 %v1844, %v1843
    %v1846 = vmul.f32 0.5, %v1845
    %v1847 = vsub.f32 1.5, %v1846
    %v1848 = vmul.f32 %v1843, %v1847
    %vm1849 = vweird.f32 %v1257
    %vm1850 = vweird.f32 %v1843
    %vm1851 = vmor %vm1849, %vm1850
    %v1852 = vsel %vm1851, %v1843, %v1848
    %v1853 = vrsqrt.pop %v1258
    %v1854 = vmul.f32 %v1853, %v1258
    %v1855 = vmul.f32 %v1854, %v1853
    %v1856 = vmul.f32 0.5, %v1855
    %v1857 = vsub.f32 1.5, %v1856
    %v1858 = vmul.f32 %v1853, %v1857
    %vm1859 = vweird.f32 %v1258
    %vm1860 = vweird.f32 %v1853
    %vm1861 = vmor %vm1859, %vm1860
    %v1862 = vsel %vm1861, %v1853, %v1858
    %v1863 = vrsqrt.pop %v1259
    %v1864 = vmul.f32 %v1863, %v1259
    %v1865 = vmul.f32 %v1864, %v1863
    %v1866 = vmul.f32 0.5, %v1865
    %v1867 = vsub.f32 1.5, %v1866
    %v1868 = vmul.f32 %v1863, %v1867
    %vm1869 = vweird.f32 %v1259
    %vm1870 = vweird.f32 %v1863
    %vm1871 = vmor %vm1869, %vm1870
    %v1872 = vsel %vm1871, %v1863, %v1868
    %v1873 = vrsqrt.pop %v1260
    %v1874 = vmul.f32 %v1873, %v1260
    %v1875 = vmul.f32 %v1874, %v1873
    %v1876 = vmul.f32 0.5, %v1875
    %v1877 = vsub.f32 1.5, %v1876
    %v1878 = vmul.f32 %v1873, %v1877
    %vm1879 = vweird.f32 %v1260
    %vm1880 = vweird.f32 %v1873
    %vm1881 = vmor %vm1879, %vm1880
    %v1882 = vsel %vm1881, %v1873, %v1878
    %v1883 = vrsqrt.pop %v1261
    %v1884 = vmul.f32 %v1883, %v1261
    %v1885 = vmul.f32 %v1884, %v1883
    %v1886 = vmul.f32 0.5, %v1885
    %v1887 = vsub.f32 1.5, %v1886
    %v1888 = vmul.f32 %v1883, %v1887
    %vm1889 = vweird.f32 %v1261
    %vm1890 = vweird.f32 %v1883
    %vm1891 = vmor %vm1889, %vm1890
    %v1892 = vsel %vm1891, %v1883, %v1888
    %v1893 = vrsqrt.pop %v1262
    %v1894 = vmul.f32 %v1893, %v1262
    %v1895 = vmul.f32 %v1894, %v1893
    %v1896 = vmul.f32 0.5, %v1895
    %v1897 = vsub.f32 1.5, %v1896
    %v1898 = vmul.f32 %v1893, %v1897
    %vm1899 = vweird.f32 %v1262
    %vm1900 = vweird.f32 %v1893
    %vm1901 = vmor %vm1899, %vm1900
    %v1902 = vsel %vm1901, %v1893, %v1898
    %v1903 = vmul.f32 %v559, %v1272
    %v1904 = vmul.f32 %v560, %v1282
    %v1905 = vmul.f32 %v561, %v1292
    %v1906 = vmul.f32 %v562, %v1302
    %v1907 = vmul.f32 %v563, %v1312
    %v1908 = vmul.f32 %v564, %v1322
    %v1909 = vmul.f32 %v565, %v1332
    %v1910 = vmul.f32 %v566, %v1342
    %v1911 = vmul.f32 %v567, %v1352
    %v1912 = vmul.f32 %v568, %v1362
    %v1913 = vmul.f32 %v569, %v1372
    %v1914 = vmul.f32 %v570, %v1382
    %v1915 = vmul.f32 %v571, %v1392
    %v1916 = vmul.f32 %v572, %v1402
    %v1917 = vmul.f32 %v573, %v1412
    %v1918 = vmul.f32 %v574, %v1422
    %v1919 = vmul.f32 %v575, %v1432
    %v1920 = vmul.f32 %v576, %v1442
    %v1921 = vmul.f32 %v577, %v1452
    %v1922 = vmul.f32 %v578, %v1462
    %v1923 = vmul.f32 %v579, %v1472
    %v1924 = vmul.f32 %v580, %v1482
    %v1925 = vmul.f32 %v581, %v1492
    %v1926 = vmul.f32 %v582, %v1502
    %v1927 = vmul.f32 %v583, %v1512
    %v1928 = vmul.f32 %v584, %v1522
    %v1929 = vmul.f32 %v585, %v1532
    %v1930 = vmul.f32 %v586, %v1542
    %v1931 = vmul.f32 %v587, %v1552
    %v1932 = vmul.f32 %v588, %v1562
    %v1933 = vmul.f32 %v589, %v1572
    %v1934 = vmul.f32 %v590, %v1582
    %v1935 = vmul.f32 %v591, %v1592
    %v1936 = vmul.f32 %v592, %v1602
    %v1937 = vmul.f32 %v593, %v1612
    %v1938 = vmul.f32 %v594, %v1622
    %v1939 = vmul.f32 %v595, %v1632
    %v1940 = vmul.f32 %v596, %v1642
    %v1941 = vmul.f32 %v597, %v1652
    %v1942 = vmul.f32 %v598, %v1662
    %v1943 = vmul.f32 %v599, %v1672
    %v1944 = vmul.f32 %v600, %v1682
    %v1945 = vmul.f32 %v601, %v1692
    %v1946 = vmul.f32 %v602, %v1702
    %v1947 = vmul.f32 %v603, %v1712
    %v1948 = vmul.f32 %v604, %v1722
    %v1949 = vmul.f32 %v605, %v1732
    %v1950 = vmul.f32 %v606, %v1742
    %v1951 = vmul.f32 %v607, %v1752
    %v1952 = vmul.f32 %v608, %v1762
    %v1953 = vmul.f32 %v609, %v1772
    %v1954 = vmul.f32 %v610, %v1782
    %v1955 = vmul.f32 %v611, %v1792
    %v1956 = vmul.f32 %v612, %v1802
    %v1957 = vmul.f32 %v613, %v1812
    %v1958 = vmul.f32 %v614, %v1822
    %v1959 = vmul.f32 %v615, %v1832
    %v1960 = vmul.f32 %v616, %v1842
    %v1961 = vmul.f32 %v617, %v1852
    %v1962 = vmul.f32 %v618, %v1862
    %v1963 = vmul.f32 %v619, %v1872
    %v1964 = vmul.f32 %v620, %v1882
    %v1965 = vmul.f32 %v621, %v1892
    %v1966 = vmul.f32 %v622, %v1902
    %v1967 = vpack.c.bf16 %v1903, %v1903
    %v1968 = vpack.c.bf16 %v1904, %v1904
    %v1969 = vpack.c.bf16 %v1905, %v1905
    %v1970 = vpack.c.bf16 %v1906, %v1906
    %v1971 = vpack.c.bf16 %v1907, %v1907
    %v1972 = vpack.c.bf16 %v1908, %v1908
    %v1973 = vpack.c.bf16 %v1909, %v1909
    %v1974 = vpack.c.bf16 %v1910, %v1910
    %v1975 = vpack.c.bf16 %v1911, %v1911
    %v1976 = vpack.c.bf16 %v1912, %v1912
    %v1977 = vpack.c.bf16 %v1913, %v1913
    %v1978 = vpack.c.bf16 %v1914, %v1914
    %v1979 = vpack.c.bf16 %v1915, %v1915
    %v1980 = vpack.c.bf16 %v1916, %v1916
    %v1981 = vpack.c.bf16 %v1917, %v1917
    %v1982 = vpack.c.bf16 %v1918, %v1918
    %v1983 = vpack.c.bf16 %v1919, %v1919
    %v1984 = vpack.c.bf16 %v1920, %v1920
    %v1985 = vpack.c.bf16 %v1921, %v1921
    %v1986 = vpack.c.bf16 %v1922, %v1922
    %v1987 = vpack.c.bf16 %v1923, %v1923
    %v1988 = vpack.c.bf16 %v1924, %v1924
    %v1989 = vpack.c.bf16 %v1925, %v1925
    %v1990 = vpack.c.bf16 %v1926, %v1926
    %v1991 = vpack.c.bf16 %v1927, %v1927
    %v1992 = vpack.c.bf16 %v1928, %v1928
    %v1993 = vpack.c.bf16 %v1929, %v1929
    %v1994 = vpack.c.bf16 %v1930, %v1930
    %v1995 = vpack.c.bf16 %v1931, %v1931
    %v1996 = vpack.c.bf16 %v1932, %v1932
    %v1997 = vpack.c.bf16 %v1933, %v1933
    %v1998 = vpack.c.bf16 %v1934, %v1934
    %v1999 = vpack.c.bf16 %v1935, %v1935
    %v2000 = vpack.c.bf16 %v1936, %v1936
    %v2001 = vpack.c.bf16 %v1937, %v1937
    %v2002 = vpack.c.bf16 %v1938, %v1938
    %v2003 = vpack.c.bf16 %v1939, %v1939
    %v2004 = vpack.c.bf16 %v1940, %v1940
    %v2005 = vpack.c.bf16 %v1941, %v1941
    %v2006 = vpack.c.bf16 %v1942, %v1942
    %v2007 = vpack.c.bf16 %v1943, %v1943
    %v2008 = vpack.c.bf16 %v1944, %v1944
    %v2009 = vpack.c.bf16 %v1945, %v1945
    %v2010 = vpack.c.bf16 %v1946, %v1946
    %v2011 = vpack.c.bf16 %v1947, %v1947
    %v2012 = vpack.c.bf16 %v1948, %v1948
    %v2013 = vpack.c.bf16 %v1949, %v1949
    %v2014 = vpack.c.bf16 %v1950, %v1950
    %v2015 = vpack.c.bf16 %v1951, %v1951
    %v2016 = vpack.c.bf16 %v1952, %v1952
    %v2017 = vpack.c.bf16 %v1953, %v1953
    %v2018 = vpack.c.bf16 %v1954, %v1954
    %v2019 = vpack.c.bf16 %v1955, %v1955
    %v2020 = vpack.c.bf16 %v1956, %v1956
    %v2021 = vpack.c.bf16 %v1957, %v1957
    %v2022 = vpack.c.bf16 %v1958, %v1958
    %v2023 = vpack.c.bf16 %v1959, %v1959
    %v2024 = vpack.c.bf16 %v1960, %v1960
    %v2025 = vpack.c.bf16 %v1961, %v1961
    %v2026 = vpack.c.bf16 %v1962, %v1962
    %v2027 = vpack.c.bf16 %v1963, %v1963
    %v2028 = vpack.c.bf16 %v1964, %v1964
    %v2029 = vpack.c.bf16 %v1965, %v1965
    %v2030 = vpack.c.bf16 %v1966, %v1966
    %v2031 = vmul.f32 %v623, %v1272
    %v2032 = vmul.f32 %v624, %v1282
    %v2033 = vmul.f32 %v625, %v1292
    %v2034 = vmul.f32 %v626, %v1302
    %v2035 = vmul.f32 %v627, %v1312
    %v2036 = vmul.f32 %v628, %v1322
    %v2037 = vmul.f32 %v629, %v1332
    %v2038 = vmul.f32 %v630, %v1342
    %v2039 = vmul.f32 %v631, %v1352
    %v2040 = vmul.f32 %v632, %v1362
    %v2041 = vmul.f32 %v633, %v1372
    %v2042 = vmul.f32 %v634, %v1382
    %v2043 = vmul.f32 %v635, %v1392
    %v2044 = vmul.f32 %v636, %v1402
    %v2045 = vmul.f32 %v637, %v1412
    %v2046 = vmul.f32 %v638, %v1422
    %v2047 = vmul.f32 %v639, %v1432
    %v2048 = vmul.f32 %v640, %v1442
    %v2049 = vmul.f32 %v641, %v1452
    %v2050 = vmul.f32 %v642, %v1462
    %v2051 = vmul.f32 %v643, %v1472
    %v2052 = vmul.f32 %v644, %v1482
    %v2053 = vmul.f32 %v645, %v1492
    %v2054 = vmul.f32 %v646, %v1502
    %v2055 = vmul.f32 %v647, %v1512
    %v2056 = vmul.f32 %v648, %v1522
    %v2057 = vmul.f32 %v649, %v1532
    %v2058 = vmul.f32 %v650, %v1542
    %v2059 = vmul.f32 %v651, %v1552
    %v2060 = vmul.f32 %v652, %v1562
    %v2061 = vmul.f32 %v653, %v1572
    %v2062 = vmul.f32 %v654, %v1582
    %v2063 = vmul.f32 %v655, %v1592
    %v2064 = vmul.f32 %v656, %v1602
    %v2065 = vmul.f32 %v657, %v1612
    %v2066 = vmul.f32 %v658, %v1622
    %v2067 = vmul.f32 %v659, %v1632
    %v2068 = vmul.f32 %v660, %v1642
    %v2069 = vmul.f32 %v661, %v1652
    %v2070 = vmul.f32 %v662, %v1662
    %v2071 = vmul.f32 %v663, %v1672
    %v2072 = vmul.f32 %v664, %v1682
    %v2073 = vmul.f32 %v665, %v1692
    %v2074 = vmul.f32 %v666, %v1702
    %v2075 = vmul.f32 %v667, %v1712
    %v2076 = vmul.f32 %v668, %v1722
    %v2077 = vmul.f32 %v669, %v1732
    %v2078 = vmul.f32 %v670, %v1742
    %v2079 = vmul.f32 %v671, %v1752
    %v2080 = vmul.f32 %v672, %v1762
    %v2081 = vmul.f32 %v673, %v1772
    %v2082 = vmul.f32 %v674, %v1782
    %v2083 = vmul.f32 %v675, %v1792
    %v2084 = vmul.f32 %v676, %v1802
    %v2085 = vmul.f32 %v677, %v1812
    %v2086 = vmul.f32 %v678, %v1822
    %v2087 = vmul.f32 %v679, %v1832
    %v2088 = vmul.f32 %v680, %v1842
    %v2089 = vmul.f32 %v681, %v1852
    %v2090 = vmul.f32 %v682, %v1862
    %v2091 = vmul.f32 %v683, %v1872
    %v2092 = vmul.f32 %v684, %v1882
    %v2093 = vmul.f32 %v685, %v1892
    %v2094 = vmul.f32 %v686, %v1902
    %v2095 = vpack.c.bf16 %v2031, %v2031
    %v2096 = vpack.c.bf16 %v2032, %v2032
    %v2097 = vpack.c.bf16 %v2033, %v2033
    %v2098 = vpack.c.bf16 %v2034, %v2034
    %v2099 = vpack.c.bf16 %v2035, %v2035
    %v2100 = vpack.c.bf16 %v2036, %v2036
    %v2101 = vpack.c.bf16 %v2037, %v2037
    %v2102 = vpack.c.bf16 %v2038, %v2038
    %v2103 = vpack.c.bf16 %v2039, %v2039
    %v2104 = vpack.c.bf16 %v2040, %v2040
    %v2105 = vpack.c.bf16 %v2041, %v2041
    %v2106 = vpack.c.bf16 %v2042, %v2042
    %v2107 = vpack.c.bf16 %v2043, %v2043
    %v2108 = vpack.c.bf16 %v2044, %v2044
    %v2109 = vpack.c.bf16 %v2045, %v2045
    %v2110 = vpack.c.bf16 %v2046, %v2046
    %v2111 = vpack.c.bf16 %v2047, %v2047
    %v2112 = vpack.c.bf16 %v2048, %v2048
    %v2113 = vpack.c.bf16 %v2049, %v2049
    %v2114 = vpack.c.bf16 %v2050, %v2050
    %v2115 = vpack.c.bf16 %v2051, %v2051
    %v2116 = vpack.c.bf16 %v2052, %v2052
    %v2117 = vpack.c.bf16 %v2053, %v2053
    %v2118 = vpack.c.bf16 %v2054, %v2054
    %v2119 = vpack.c.bf16 %v2055, %v2055
    %v2120 = vpack.c.bf16 %v2056, %v2056
    %v2121 = vpack.c.bf16 %v2057, %v2057
    %v2122 = vpack.c.bf16 %v2058, %v2058
    %v2123 = vpack.c.bf16 %v2059, %v2059
    %v2124 = vpack.c.bf16 %v2060, %v2060
    %v2125 = vpack.c.bf16 %v2061, %v2061
    %v2126 = vpack.c.bf16 %v2062, %v2062
    %v2127 = vpack.c.bf16 %v2063, %v2063
    %v2128 = vpack.c.bf16 %v2064, %v2064
    %v2129 = vpack.c.bf16 %v2065, %v2065
    %v2130 = vpack.c.bf16 %v2066, %v2066
    %v2131 = vpack.c.bf16 %v2067, %v2067
    %v2132 = vpack.c.bf16 %v2068, %v2068
    %v2133 = vpack.c.bf16 %v2069, %v2069
    %v2134 = vpack.c.bf16 %v2070, %v2070
    %v2135 = vpack.c.bf16 %v2071, %v2071
    %v2136 = vpack.c.bf16 %v2072, %v2072
    %v2137 = vpack.c.bf16 %v2073, %v2073
    %v2138 = vpack.c.bf16 %v2074, %v2074
    %v2139 = vpack.c.bf16 %v2075, %v2075
    %v2140 = vpack.c.bf16 %v2076, %v2076
    %v2141 = vpack.c.bf16 %v2077, %v2077
    %v2142 = vpack.c.bf16 %v2078, %v2078
    %v2143 = vpack.c.bf16 %v2079, %v2079
    %v2144 = vpack.c.bf16 %v2080, %v2080
    %v2145 = vpack.c.bf16 %v2081, %v2081
    %v2146 = vpack.c.bf16 %v2082, %v2082
    %v2147 = vpack.c.bf16 %v2083, %v2083
    %v2148 = vpack.c.bf16 %v2084, %v2084
    %v2149 = vpack.c.bf16 %v2085, %v2085
    %v2150 = vpack.c.bf16 %v2086, %v2086
    %v2151 = vpack.c.bf16 %v2087, %v2087
    %v2152 = vpack.c.bf16 %v2088, %v2088
    %v2153 = vpack.c.bf16 %v2089, %v2089
    %v2154 = vpack.c.bf16 %v2090, %v2090
    %v2155 = vpack.c.bf16 %v2091, %v2091
    %v2156 = vpack.c.bf16 %v2092, %v2092
    %v2157 = vpack.c.bf16 %v2093, %v2093
    %v2158 = vpack.c.bf16 %v2094, %v2094
    %v2223 = vunpack.c.l.b16 %v1967
    %v2224 = vunpack.c.l.b16 %v1968
    %v2225 = vunpack.c.l.b16 %v1969
    %v2226 = vunpack.c.l.b16 %v1970
    %v2227 = vunpack.c.l.b16 %v1971
    %v2228 = vunpack.c.l.b16 %v1972
    %v2229 = vunpack.c.l.b16 %v1973
    %v2230 = vunpack.c.l.b16 %v1974
    %v2231 = vunpack.c.l.b16 %v1975
    %v2232 = vunpack.c.l.b16 %v1976
    %v2233 = vunpack.c.l.b16 %v1977
    %v2234 = vunpack.c.l.b16 %v1978
    %v2235 = vunpack.c.l.b16 %v1979
    %v2236 = vunpack.c.l.b16 %v1980
    %v2237 = vunpack.c.l.b16 %v1981
    %v2238 = vunpack.c.l.b16 %v1982
    %v2239 = vunpack.c.l.b16 %v1983
    %v2240 = vunpack.c.l.b16 %v1984
    %v2241 = vunpack.c.l.b16 %v1985
    %v2242 = vunpack.c.l.b16 %v1986
    %v2243 = vunpack.c.l.b16 %v1987
    %v2244 = vunpack.c.l.b16 %v1988
    %v2245 = vunpack.c.l.b16 %v1989
    %v2246 = vunpack.c.l.b16 %v1990
    %v2247 = vunpack.c.l.b16 %v1991
    %v2248 = vunpack.c.l.b16 %v1992
    %v2249 = vunpack.c.l.b16 %v1993
    %v2250 = vunpack.c.l.b16 %v1994
    %v2251 = vunpack.c.l.b16 %v1995
    %v2252 = vunpack.c.l.b16 %v1996
    %v2253 = vunpack.c.l.b16 %v1997
    %v2254 = vunpack.c.l.b16 %v1998
    %v2255 = vunpack.c.l.b16 %v1999
    %v2256 = vunpack.c.l.b16 %v2000
    %v2257 = vunpack.c.l.b16 %v2001
    %v2258 = vunpack.c.l.b16 %v2002
    %v2259 = vunpack.c.l.b16 %v2003
    %v2260 = vunpack.c.l.b16 %v2004
    %v2261 = vunpack.c.l.b16 %v2005
    %v2262 = vunpack.c.l.b16 %v2006
    %v2263 = vunpack.c.l.b16 %v2007
    %v2264 = vunpack.c.l.b16 %v2008
    %v2265 = vunpack.c.l.b16 %v2009
    %v2266 = vunpack.c.l.b16 %v2010
    %v2267 = vunpack.c.l.b16 %v2011
    %v2268 = vunpack.c.l.b16 %v2012
    %v2269 = vunpack.c.l.b16 %v2013
    %v2270 = vunpack.c.l.b16 %v2014
    %v2271 = vunpack.c.l.b16 %v2015
    %v2272 = vunpack.c.l.b16 %v2016
    %v2273 = vunpack.c.l.b16 %v2017
    %v2274 = vunpack.c.l.b16 %v2018
    %v2275 = vunpack.c.l.b16 %v2019
    %v2276 = vunpack.c.l.b16 %v2020
    %v2277 = vunpack.c.l.b16 %v2021
    %v2278 = vunpack.c.l.b16 %v2022
    %v2279 = vunpack.c.l.b16 %v2023
    %v2280 = vunpack.c.l.b16 %v2024
    %v2281 = vunpack.c.l.b16 %v2025
    %v2282 = vunpack.c.l.b16 %v2026
    %v2283 = vunpack.c.l.b16 %v2027
    %v2284 = vunpack.c.l.b16 %v2028
    %v2285 = vunpack.c.l.b16 %v2029
    %v2286 = vunpack.c.l.b16 %v2030
    %v2287 = vpack.c.b16 %v2224, %v2223
    %v2288 = vpack.c.b16 %v2226, %v2225
    %v2289 = vpack.c.b16 %v2228, %v2227
    %v2290 = vpack.c.b16 %v2230, %v2229
    %v2291 = vpack.c.b16 %v2232, %v2231
    %v2292 = vpack.c.b16 %v2234, %v2233
    %v2293 = vpack.c.b16 %v2236, %v2235
    %v2294 = vpack.c.b16 %v2238, %v2237
    %v2295 = vpack.c.b16 %v2240, %v2239
    %v2296 = vpack.c.b16 %v2242, %v2241
    %v2297 = vpack.c.b16 %v2244, %v2243
    %v2298 = vpack.c.b16 %v2246, %v2245
    %v2299 = vpack.c.b16 %v2248, %v2247
    %v2300 = vpack.c.b16 %v2250, %v2249
    %v2301 = vpack.c.b16 %v2252, %v2251
    %v2302 = vpack.c.b16 %v2254, %v2253
    %v2303 = vpack.c.b16 %v2256, %v2255
    %v2304 = vpack.c.b16 %v2258, %v2257
    %v2305 = vpack.c.b16 %v2260, %v2259
    %v2306 = vpack.c.b16 %v2262, %v2261
    %v2307 = vpack.c.b16 %v2264, %v2263
    %v2308 = vpack.c.b16 %v2266, %v2265
    %v2309 = vpack.c.b16 %v2268, %v2267
    %v2310 = vpack.c.b16 %v2270, %v2269
    %v2311 = vpack.c.b16 %v2272, %v2271
    %v2312 = vpack.c.b16 %v2274, %v2273
    %v2313 = vpack.c.b16 %v2276, %v2275
    %v2314 = vpack.c.b16 %v2278, %v2277
    %v2315 = vpack.c.b16 %v2280, %v2279
    %v2316 = vpack.c.b16 %v2282, %v2281
    %v2317 = vpack.c.b16 %v2284, %v2283
    %v2318 = vpack.c.b16 %v2286, %v2285
    %v2415 = vunpack.c.l.b16 %v2095
    %v2416 = vunpack.c.l.b16 %v2096
    %v2417 = vunpack.c.l.b16 %v2097
    %v2418 = vunpack.c.l.b16 %v2098
    %v2419 = vunpack.c.l.b16 %v2099
    %v2420 = vunpack.c.l.b16 %v2100
    %v2421 = vunpack.c.l.b16 %v2101
    %v2422 = vunpack.c.l.b16 %v2102
    %v2423 = vunpack.c.l.b16 %v2103
    %v2424 = vunpack.c.l.b16 %v2104
    %v2425 = vunpack.c.l.b16 %v2105
    %v2426 = vunpack.c.l.b16 %v2106
    %v2427 = vunpack.c.l.b16 %v2107
    %v2428 = vunpack.c.l.b16 %v2108
    %v2429 = vunpack.c.l.b16 %v2109
    %v2430 = vunpack.c.l.b16 %v2110
    %v2431 = vunpack.c.l.b16 %v2111
    %v2432 = vunpack.c.l.b16 %v2112
    %v2433 = vunpack.c.l.b16 %v2113
    %v2434 = vunpack.c.l.b16 %v2114
    %v2435 = vunpack.c.l.b16 %v2115
    %v2436 = vunpack.c.l.b16 %v2116
    %v2437 = vunpack.c.l.b16 %v2117
    %v2438 = vunpack.c.l.b16 %v2118
    %v2439 = vunpack.c.l.b16 %v2119
    %v2440 = vunpack.c.l.b16 %v2120
    %v2441 = vunpack.c.l.b16 %v2121
    %v2442 = vunpack.c.l.b16 %v2122
    %v2443 = vunpack.c.l.b16 %v2123
    %v2444 = vunpack.c.l.b16 %v2124
    %v2445 = vunpack.c.l.b16 %v2125
    %v2446 = vunpack.c.l.b16 %v2126
    %v2447 = vunpack.c.l.b16 %v2127
    %v2448 = vunpack.c.l.b16 %v2128
    %v2449 = vunpack.c.l.b16 %v2129
    %v2450 = vunpack.c.l.b16 %v2130
    %v2451 = vunpack.c.l.b16 %v2131
    %v2452 = vunpack.c.l.b16 %v2132
    %v2453 = vunpack.c.l.b16 %v2133
    %v2454 = vunpack.c.l.b16 %v2134
    %v2455 = vunpack.c.l.b16 %v2135
    %v2456 = vunpack.c.l.b16 %v2136
    %v2457 = vunpack.c.l.b16 %v2137
    %v2458 = vunpack.c.l.b16 %v2138
    %v2459 = vunpack.c.l.b16 %v2139
    %v2460 = vunpack.c.l.b16 %v2140
    %v2461 = vunpack.c.l.b16 %v2141
    %v2462 = vunpack.c.l.b16 %v2142
    %v2463 = vunpack.c.l.b16 %v2143
    %v2464 = vunpack.c.l.b16 %v2144
    %v2465 = vunpack.c.l.b16 %v2145
    %v2466 = vunpack.c.l.b16 %v2146
    %v2467 = vunpack.c.l.b16 %v2147
    %v2468 = vunpack.c.l.b16 %v2148
    %v2469 = vunpack.c.l.b16 %v2149
    %v2470 = vunpack.c.l.b16 %v2150
    %v2471 = vunpack.c.l.b16 %v2151
    %v2472 = vunpack.c.l.b16 %v2152
    %v2473 = vunpack.c.l.b16 %v2153
    %v2474 = vunpack.c.l.b16 %v2154
    %v2475 = vunpack.c.l.b16 %v2155
    %v2476 = vunpack.c.l.b16 %v2156
    %v2477 = vunpack.c.l.b16 %v2157
    %v2478 = vunpack.c.l.b16 %v2158
    %v2479 = vpack.c.b16 %v2416, %v2415
    %v2480 = vpack.c.b16 %v2418, %v2417
    %v2481 = vpack.c.b16 %v2420, %v2419
    %v2482 = vpack.c.b16 %v2422, %v2421
    %v2483 = vpack.c.b16 %v2424, %v2423
    %v2484 = vpack.c.b16 %v2426, %v2425
    %v2485 = vpack.c.b16 %v2428, %v2427
    %v2486 = vpack.c.b16 %v2430, %v2429
    %v2487 = vpack.c.b16 %v2432, %v2431
    %v2488 = vpack.c.b16 %v2434, %v2433
    %v2489 = vpack.c.b16 %v2436, %v2435
    %v2490 = vpack.c.b16 %v2438, %v2437
    %v2491 = vpack.c.b16 %v2440, %v2439
    %v2492 = vpack.c.b16 %v2442, %v2441
    %v2493 = vpack.c.b16 %v2444, %v2443
    %v2494 = vpack.c.b16 %v2446, %v2445
    %v2495 = vpack.c.b16 %v2448, %v2447
    %v2496 = vpack.c.b16 %v2450, %v2449
    %v2497 = vpack.c.b16 %v2452, %v2451
    %v2498 = vpack.c.b16 %v2454, %v2453
    %v2499 = vpack.c.b16 %v2456, %v2455
    %v2500 = vpack.c.b16 %v2458, %v2457
    %v2501 = vpack.c.b16 %v2460, %v2459
    %v2502 = vpack.c.b16 %v2462, %v2461
    %v2503 = vpack.c.b16 %v2464, %v2463
    %v2504 = vpack.c.b16 %v2466, %v2465
    %v2505 = vpack.c.b16 %v2468, %v2467
    %v2506 = vpack.c.b16 %v2470, %v2469
    %v2507 = vpack.c.b16 %v2472, %v2471
    %v2508 = vpack.c.b16 %v2474, %v2473
    %v2509 = vpack.c.b16 %v2476, %v2475
    %v2510 = vpack.c.b16 %v2478, %v2477
    %v2543 = vld [vmem:[#allocation5] sm:$0xf]
    %v2544 = vld [vmem:[#allocation5 + $0x4] sm:$0xf]
    %v2545 = vld [vmem:[#allocation5 + $0x8] sm:$0xf]
    %v2546 = vld [vmem:[#allocation5 + $0xc] sm:$0xf]
    %v2547 = vld [vmem:[#allocation5 + $0x10] sm:$0xf]
    %v2548 = vld [vmem:[#allocation5 + $0x14] sm:$0xf]
    %v2549 = vld [vmem:[#allocation5 + $0x18] sm:$0xf]
    %v2550 = vld [vmem:[#allocation5 + $0x1c] sm:$0xf]
    %v2551 = vld [vmem:[#allocation5 + $0x20] sm:$0xf]
    %v2552 = vld [vmem:[#allocation5 + $0x24] sm:$0xf]
    %v2553 = vld [vmem:[#allocation5 + $0x28] sm:$0xf]
    %v2554 = vld [vmem:[#allocation5 + $0x2c] sm:$0xf]
    %v2555 = vld [vmem:[#allocation5 + $0x30] sm:$0xf]
    %v2556 = vld [vmem:[#allocation5 + $0x34] sm:$0xf]
    %v2557 = vld [vmem:[#allocation5 + $0x38] sm:$0xf]
    %v2558 = vld [vmem:[#allocation5 + $0x3c] sm:$0xf]
    %v2559 = vld [vmem:[#allocation5 + $0x40] sm:$0xf]
    %v2560 = vld [vmem:[#allocation5 + $0x44] sm:$0xf]
    %v2561 = vld [vmem:[#allocation5 + $0x48] sm:$0xf]
    %v2562 = vld [vmem:[#allocation5 + $0x4c] sm:$0xf]
    %v2563 = vld [vmem:[#allocation5 + $0x50] sm:$0xf]
    %v2564 = vld [vmem:[#allocation5 + $0x54] sm:$0xf]
    %v2565 = vld [vmem:[#allocation5 + $0x58] sm:$0xf]
    %v2566 = vld [vmem:[#allocation5 + $0x5c] sm:$0xf]
    %v2567 = vld [vmem:[#allocation5 + $0x60] sm:$0xf]
    %v2568 = vld [vmem:[#allocation5 + $0x64] sm:$0xf]
    %v2569 = vld [vmem:[#allocation5 + $0x68] sm:$0xf]
    %v2570 = vld [vmem:[#allocation5 + $0x6c] sm:$0xf]
    %v2571 = vld [vmem:[#allocation5 + $0x70] sm:$0xf]
    %v2572 = vld [vmem:[#allocation5 + $0x74] sm:$0xf]
    %v2573 = vld [vmem:[#allocation5 + $0x78] sm:$0xf]
    %v2574 = vld [vmem:[#allocation5 + $0x7c] sm:$0xf]
    %v2575 = vld [vmem:[%s2] sm:$0x1]
    %v2577 = vperm.slane %v2575, 0
    %v2611 = vunpack.c.l.b16 %v2543
    %v2612 = vunpack.c.l.b16 %v2544
    %v2613 = vunpack.c.l.b16 %v2545
    %v2614 = vunpack.c.l.b16 %v2546
    %v2615 = vunpack.c.l.b16 %v2547
    %v2616 = vunpack.c.l.b16 %v2548
    %v2617 = vunpack.c.l.b16 %v2549
    %v2618 = vunpack.c.l.b16 %v2550
    %v2619 = vunpack.c.l.b16 %v2551
    %v2620 = vunpack.c.l.b16 %v2552
    %v2621 = vunpack.c.l.b16 %v2553
    %v2622 = vunpack.c.l.b16 %v2554
    %v2623 = vunpack.c.l.b16 %v2555
    %v2624 = vunpack.c.l.b16 %v2556
    %v2625 = vunpack.c.l.b16 %v2557
    %v2626 = vunpack.c.l.b16 %v2558
    %v2627 = vunpack.c.l.b16 %v2559
    %v2628 = vunpack.c.l.b16 %v2560
    %v2629 = vunpack.c.l.b16 %v2561
    %v2630 = vunpack.c.l.b16 %v2562
    %v2631 = vunpack.c.l.b16 %v2563
    %v2632 = vunpack.c.l.b16 %v2564
    %v2633 = vunpack.c.l.b16 %v2565
    %v2634 = vunpack.c.l.b16 %v2566
    %v2635 = vunpack.c.l.b16 %v2567
    %v2636 = vunpack.c.l.b16 %v2568
    %v2637 = vunpack.c.l.b16 %v2569
    %v2638 = vunpack.c.l.b16 %v2570
    %v2639 = vunpack.c.l.b16 %v2571
    %v2640 = vunpack.c.l.b16 %v2572
    %v2641 = vunpack.c.l.b16 %v2573
    %v2642 = vunpack.c.l.b16 %v2574
    %v2643 = vpack.c.b16 %v2612, %v2611
    %v2644 = vpack.c.b16 %v2614, %v2613
    %v2645 = vpack.c.b16 %v2616, %v2615
    %v2646 = vpack.c.b16 %v2618, %v2617
    %v2647 = vpack.c.b16 %v2620, %v2619
    %v2648 = vpack.c.b16 %v2622, %v2621
    %v2649 = vpack.c.b16 %v2624, %v2623
    %v2650 = vpack.c.b16 %v2626, %v2625
    %v2651 = vpack.c.b16 %v2628, %v2627
    %v2652 = vpack.c.b16 %v2630, %v2629
    %v2653 = vpack.c.b16 %v2632, %v2631
    %v2654 = vpack.c.b16 %v2634, %v2633
    %v2655 = vpack.c.b16 %v2636, %v2635
    %v2656 = vpack.c.b16 %v2638, %v2637
    %v2657 = vpack.c.b16 %v2640, %v2639
    %v2658 = vpack.c.b16 %v2642, %v2641
    %2675 = vmatpush.bf16.msra.mxu0 %v2650
    %2676 = vmatpush.bf16.msra.mxu0 %v2649
    %2677 = vmatpush.bf16.msra.mxu0 %v2648
    %2678 = vmatpush.bf16.msra.mxu0 %v2647
    %2679 = vmatpush.bf16.msra.mxu0 %v2646
    %2680 = vmatpush.bf16.msra.mxu0 %v2645
    %2681 = vmatpush.bf16.msra.mxu0 %v2644
    %2682 = vmatpush.bf16.msra.mxu0 %v2643
    %2683 = vmatmul.bf16.gmra.mxu0 %v2287
    %v2684 = vpop.f32.mrf.mxu0
    %v2685 = vadd.f32 %v2577, %v2684
    %v2686 = vpop.f32.mrf.mxu0
    %v2687 = vadd.f32 %v2577, %v2686
    %2688 = vmatmul.bf16.gmra.mxu0 %v2288
    %v2689 = vpop.f32.mrf.mxu0
    %v2690 = vadd.f32 %v2577, %v2689
    %v2691 = vpop.f32.mrf.mxu0
    %v2692 = vadd.f32 %v2577, %v2691
    %2693 = vmatmul.bf16.gmra.mxu0 %v2289
    %v2694 = vpop.f32.mrf.mxu0
    %v2695 = vadd.f32 %v2577, %v2694
    %v2696 = vpop.f32.mrf.mxu0
    %v2697 = vadd.f32 %v2577, %v2696
    %2698 = vmatmul.bf16.gmra.mxu0 %v2290
    %v2699 = vpop.f32.mrf.mxu0
    %v2700 = vadd.f32 %v2577, %v2699
    %v2701 = vpop.f32.mrf.mxu0
    %v2702 = vadd.f32 %v2577, %v2701
    %2703 = vmatmul.bf16.gmra.mxu0 %v2291
    %v2704 = vpop.f32.mrf.mxu0
    %v2705 = vadd.f32 %v2577, %v2704
    %v2706 = vpop.f32.mrf.mxu0
    %v2707 = vadd.f32 %v2577, %v2706
    %2708 = vmatmul.bf16.gmra.mxu0 %v2292
    %v2709 = vpop.f32.mrf.mxu0
    %v2710 = vadd.f32 %v2577, %v2709
    %v2711 = vpop.f32.mrf.mxu0
    %v2712 = vadd.f32 %v2577, %v2711
    %2713 = vmatmul.bf16.gmra.mxu0 %v2293
    %v2714 = vpop.f32.mrf.mxu0
    %v2715 = vadd.f32 %v2577, %v2714
    %v2716 = vpop.f32.mrf.mxu0
    %v2717 = vadd.f32 %v2577, %v2716
    %2718 = vmatmul.bf16.gmra.mxu0 %v2294
    %v2719 = vpop.f32.mrf.mxu0
    %v2720 = vadd.f32 %v2577, %v2719
    %v2721 = vpop.f32.mrf.mxu0
    %v2722 = vadd.f32 %v2577, %v2721
    %2723 = vmatmul.bf16.gmra.mxu0 %v2295
    %v2724 = vpop.f32.mrf.mxu0
    %v2725 = vadd.f32 %v2577, %v2724
    %v2726 = vpop.f32.mrf.mxu0
    %v2727 = vadd.f32 %v2577, %v2726
    %2728 = vmatmul.bf16.gmra.mxu0 %v2296
    %v2729 = vpop.f32.mrf.mxu0
    %v2730 = vadd.f32 %v2577, %v2729
    %v2731 = vpop.f32.mrf.mxu0
    %v2732 = vadd.f32 %v2577, %v2731
    %2733 = vmatmul.bf16.gmra.mxu0 %v2297
    %v2734 = vpop.f32.mrf.mxu0
    %v2735 = vadd.f32 %v2577, %v2734
    %v2736 = vpop.f32.mrf.mxu0
    %v2737 = vadd.f32 %v2577, %v2736
    %2738 = vmatmul.bf16.gmra.mxu0 %v2298
    %v2739 = vpop.f32.mrf.mxu0
    %v2740 = vadd.f32 %v2577, %v2739
    %v2741 = vpop.f32.mrf.mxu0
    %v2742 = vadd.f32 %v2577, %v2741
    %2743 = vmatmul.bf16.gmra.mxu0 %v2299
    %v2744 = vpop.f32.mrf.mxu0
    %v2745 = vadd.f32 %v2577, %v2744
    %v2746 = vpop.f32.mrf.mxu0
    %v2747 = vadd.f32 %v2577, %v2746
    %2748 = vmatmul.bf16.gmra.mxu0 %v2300
    %v2749 = vpop.f32.mrf.mxu0
    %v2750 = vadd.f32 %v2577, %v2749
    %v2751 = vpop.f32.mrf.mxu0
    %v2752 = vadd.f32 %v2577, %v2751
    %2753 = vmatmul.bf16.gmra.mxu0 %v2301
    %v2754 = vpop.f32.mrf.mxu0
    %v2755 = vadd.f32 %v2577, %v2754
    %v2756 = vpop.f32.mrf.mxu0
    %v2757 = vadd.f32 %v2577, %v2756
    %2758 = vmatmul.bf16.gmra.mxu0 %v2302
    %v2759 = vpop.f32.mrf.mxu0
    %v2760 = vadd.f32 %v2577, %v2759
    %v2761 = vpop.f32.mrf.mxu0
    %v2762 = vadd.f32 %v2577, %v2761
    %2763 = vmatmul.bf16.gmra.mxu0 %v2303
    %v2764 = vpop.f32.mrf.mxu0
    %v2765 = vadd.f32 %v2577, %v2764
    %v2766 = vpop.f32.mrf.mxu0
    %v2767 = vadd.f32 %v2577, %v2766
    %2768 = vmatmul.bf16.gmra.mxu0 %v2304
    %v2769 = vpop.f32.mrf.mxu0
    %v2770 = vadd.f32 %v2577, %v2769
    %v2771 = vpop.f32.mrf.mxu0
    %v2772 = vadd.f32 %v2577, %v2771
    %2773 = vmatmul.bf16.gmra.mxu0 %v2305
    %v2774 = vpop.f32.mrf.mxu0
    %v2775 = vadd.f32 %v2577, %v2774
    %v2776 = vpop.f32.mrf.mxu0
    %v2777 = vadd.f32 %v2577, %v2776
    %2778 = vmatmul.bf16.gmra.mxu0 %v2306
    %v2779 = vpop.f32.mrf.mxu0
    %v2780 = vadd.f32 %v2577, %v2779
    %v2781 = vpop.f32.mrf.mxu0
    %v2782 = vadd.f32 %v2577, %v2781
    %2783 = vmatmul.bf16.gmra.mxu0 %v2307
    %v2784 = vpop.f32.mrf.mxu0
    %v2785 = vadd.f32 %v2577, %v2784
    %v2786 = vpop.f32.mrf.mxu0
    %v2787 = vadd.f32 %v2577, %v2786
    %2788 = vmatmul.bf16.gmra.mxu0 %v2308
    %v2789 = vpop.f32.mrf.mxu0
    %v2790 = vadd.f32 %v2577, %v2789
    %v2791 = vpop.f32.mrf.mxu0
    %v2792 = vadd.f32 %v2577, %v2791
    %2793 = vmatmul.bf16.gmra.mxu0 %v2309
    %v2794 = vpop.f32.mrf.mxu0
    %v2795 = vadd.f32 %v2577, %v2794
    %v2796 = vpop.f32.mrf.mxu0
    %v2797 = vadd.f32 %v2577, %v2796
    %2798 = vmatmul.bf16.gmra.mxu0 %v2310
    %v2799 = vpop.f32.mrf.mxu0
    %v2800 = vadd.f32 %v2577, %v2799
    %v2801 = vpop.f32.mrf.mxu0
    %v2802 = vadd.f32 %v2577, %v2801
    %2803 = vmatmul.bf16.gmra.mxu0 %v2311
    %v2804 = vpop.f32.mrf.mxu0
    %v2805 = vadd.f32 %v2577, %v2804
    %v2806 = vpop.f32.mrf.mxu0
    %v2807 = vadd.f32 %v2577, %v2806
    %2808 = vmatmul.bf16.gmra.mxu0 %v2312
    %v2809 = vpop.f32.mrf.mxu0
    %v2810 = vadd.f32 %v2577, %v2809
    %v2811 = vpop.f32.mrf.mxu0
    %v2812 = vadd.f32 %v2577, %v2811
    %2813 = vmatmul.bf16.gmra.mxu0 %v2313
    %v2814 = vpop.f32.mrf.mxu0
    %v2815 = vadd.f32 %v2577, %v2814
    %v2816 = vpop.f32.mrf.mxu0
    %v2817 = vadd.f32 %v2577, %v2816
    %2818 = vmatmul.bf16.gmra.mxu0 %v2314
    %v2819 = vpop.f32.mrf.mxu0
    %v2820 = vadd.f32 %v2577, %v2819
    %v2821 = vpop.f32.mrf.mxu0
    %v2822 = vadd.f32 %v2577, %v2821
    %2823 = vmatmul.bf16.gmra.mxu0 %v2315
    %v2824 = vpop.f32.mrf.mxu0
    %v2825 = vadd.f32 %v2577, %v2824
    %v2826 = vpop.f32.mrf.mxu0
    %v2827 = vadd.f32 %v2577, %v2826
    %2828 = vmatmul.bf16.gmra.mxu0 %v2316
    %v2829 = vpop.f32.mrf.mxu0
    %v2830 = vadd.f32 %v2577, %v2829
    %v2831 = vpop.f32.mrf.mxu0
    %v2832 = vadd.f32 %v2577, %v2831
    %2833 = vmatmul.bf16.gmra.mxu0 %v2317
    %v2834 = vpop.f32.mrf.mxu0
    %v2835 = vadd.f32 %v2577, %v2834
    %v2836 = vpop.f32.mrf.mxu0
    %v2837 = vadd.f32 %v2577, %v2836
    %2838 = vmatmul.bf16.gmra.mxu0 %v2318
    %v2839 = vpop.f32.mrf.mxu0
    %v2840 = vadd.f32 %v2577, %v2839
    %v2841 = vpop.f32.mrf.mxu0
    %v2842 = vadd.f32 %v2577, %v2841
    %2843 = vdwg.mxu0
    %2844 = vmatpush.bf16.msra.mxu0 %v2658
    %2845 = vmatpush.bf16.msra.mxu0 %v2657
    %2846 = vmatpush.bf16.msra.mxu0 %v2656
    %2847 = vmatpush.bf16.msra.mxu0 %v2655
    %2848 = vmatpush.bf16.msra.mxu0 %v2654
    %2849 = vmatpush.bf16.msra.mxu0 %v2653
    %2850 = vmatpush.bf16.msra.mxu0 %v2652
    %2851 = vmatpush.bf16.msra.mxu0 %v2651
    %2852 = vmatmul.bf16.gmra.mxu0 %v2479
    %v2853 = vpop.f32.mrf.mxu0
    %v2854 = vadd.f32 %v2685, %v2853
    %v2855 = vpop.f32.mrf.mxu0
    %v2856 = vadd.f32 %v2687, %v2855
    %2857 = vmatmul.bf16.gmra.mxu0 %v2480
    %v2858 = vpop.f32.mrf.mxu0
    %v2859 = vadd.f32 %v2690, %v2858
    %v2860 = vpop.f32.mrf.mxu0
    %v2861 = vadd.f32 %v2692, %v2860
    %2862 = vmatmul.bf16.gmra.mxu0 %v2481
    %v2863 = vpop.f32.mrf.mxu0
    %v2864 = vadd.f32 %v2695, %v2863
    %v2865 = vpop.f32.mrf.mxu0
    %v2866 = vadd.f32 %v2697, %v2865
    %2867 = vmatmul.bf16.gmra.mxu0 %v2482
    %v2868 = vpop.f32.mrf.mxu0
    %v2869 = vadd.f32 %v2700, %v2868
    %v2870 = vpop.f32.mrf.mxu0
    %v2871 = vadd.f32 %v2702, %v2870
    %2872 = vmatmul.bf16.gmra.mxu0 %v2483
    %v2873 = vpop.f32.mrf.mxu0
    %v2874 = vadd.f32 %v2705, %v2873
    %v2875 = vpop.f32.mrf.mxu0
    %v2876 = vadd.f32 %v2707, %v2875
    %2877 = vmatmul.bf16.gmra.mxu0 %v2484
    %v2878 = vpop.f32.mrf.mxu0
    %v2879 = vadd.f32 %v2710, %v2878
    %v2880 = vpop.f32.mrf.mxu0
    %v2881 = vadd.f32 %v2712, %v2880
    %2882 = vmatmul.bf16.gmra.mxu0 %v2485
    %v2883 = vpop.f32.mrf.mxu0
    %v2884 = vadd.f32 %v2715, %v2883
    %v2885 = vpop.f32.mrf.mxu0
    %v2886 = vadd.f32 %v2717, %v2885
    %2887 = vmatmul.bf16.gmra.mxu0 %v2486
    %v2888 = vpop.f32.mrf.mxu0
    %v2889 = vadd.f32 %v2720, %v2888
    %v2890 = vpop.f32.mrf.mxu0
    %v2891 = vadd.f32 %v2722, %v2890
    %2892 = vmatmul.bf16.gmra.mxu0 %v2487
    %v2893 = vpop.f32.mrf.mxu0
    %v2894 = vadd.f32 %v2725, %v2893
    %v2895 = vpop.f32.mrf.mxu0
    %v2896 = vadd.f32 %v2727, %v2895
    %2897 = vmatmul.bf16.gmra.mxu0 %v2488
    %v2898 = vpop.f32.mrf.mxu0
    %v2899 = vadd.f32 %v2730, %v2898
    %v2900 = vpop.f32.mrf.mxu0
    %v2901 = vadd.f32 %v2732, %v2900
    %2902 = vmatmul.bf16.gmra.mxu0 %v2489
    %v2903 = vpop.f32.mrf.mxu0
    %v2904 = vadd.f32 %v2735, %v2903
    %v2905 = vpop.f32.mrf.mxu0
    %v2906 = vadd.f32 %v2737, %v2905
    %2907 = vmatmul.bf16.gmra.mxu0 %v2490
    %v2908 = vpop.f32.mrf.mxu0
    %v2909 = vadd.f32 %v2740, %v2908
    %v2910 = vpop.f32.mrf.mxu0
    %v2911 = vadd.f32 %v2742, %v2910
    %2912 = vmatmul.bf16.gmra.mxu0 %v2491
    %v2913 = vpop.f32.mrf.mxu0
    %v2914 = vadd.f32 %v2745, %v2913
    %v2915 = vpop.f32.mrf.mxu0
    %v2916 = vadd.f32 %v2747, %v2915
    %2917 = vmatmul.bf16.gmra.mxu0 %v2492
    %v2918 = vpop.f32.mrf.mxu0
    %v2919 = vadd.f32 %v2750, %v2918
    %v2920 = vpop.f32.mrf.mxu0
    %v2921 = vadd.f32 %v2752, %v2920
    %2922 = vmatmul.bf16.gmra.mxu0 %v2493
    %v2923 = vpop.f32.mrf.mxu0
    %v2924 = vadd.f32 %v2755, %v2923
    %v2925 = vpop.f32.mrf.mxu0
    %v2926 = vadd.f32 %v2757, %v2925
    %2927 = vmatmul.bf16.gmra.mxu0 %v2494
    %v2928 = vpop.f32.mrf.mxu0
    %v2929 = vadd.f32 %v2760, %v2928
    %v2930 = vpop.f32.mrf.mxu0
    %v2931 = vadd.f32 %v2762, %v2930
    %2932 = vmatmul.bf16.gmra.mxu0 %v2495
    %v2933 = vpop.f32.mrf.mxu0
    %v2934 = vadd.f32 %v2765, %v2933
    %v2935 = vpop.f32.mrf.mxu0
    %v2936 = vadd.f32 %v2767, %v2935
    %2937 = vmatmul.bf16.gmra.mxu0 %v2496
    %v2938 = vpop.f32.mrf.mxu0
    %v2939 = vadd.f32 %v2770, %v2938
    %v2940 = vpop.f32.mrf.mxu0
    %v2941 = vadd.f32 %v2772, %v2940
    %2942 = vmatmul.bf16.gmra.mxu0 %v2497
    %v2943 = vpop.f32.mrf.mxu0
    %v2944 = vadd.f32 %v2775, %v2943
    %v2945 = vpop.f32.mrf.mxu0
    %v2946 = vadd.f32 %v2777, %v2945
    %2947 = vmatmul.bf16.gmra.mxu0 %v2498
    %v2948 = vpop.f32.mrf.mxu0
    %v2949 = vadd.f32 %v2780, %v2948
    %v2950 = vpop.f32.mrf.mxu0
    %v2951 = vadd.f32 %v2782, %v2950
    %2952 = vmatmul.bf16.gmra.mxu0 %v2499
    %v2953 = vpop.f32.mrf.mxu0
    %v2954 = vadd.f32 %v2785, %v2953
    %v2955 = vpop.f32.mrf.mxu0
    %v2956 = vadd.f32 %v2787, %v2955
    %2957 = vmatmul.bf16.gmra.mxu0 %v2500
    %v2958 = vpop.f32.mrf.mxu0
    %v2959 = vadd.f32 %v2790, %v2958
    %v2960 = vpop.f32.mrf.mxu0
    %v2961 = vadd.f32 %v2792, %v2960
    %2962 = vmatmul.bf16.gmra.mxu0 %v2501
    %v2963 = vpop.f32.mrf.mxu0
    %v2964 = vadd.f32 %v2795, %v2963
    %v2965 = vpop.f32.mrf.mxu0
    %v2966 = vadd.f32 %v2797, %v2965
    %2967 = vmatmul.bf16.gmra.mxu0 %v2502
    %v2968 = vpop.f32.mrf.mxu0
    %v2969 = vadd.f32 %v2800, %v2968
    %v2970 = vpop.f32.mrf.mxu0
    %v2971 = vadd.f32 %v2802, %v2970
    %2972 = vmatmul.bf16.gmra.mxu0 %v2503
    %v2973 = vpop.f32.mrf.mxu0
    %v2974 = vadd.f32 %v2805, %v2973
    %v2975 = vpop.f32.mrf.mxu0
    %v2976 = vadd.f32 %v2807, %v2975
    %2977 = vmatmul.bf16.gmra.mxu0 %v2504
    %v2978 = vpop.f32.mrf.mxu0
    %v2979 = vadd.f32 %v2810, %v2978
    %v2980 = vpop.f32.mrf.mxu0
    %v2981 = vadd.f32 %v2812, %v2980
    %2982 = vmatmul.bf16.gmra.mxu0 %v2505
    %v2983 = vpop.f32.mrf.mxu0
    %v2984 = vadd.f32 %v2815, %v2983
    %v2985 = vpop.f32.mrf.mxu0
    %v2986 = vadd.f32 %v2817, %v2985
    %2987 = vmatmul.bf16.gmra.mxu0 %v2506
    %v2988 = vpop.f32.mrf.mxu0
    %v2989 = vadd.f32 %v2820, %v2988
    %v2990 = vpop.f32.mrf.mxu0
    %v2991 = vadd.f32 %v2822, %v2990
    %2992 = vmatmul.bf16.gmra.mxu0 %v2507
    %v2993 = vpop.f32.mrf.mxu0
    %v2994 = vadd.f32 %v2825, %v2993
    %v2995 = vpop.f32.mrf.mxu0
    %v2996 = vadd.f32 %v2827, %v2995
    %2997 = vmatmul.bf16.gmra.mxu0 %v2508
    %v2998 = vpop.f32.mrf.mxu0
    %v2999 = vadd.f32 %v2830, %v2998
    %v3000 = vpop.f32.mrf.mxu0
    %v3001 = vadd.f32 %v2832, %v3000
    %3002 = vmatmul.bf16.gmra.mxu0 %v2509
    %v3003 = vpop.f32.mrf.mxu0
    %v3004 = vadd.f32 %v2835, %v3003
    %v3005 = vpop.f32.mrf.mxu0
    %v3006 = vadd.f32 %v2837, %v3005
    %3007 = vmatmul.bf16.gmra.mxu0 %v2510
    %v3008 = vpop.f32.mrf.mxu0
    %v3009 = vadd.f32 %v2840, %v3008
    %v3010 = vpop.f32.mrf.mxu0
    %v3011 = vadd.f32 %v2842, %v3010
    %3012 = vdwg.mxu0
    %3013 = vst [vmem:[#allocation7] sm:$0xff] %v2854
    %3014 = vst [vmem:[#allocation7 + $0x8] sm:$0xff] %v2856
    %3015 = vst [vmem:[#allocation7 + $0x10] sm:$0xff] %v2859
    %3016 = vst [vmem:[#allocation7 + $0x18] sm:$0xff] %v2861
    %3017 = vst [vmem:[#allocation7 + $0x20] sm:$0xff] %v2864
    %3018 = vst [vmem:[#allocation7 + $0x28] sm:$0xff] %v2866
    %3019 = vst [vmem:[#allocation7 + $0x30] sm:$0xff] %v2869
    %3020 = vst [vmem:[#allocation7 + $0x38] sm:$0xff] %v2871
    %3021 = vst [vmem:[#allocation7 + $0x40] sm:$0xff] %v2874
    %3022 = vst [vmem:[#allocation7 + $0x48] sm:$0xff] %v2876
    %3023 = vst [vmem:[#allocation7 + $0x50] sm:$0xff] %v2879
    %3024 = vst [vmem:[#allocation7 + $0x58] sm:$0xff] %v2881
    %3025 = vst [vmem:[#allocation7 + $0x60] sm:$0xff] %v2884
    %3026 = vst [vmem:[#allocation7 + $0x68] sm:$0xff] %v2886
    %3027 = vst [vmem:[#allocation7 + $0x70] sm:$0xff] %v2889
    %3028 = vst [vmem:[#allocation7 + $0x78] sm:$0xff] %v2891
    %3029 = vst [vmem:[#allocation7 + $0x80] sm:$0xff] %v2894
    %3030 = vst [vmem:[#allocation7 + $0x88] sm:$0xff] %v2896
    %3031 = vst [vmem:[#allocation7 + $0x90] sm:$0xff] %v2899
    %3032 = vst [vmem:[#allocation7 + $0x98] sm:$0xff] %v2901
    %3033 = vst [vmem:[#allocation7 + $0xa0] sm:$0xff] %v2904
    %3034 = vst [vmem:[#allocation7 + $0xa8] sm:$0xff] %v2906
    %3035 = vst [vmem:[#allocation7 + $0xb0] sm:$0xff] %v2909
    %3036 = vst [vmem:[#allocation7 + $0xb8] sm:$0xff] %v2911
    %3037 = vst [vmem:[#allocation7 + $0xc0] sm:$0xff] %v2914
    %3038 = vst [vmem:[#allocation7 + $0xc8] sm:$0xff] %v2916
    %3039 = vst [vmem:[#allocation7 + $0xd0] sm:$0xff] %v2919
    %3040 = vst [vmem:[#allocation7 + $0xd8] sm:$0xff] %v2921
    %3041 = vst [vmem:[#allocation7 + $0xe0] sm:$0xff] %v2924
    %3042 = vst [vmem:[#allocation7 + $0xe8] sm:$0xff] %v2926
    %3043 = vst [vmem:[#allocation7 + $0xf0] sm:$0xff] %v2929
    %3044 = vst [vmem:[#allocation7 + $0xf8] sm:$0xff] %v2931
    %3045 = vst [vmem:[#allocation7 + $0x100] sm:$0xff] %v2934
    %3046 = vst [vmem:[#allocation7 + $0x108] sm:$0xff] %v2936
    %3047 = vst [vmem:[#allocation7 + $0x110] sm:$0xff] %v2939
    %3048 = vst [vmem:[#allocation7 + $0x118] sm:$0xff] %v2941
    %3049 = vst [vmem:[#allocation7 + $0x120] sm:$0xff] %v2944
    %3050 = vst [vmem:[#allocation7 + $0x128] sm:$0xff] %v2946
    %3051 = vst [vmem:[#allocation7 + $0x130] sm:$0xff] %v2949
    %3052 = vst [vmem:[#allocation7 + $0x138] sm:$0xff] %v2951
    %3053 = vst [vmem:[#allocation7 + $0x140] sm:$0xff] %v2954
    %3054 = vst [vmem:[#allocation7 + $0x148] sm:$0xff] %v2956
    %3055 = vst [vmem:[#allocation7 + $0x150] sm:$0xff] %v2959
    %3056 = vst [vmem:[#allocation7 + $0x158] sm:$0xff] %v2961
    %3057 = vst [vmem:[#allocation7 + $0x160] sm:$0xff] %v2964
    %3058 = vst [vmem:[#allocation7 + $0x168] sm:$0xff] %v2966
    %3059 = vst [vmem:[#allocation7 + $0x170] sm:$0xff] %v2969
    %3060 = vst [vmem:[#allocation7 + $0x178] sm:$0xff] %v2971
    %3061 = vst [vmem:[#allocation7 + $0x180] sm:$0xff] %v2974
    %3062 = vst [vmem:[#allocation7 + $0x188] sm:$0xff] %v2976
    %3063 = vst [vmem:[#allocation7 + $0x190] sm:$0xff] %v2979
    %3064 = vst [vmem:[#allocation7 + $0x198] sm:$0xff] %v2981
    %3065 = vst [vmem:[#allocation7 + $0x1a0] sm:$0xff] %v2984
    %3066 = vst [vmem:[#allocation7 + $0x1a8] sm:$0xff] %v2986
    %3067 = vst [vmem:[#allocation7 + $0x1b0] sm:$0xff] %v2989
    %3068 = vst [vmem:[#allocation7 + $0x1b8] sm:$0xff] %v2991
    %3069 = vst [vmem:[#allocation7 + $0x1c0] sm:$0xff] %v2994
    %3070 = vst [vmem:[#allocation7 + $0x1c8] sm:$0xff] %v2996
    %3071 = vst [vmem:[#allocation7 + $0x1d0] sm:$0xff] %v2999
    %3072 = vst [vmem:[#allocation7 + $0x1d8] sm:$0xff] %v3001
    %3073 = vst [vmem:[#allocation7 + $0x1e0] sm:$0xff] %v3004
    %3074 = vst [vmem:[#allocation7 + $0x1e8] sm:$0xff] %v3006
    %3075 = vst [vmem:[#allocation7 + $0x1f0] sm:$0xff] %v3009
    %3076 = vst [vmem:[#allocation7 + $0x1f8] sm:$0xff] %v3011
    // Predicated region
    $region22: #{tpu_custom_call.1} parent=1 // pred_check
      _
    $region23: #{tpu_custom_call.1} parent=1 // pred_check_branch
      %3078 = sbr.rel (0) target = $region25
    $region24: #{tpu_custom_call.1} parent=1 // pred_region
      %3080 = vsyncadd [#allocation4], 0
      %s3081 = sshll.u32 [#allocation7], 4
      %s3082 = int_to_ptr.vmem [resolvable:$true] %s3081
      %s3083 = sshll.u32 %s3, 4
      %s3084 = int_to_ptr.hbm [resolvable:$true] %s3083
      %3089 = dma.vmem_to_hbm [thread:$0]  %s3082, 8192, %s3084, [#allocation4], 128, 128, 8
    $region25: #{tpu_custom_call.1} parent=1 // pred_fallthru
      _
    // Predicated region
    $region26: #{tpu_custom_call.1} parent=1 // pred_check
      _
    $region27: #{tpu_custom_call.1} parent=1 // pred_check_branch
      %3091 = sbr.rel (0) target = $region29
    $region28: #{tpu_custom_call.1} parent=1 // pred_region
      %3093 = dma.done [#allocation4], 8192
    $region29: #{tpu_custom_call.1} parent=1 // pred_fallthru
      _
    %3094 = vsyncpa [#allocation3], 1
    %3095 = vsyncpa [#allocation6], 1
    %3096 = vsyncpa [#allocation4], 1

</llo_original>
